<compile_context>
chip_gen: v7x
topology: tpu7x:2x2x1
jax: 0.10.0
libtpu: 0.0.40
codegen_flags: <defaults>
</compile_context>

<pallas_src>
import math
import functools

import jax
import jax.numpy as jnp
from jax.experimental import pallas as pl
from jax.experimental.pallas import tpu as pltpu

SCALE = math.sqrt(0.5)  # torch.sqrt(torch.FloatTensor([0.5]))

_PARALLEL = pltpu.CompilerParams(dimension_semantics=("parallel",))


# --------------------------------------------------------------------------
# Pallas kernels
# --------------------------------------------------------------------------
def _linear_kernel(x_ref, w_ref, b_ref, o_ref):
    """out = x @ w + b (bf16 MXU inputs, f32 accumulate)."""
    z = jnp.dot(x_ref[...].astype(jnp.bfloat16), w_ref[...],
                preferred_element_type=jnp.float32) + b_ref[...]
    o_ref[...] = z.astype(o_ref.dtype)


def _enc_out_kernel(x_ref, w_ref, b_ref, emb_ref, conved_ref, combined_ref):
    """conved = hid2emb(x); combined = (conved + embedded)*sqrt(0.5) — fused."""
    conved = jnp.dot(x_ref[...].astype(jnp.bfloat16), w_ref[...],
                     preferred_element_type=jnp.float32) + b_ref[...]
    conved_ref[...] = conved.astype(conved_ref.dtype)
    combined_ref[...] = ((conved + emb_ref[...]) * SCALE).astype(combined_ref.dtype)


def _dec_head_kernel(x_ref, w1_ref, b1_ref, w2_ref, b2_ref, o_ref):
    """slot logits = fc_out(hid2emb(x)) — two chained matmuls fused."""
    h = jnp.dot(x_ref[...].astype(jnp.bfloat16), w1_ref[...],
                preferred_element_type=jnp.float32) + b1_ref[...]
    o_ref[...] = (jnp.dot(h.astype(jnp.bfloat16), w2_ref[...],
                          preferred_element_type=jnp.float32)
                  + b2_ref[...]).astype(o_ref.dtype)


def _enc_layer_kernel(xpad_ref, wv_ref, wg_ref, bv_ref, bg_ref, o_ref, *,
                      k, seq_len, pad_left):
    """One encoder conv block: GLU(conv(x)) + residual, all in one kernel.

    The 1-D conv is k shifted matmuls on the (k-1)-zero-padded sequence;
    GLU value/gate halves are separate lane-aligned matmuls.
    """
    x = xpad_ref[0]                                  # (L + k - 1, H) f32
    v = bv_ref[...]                                  # (1, H)
    g = bg_ref[...]
    for j in range(k):
        xj = x[j:j + seq_len].astype(jnp.bfloat16)   # shifted window (L, H)
        v = v + jnp.dot(xj, wv_ref[j], preferred_element_type=jnp.float32)
        g = g + jnp.dot(xj, wg_ref[j], preferred_element_type=jnp.float32)
    glu = v * jax.nn.sigmoid(g)                      # F.glu over channels
    conv_input = x[pad_left:pad_left + seq_len]
    o_ref[0] = ((glu + conv_input) * SCALE).astype(o_ref.dtype)


def _dec_layer_kernel(xpad_ref, emb_ref, enck_ref, encv_ref,
                      wv_ref, wg_ref, bv_ref, bg_ref,
                      wh2e_ref, bh2e_ref, we2h_ref, be2h_ref,
                      o_ref, attn_ref, *, k, seq_len):
    """One full decoder layer fused: causal conv + GLU + attention + residuals.

    All intermediates (conved_glu / combined / attention / attended) stay
    on-chip; only the next conv input and the attention map are written out.
    """
    x = xpad_ref[0]                                  # (Lt + k - 1, H) f32
    v = bv_ref[...]
    g = bg_ref[...]
    for j in range(k):
        xj = x[j:j + seq_len].astype(jnp.bfloat16)
        v = v + jnp.dot(xj, wv_ref[j], preferred_element_type=jnp.float32)
        g = g + jnp.dot(xj, wg_ref[j], preferred_element_type=jnp.float32)
    conved = v * jax.nn.sigmoid(g)                   # (Lt, H) f32

    # combined = (attn_hid2emb(conved) + embedded) * scale
    combined = (jnp.dot(conved.astype(jnp.bfloat16), wh2e_ref[...],
                        preferred_element_type=jnp.float32)
                + bh2e_ref[...] + emb_ref[0]) * SCALE              # (Lt, E)

    # energy = combined @ encoder_conved^T  (contract last dims, no transpose)
    energy = jax.lax.dot_general(
        combined.astype(jnp.bfloat16), enck_ref[0],
        (((1,), (1,)), ((), ())),
        preferred_element_type=jnp.float32)                        # (Lt, Ls)
    m = jnp.max(energy, axis=-1, keepdims=True)
    p = jnp.exp(energy - m)
    attn = p * pl.reciprocal(jnp.sum(p, axis=-1, keepdims=True), approx=True)
    attn_ref[0] = attn.astype(attn_ref.dtype)

    attended = jnp.dot(attn.astype(jnp.bfloat16), encv_ref[0],
                       preferred_element_type=jnp.float32)         # (Lt, E)

    # attended_combined = (conved + attn_emb2hid(attended)) * scale
    attended_hid = (jnp.dot(attended.astype(jnp.bfloat16), we2h_ref[...],
                            preferred_element_type=jnp.float32)
                    + be2h_ref[...] + conved) * SCALE              # (Lt, H)

    # conved_out = (attended_combined + conv_input) * scale
    conv_input = x[k - 1:k - 1 + seq_len]
    o_ref[0] = ((attended_hid + conv_input) * SCALE).astype(o_ref.dtype)


# --------------------------------------------------------------------------
# Pallas call wrappers
# --------------------------------------------------------------------------
def _row_tile(m):
    # Small M: single block equal to full dim; large M: 256-row tiles so
    # per-block VMEM stays far below the 64 MiB available on v7x.
    return m if m <= 512 else 256


def linear(x, layer):
    """x[M,K] @ w[K,N] + b, row-tiled, bf16 MXU."""
    w, b = layer["w"], layer["b"]
    M, K = x.shape
    N = w.shape[1]
    tm = _row_tile(M)
    return pl.pallas_call(
        _linear_kernel,
        grid=(pl.cdiv(M, tm),),
        in_specs=[pl.BlockSpec((tm, K), lambda i: (i, 0)),
                  pl.BlockSpec((K, N), lambda i: (0, 0)),
                  pl.BlockSpec((1, N), lambda i: (0, 0))],
        out_specs=pl.BlockSpec((tm, N), lambda i: (i, 0)),
        out_shape=jax.ShapeDtypeStruct((M, N), jnp.float32),
        compiler_params=_PARALLEL,
    )(x, w, b)


def encoder_out(x, layer, emb):
    """(conved, combined) = (hid2emb(x), (hid2emb(x)+emb)*scale)."""
    w, b = layer["w"], layer["b"]
    M, K = x.shape
    N = w.shape[1]
    tm = _row_tile(M)
    return pl.pallas_call(
        _enc_out_kernel,
        grid=(pl.cdiv(M, tm),),
        in_specs=[pl.BlockSpec((tm, K), lambda i: (i, 0)),
                  pl.BlockSpec((K, N), lambda i: (0, 0)),
                  pl.BlockSpec((1, N), lambda i: (0, 0)),
                  pl.BlockSpec((tm, N), lambda i: (i, 0))],
        out_specs=(pl.BlockSpec((tm, N), lambda i: (i, 0)),
                   pl.BlockSpec((tm, N), lambda i: (i, 0))),
        out_shape=(jax.ShapeDtypeStruct((M, N), jnp.float32),
                   jax.ShapeDtypeStruct((M, N), jnp.float32)),
        compiler_params=_PARALLEL,
    )(x, w, b, emb)


def decoder_head(x, hid2emb, fc_out):
    """fc_out(hid2emb(x)) in one kernel."""
    M, K = x.shape
    E = hid2emb["w"].shape[1]
    N = fc_out["w"].shape[1]
    tm = _row_tile(M)
    return pl.pallas_call(
        _dec_head_kernel,
        grid=(pl.cdiv(M, tm),),
        in_specs=[pl.BlockSpec((tm, K), lambda i: (i, 0)),
                  pl.BlockSpec((K, E), lambda i: (0, 0)),
                  pl.BlockSpec((1, E), lambda i: (0, 0)),
                  pl.BlockSpec((E, N), lambda i: (0, 0)),
                  pl.BlockSpec((1, N), lambda i: (0, 0))],
        out_specs=pl.BlockSpec((tm, N), lambda i: (i, 0)),
        out_shape=jax.ShapeDtypeStruct((M, N), jnp.float32),
        compiler_params=_PARALLEL,
    )(x, hid2emb["w"], hid2emb["b"], fc_out["w"], fc_out["b"])


def encoder_layer(xpad, layer, seq_len, pad_left):
    """One encoder conv block over the whole batch (grid over batch)."""
    wv, wg, bv, bg = layer
    B, Lpad, H = xpad.shape
    k = wv.shape[0]
    kern = functools.partial(_enc_layer_kernel, k=k, seq_len=seq_len,
                             pad_left=pad_left)
    return pl.pallas_call(
        kern,
        grid=(B,),
        in_specs=[pl.BlockSpec((1, Lpad, H), lambda b: (b, 0, 0)),
                  pl.BlockSpec((k, H, H), lambda b: (0, 0, 0)),
                  pl.BlockSpec((k, H, H), lambda b: (0, 0, 0)),
                  pl.BlockSpec((1, H), lambda b: (0, 0)),
                  pl.BlockSpec((1, H), lambda b: (0, 0))],
        out_specs=pl.BlockSpec((1, seq_len, H), lambda b: (b, 0, 0)),
        out_shape=jax.ShapeDtypeStruct((B, seq_len, H), jnp.float32),
        compiler_params=_PARALLEL,
    )(xpad, wv, wg, bv, bg)


def decoder_layer(xpad, embedded, enc_k, enc_v, layer, attn_h2e, attn_e2h,
                  seq_len):
    """One fully-fused decoder layer (conv+GLU+attention+residuals)."""
    wv, wg, bv, bg = layer
    B, Lpad, H = xpad.shape
    E = embedded.shape[2]
    Ls = enc_k.shape[1]
    k = wv.shape[0]
    kern = functools.partial(_dec_layer_kernel, k=k, seq_len=seq_len)
    return pl.pallas_call(
        kern,
        grid=(B,),
        in_specs=[
            pl.BlockSpec((1, Lpad, H), lambda b: (b, 0, 0)),
            pl.BlockSpec((1, seq_len, E), lambda b: (b, 0, 0)),
            pl.BlockSpec((1, Ls, E), lambda b: (b, 0, 0)),
            pl.BlockSpec((1, Ls, E), lambda b: (b, 0, 0)),
            pl.BlockSpec((k, H, H), lambda b: (0, 0, 0)),
            pl.BlockSpec((k, H, H), lambda b: (0, 0, 0)),
            pl.BlockSpec((1, H), lambda b: (0, 0)),
            pl.BlockSpec((1, H), lambda b: (0, 0)),
            pl.BlockSpec((H, E), lambda b: (0, 0)),
            pl.BlockSpec((1, E), lambda b: (0, 0)),
            pl.BlockSpec((E, H), lambda b: (0, 0)),
            pl.BlockSpec((1, H), lambda b: (0, 0)),
        ],
        out_specs=(pl.BlockSpec((1, seq_len, H), lambda b: (b, 0, 0)),
                   pl.BlockSpec((1, seq_len, Ls), lambda b: (b, 0, 0))),
        out_shape=(jax.ShapeDtypeStruct((B, seq_len, H), jnp.float32),
                   jax.ShapeDtypeStruct((B, seq_len, Ls), jnp.float32)),
        compiler_params=_PARALLEL,
    )(xpad, embedded, enc_k, enc_v, wv, wg, bv, bg,
      attn_h2e["w"], attn_h2e["b"], attn_e2h["w"], attn_e2h["b"])


# --------------------------------------------------------------------------
# Glue (padding, embeddings, param construction)
# --------------------------------------------------------------------------
def pad_seq(x, kernel_size, causal, pad_value=0.0):
    """x: [B, L, C] -> [B, L + kernel_size - 1, C] zero-padded in sequence dim.

    Only (k-1) rows are added; no im2col duplication.
    """
    if causal:
        # TODO(synk): the reference decoder pads the hidden conv input with a
        # trg_pad_idx-filled constant; zero matches only if trg_pad_idx == 0.
        pad = (kernel_size - 1, 0)
    else:
        p = (kernel_size - 1) // 2
        pad = (p, kernel_size - 1 - p)
    return jnp.pad(x, ((0, 0), pad, (0, 0)), constant_values=pad_value)


def split_conv_weight(w, b, hid_dim):
    """PyTorch Conv1d weight [2H, H, k] + bias [2H] -> per-tap GLU halves.

    Returns (wv[k,H,H] bf16, wg[k,H,H] bf16, bv[1,H] f32, bg[1,H] f32) with
    per-tap matmul weights wv[j][in, out] = w[out, in, j].
    """
    wv = jnp.transpose(w[:hid_dim], (2, 1, 0)).astype(jnp.bfloat16)
    wg = jnp.transpose(w[hid_dim:], (2, 1, 0)).astype(jnp.bfloat16)
    bv = b[:hid_dim].reshape(1, hid_dim)
    bg = b[hid_dim:].reshape(1, hid_dim)
    return (wv, wg, bv, bg)


def init_params(key, *, src_vocab, trg_vocab, emb_dim, hid_dim, n_layers,
                kernel_size, n_intents, n_slots, max_len):
    ks = iter(jax.random.split(key, 64))
    nrm = lambda shape, s=0.1: (jax.random.normal(next(ks), shape) * s).astype(jnp.float32)

    def linear_p(din, dout):  # stored as [in, out] (transposed vs PyTorch)
        return {"w": nrm((din, dout)).astype(jnp.bfloat16),
                "b": nrm((1, dout))}

    def convs():
        layers = []
        for _ in range(n_layers):
            w = nrm((2 * hid_dim, hid_dim, kernel_size))   # PyTorch Conv1d layout
            b = nrm((2 * hid_dim,))
            layers.append(split_conv_weight(w, b, hid_dim))
        return layers

    enc = {
        "tok_emb": nrm((src_vocab, emb_dim)),
        "pos_emb": nrm((max_len, emb_dim)),
        "emb2hid": linear_p(emb_dim, hid_dim),
        "hid2emb": linear_p(hid_dim, emb_dim),
        "convs": convs(),
        "intent_fc": linear_p(emb_dim, n_intents),
    }
    dec = {
        "tok_emb": nrm((trg_vocab, emb_dim)),
        "pos_emb": nrm((max_len, emb_dim)),
        "emb2hid": linear_p(emb_dim, hid_dim),
        "hid2emb": linear_p(hid_dim, emb_dim),
        "attn_hid2emb": linear_p(hid_dim, emb_dim),
        "attn_emb2hid": linear_p(emb_dim, hid_dim),
        "convs": convs(),
        "fc_out": linear_p(emb_dim, n_slots),
    }
    return {"encoder": enc, "decoder": dec}


# --------------------------------------------------------------------------
# Encoder / Decoder / Seq2Seq forward
# --------------------------------------------------------------------------
def encoder_forward(p, src, kernel_size):
    B, Ls = src.shape
    E = p["tok_emb"].shape[1]
    H = p["emb2hid"]["w"].shape[1]

    tok = jnp.take(p["tok_emb"], src, axis=0)                  # [B, Ls, E]
    pos = p["pos_emb"][:Ls][None]                              # [1, Ls, E]
    embedded = tok + pos                                       # dropout = id
    embedded2d = embedded.reshape(B * Ls, E)

    conv_in = linear(embedded2d, p["emb2hid"]).reshape(B, Ls, H)
    pad_left = (kernel_size - 1) // 2
    for layer in p["convs"]:
        xpad = pad_seq(conv_in, kernel_size, causal=False)
        conv_in = encoder_layer(xpad, layer, Ls, pad_left)     # fused block

    conved2d, combined2d = encoder_out(conv_in.reshape(B * Ls, H),
                                       p["hid2emb"], embedded2d)

    # TODO(synk): exact intent head of the original encoder is unspecified in
    # model4/predict.py; using Linear(emb_dim, n_intents) on mean-pooled combined.
    pooled = jnp.mean(combined2d.reshape(B, Ls, E), axis=1)    # [B, E]
    intent_output = linear(pooled, p["intent_fc"])

    return (conved2d.reshape(B, Ls, E), combined2d.reshape(B, Ls, E),
            intent_output)


def decoder_forward(p, trg, enc_conved, enc_combined, kernel_size):
    B, Lt = trg.shape
    E = p["tok_emb"].shape[1]
    H = p["emb2hid"]["w"].shape[1]

    tok = jnp.take(p["tok_emb"], trg, axis=0)                  # [B, Lt, E]
    pos = p["pos_emb"][:Lt][None]
    embedded = tok + pos
    embedded2d = embedded.reshape(B * Lt, E)

    conv_in = linear(embedded2d, p["emb2hid"]).reshape(B, Lt, H)

    # cast encoder keys/values once to bf16 — halves their HBM re-read per layer
    enc_k = enc_conved.astype(jnp.bfloat16)
    enc_v = enc_combined.astype(jnp.bfloat16)

    attention = None
    for layer in p["convs"]:
        xpad = pad_seq(conv_in, kernel_size, causal=True)
        conv_in, attention = decoder_layer(xpad, embedded, enc_k, enc_v, layer,
                                           p["attn_hid2emb"], p["attn_emb2hid"],
                                           Lt)

    slot = decoder_head(conv_in.reshape(B * Lt, H), p["hid2emb"], p["fc_out"])
    n_slots = p["fc_out"]["w"].shape[1]
    return slot.reshape(B, Lt, n_slots), attention


def seq2seq_forward(params, src, trg, kernel_size):
    enc_conved, enc_combined, intent_output = encoder_forward(
        params["encoder"], src, kernel_size)
    slot_output, attention = decoder_forward(
        params["decoder"], trg, enc_conved, enc_combined, kernel_size)
    return intent_output, slot_output, attention


# --------------------------------------------------------------------------
if __name__ == "__main__":
    B, SRC_LEN, TRG_LEN = 2, 10, 8
    EMB, HID, N_LAYERS, KSIZE = 32, 32, 2, 3
    SRC_VOCAB, TRG_VOCAB, N_INTENTS, N_SLOTS, MAX_LEN = 20, 17, 5, 17, 64

    root = jax.random.PRNGKey(0)
    k_param, k_src, k_trg = jax.random.split(root, 3)

    params = init_params(k_param, src_vocab=SRC_VOCAB, trg_vocab=TRG_VOCAB,
                         emb_dim=EMB, hid_dim=HID, n_layers=N_LAYERS,
                         kernel_size=KSIZE, n_intents=N_INTENTS,
                         n_slots=N_SLOTS, max_len=MAX_LEN)

    src = jax.random.randint(k_src, (B, SRC_LEN), 0, SRC_VOCAB, dtype=jnp.int32)
    trg = jax.random.randint(k_trg, (B, TRG_LEN), 0, TRG_VOCAB, dtype=jnp.int32)

    fwd = jax.jit(seq2seq_forward, static_argnames=("kernel_size",))
    intent_output, slot_output, attention = fwd(params, src, trg,
                                                kernel_size=KSIZE)
    jax.block_until_ready((intent_output, slot_output, attention))

    assert intent_output.shape == (B, N_INTENTS)
    assert slot_output.shape == (B, TRG_LEN, N_SLOTS)
    assert attention.shape == (B, TRG_LEN, SRC_LEN)
    assert bool(jnp.all(jnp.isfinite(intent_output)))
    assert bool(jnp.all(jnp.isfinite(slot_output)))
    assert bool(jnp.all(jnp.isfinite(attention)))
    # approx reciprocal in the softmax -> allow a slightly looser tolerance
    assert bool(jnp.allclose(jnp.sum(attention, axis=-1), 1.0, atol=1e-2))

    print("KERNEL_OK")
</pallas_src>

<mosaic_0001>
module attributes {stable_mosaic.version = 11 : i64} {
  func.func @_linear_kernel(%arg0: i32, %arg1: memref<20x32xf32, #tpu.memory_space<vmem>>, %arg2: memref<32x32xbf16, #tpu.memory_space<vmem>>, %arg3: memref<1x32xf32, #tpu.memory_space<vmem>>, %arg4: memref<20x32xf32, #tpu.memory_space<vmem>>) attributes {dimension_semantics = [#tpu.dimension_semantics<parallel>], iteration_bounds = array<i64: 1>, scalar_prefetch = 0 : i64, scratch_operands = 0 : i64, tpu.core_type = #tpu.core_type<tc>, window_params = [{transform_indices = @transform_0, window_bounds = array<i64: 20, 32>}, {pipeline_mode = #tpu.pipeline_mode<synchronous>, transform_indices = @transform_1, window_bounds = array<i64: 32, 32>}, {pipeline_mode = #tpu.pipeline_mode<synchronous>, transform_indices = @transform_2, window_bounds = array<i64: 1, 32>}, {transform_indices = @transform_3, window_bounds = array<i64: 20, 32>}]} {
    %c0 = arith.constant 0 : index
    %c0_0 = arith.constant 0 : index
    %0 = vector.load %arg1[%c0, %c0_0] : memref<20x32xf32, #tpu.memory_space<vmem>>, vector<20x32xf32>
    %1 = arith.truncf %0 : vector<20x32xf32> to vector<20x32xbf16>
    %c0_1 = arith.constant 0 : index
    %c0_2 = arith.constant 0 : index
    %2 = vector.load %arg2[%c0_1, %c0_2] : memref<32x32xbf16, #tpu.memory_space<vmem>>, vector<32x32xbf16>
    %cst = arith.constant dense<0.000000e+00> : vector<20x32xf32>
    %3 = tpu.matmul %1, %2, %cst {dimension_numbers = #tpu.dot_dimension_numbers<[1], [0], [0], [1], [0, 0, 1, 1], [], []>} : vector<20x32xbf16>, vector<32x32xbf16>, vector<20x32xf32> -> vector<20x32xf32>
    %c0_3 = arith.constant 0 : index
    %c0_4 = arith.constant 0 : index
    %4 = vector.load %arg3[%c0_3, %c0_4] : memref<1x32xf32, #tpu.memory_space<vmem>>, vector<1x32xf32>
    %5 = vector.broadcast %4 : vector<1x32xf32> to vector<20x32xf32>
    %6 = arith.addf %3, %5 : vector<20x32xf32>
    %c0_5 = arith.constant 0 : index
    %c0_6 = arith.constant 0 : index
    %7 = vector.load %arg4[%c0_5, %c0_6] : memref<20x32xf32, #tpu.memory_space<vmem>>, vector<20x32xf32>
    tpu.vector_store %arg4[%c0_5, %c0_6], %6 {strides = array<i32>} : memref<20x32xf32, #tpu.memory_space<vmem>>, vector<20x32xf32>,
    return
  }
  func.func @transform_0(%arg0: i32) -> (i32, i32) {
    %c0_i32 = arith.constant 0 : i32
    %c0_i32_0 = arith.constant 0 : i32
    return %arg0, %c0_i32 : i32, i32
  }
  func.func @transform_1(%arg0: i32) -> (i32, i32) {
    %c0_i32 = arith.constant 0 : i32
    %c0_i32_0 = arith.constant 0 : i32
    %c0_i32_1 = arith.constant 0 : i32
    return %c0_i32, %c0_i32_0 : i32, i32
  }
  func.func @transform_2(%arg0: i32) -> (i32, i32) {
    %c0_i32 = arith.constant 0 : i32
    %c0_i32_0 = arith.constant 0 : i32
    %c0_i32_1 = arith.constant 0 : i32
    return %c0_i32, %c0_i32_0 : i32, i32
  }
  func.func @transform_3(%arg0: i32) -> (i32, i32) {
    %c0_i32 = arith.constant 0 : i32
    %c0_i32_0 = arith.constant 0 : i32
    return %arg0, %c0_i32 : i32, i32
  }
}

module attributes {stable_mosaic.version = 11 : i64} {
  func.func @_enc_out_kernel(%arg0: i32, %arg1: memref<20x32xf32, #tpu.memory_space<vmem>>, %arg2: memref<32x32xbf16, #tpu.memory_space<vmem>>, %arg3: memref<1x32xf32, #tpu.memory_space<vmem>>, %arg4: memref<20x32xf32, #tpu.memory_space<vmem>>, %arg5: memref<20x32xf32, #tpu.memory_space<vmem>>, %arg6: memref<20x32xf32, #tpu.memory_space<vmem>>) attributes {dimension_semantics = [#tpu.dimension_semantics<parallel>], iteration_bounds = array<i64: 1>, scalar_prefetch = 0 : i64, scratch_operands = 0 : i64, tpu.core_type = #tpu.core_type<tc>, window_params = [{transform_indices = @transform_0, window_bounds = array<i64: 20, 32>}, {pipeline_mode = #tpu.pipeline_mode<synchronous>, transform_indices = @transform_1, window_bounds = array<i64: 32, 32>}, {pipeline_mode = #tpu.pipeline_mode<synchronous>, transform_indices = @transform_2, window_bounds = array<i64: 1, 32>}, {transform_indices = @transform_3, window_bounds = array<i64: 20, 32>}, {transform_indices = @transform_4, window_bounds = array<i64: 20, 32>}, {transform_indices = @transform_5, window_bounds = array<i64: 20, 32>}]} {
    %c0 = arith.constant 0 : index
    %c0_0 = arith.constant 0 : index
    %0 = vector.load %arg1[%c0, %c0_0] : memref<20x32xf32, #tpu.memory_space<vmem>>, vector<20x32xf32>
    %1 = arith.truncf %0 : vector<20x32xf32> to vector<20x32xbf16>
    %c0_1 = arith.constant 0 : index
    %c0_2 = arith.constant 0 : index
    %2 = vector.load %arg2[%c0_1, %c0_2] : memref<32x32xbf16, #tpu.memory_space<vmem>>, vector<32x32xbf16>
    %cst = arith.constant dense<0.000000e+00> : vector<20x32xf32>
    %3 = tpu.matmul %1, %2, %cst {dimension_numbers = #tpu.dot_dimension_numbers<[1], [0], [0], [1], [0, 0, 1, 1], [], []>} : vector<20x32xbf16>, vector<32x32xbf16>, vector<20x32xf32> -> vector<20x32xf32>
    %c0_3 = arith.constant 0 : index
    %c0_4 = arith.constant 0 : index
    %4 = vector.load %arg3[%c0_3, %c0_4] : memref<1x32xf32, #tpu.memory_space<vmem>>, vector<1x32xf32>
    %5 = vector.broadcast %4 : vector<1x32xf32> to vector<20x32xf32>
    %6 = arith.addf %3, %5 : vector<20x32xf32>
    %c0_5 = arith.constant 0 : index
    %c0_6 = arith.constant 0 : index
    %7 = vector.load %arg5[%c0_5, %c0_6] : memref<20x32xf32, #tpu.memory_space<vmem>>, vector<20x32xf32>
    tpu.vector_store %arg5[%c0_5, %c0_6], %6 {strides = array<i32>} : memref<20x32xf32, #tpu.memory_space<vmem>>, vector<20x32xf32>,
    %c0_7 = arith.constant 0 : index
    %c0_8 = arith.constant 0 : index
    %8 = vector.load %arg4[%c0_7, %c0_8] : memref<20x32xf32, #tpu.memory_space<vmem>>, vector<20x32xf32>
    %9 = arith.addf %6, %8 : vector<20x32xf32>
    %cst_9 = arith.constant 0.707106769 : f32
    %10 = vector.broadcast %cst_9 : f32 to vector<20x32xf32>
    %11 = arith.mulf %9, %10 : vector<20x32xf32>
    %c0_10 = arith.constant 0 : index
    %c0_11 = arith.constant 0 : index
    %12 = vector.load %arg6[%c0_10, %c0_11] : memref<20x32xf32, #tpu.memory_space<vmem>>, vector<20x32xf32>
    tpu.vector_store %arg6[%c0_10, %c0_11], %11 {strides = array<i32>} : memref<20x32xf32, #tpu.memory_space<vmem>>, vector<20x32xf32>,
    return
  }
  func.func @transform_0(%arg0: i32) -> (i32, i32) {
    %c0_i32 = arith.constant 0 : i32
    %c0_i32_0 = arith.constant 0 : i32
    return %arg0, %c0_i32 : i32, i32
  }
  func.func @transform_1(%arg0: i32) -> (i32, i32) {
    %c0_i32 = arith.constant 0 : i32
    %c0_i32_0 = arith.constant 0 : i32
    %c0_i32_1 = arith.constant 0 : i32
    return %c0_i32, %c0_i32_0 : i32, i32
  }
  func.func @transform_2(%arg0: i32) -> (i32, i32) {
    %c0_i32 = arith.constant 0 : i32
    %c0_i32_0 = arith.constant 0 : i32
    %c0_i32_1 = arith.constant 0 : i32
    return %c0_i32, %c0_i32_0 : i32, i32
  }
  func.func @transform_3(%arg0: i32) -> (i32, i32) {
    %c0_i32 = arith.constant 0 : i32
    %c0_i32_0 = arith.constant 0 : i32
    return %arg0, %c0_i32 : i32, i32
  }
  func.func @transform_4(%arg0: i32) -> (i32, i32) {
    %c0_i32 = arith.constant 0 : i32
    %c0_i32_0 = arith.constant 0 : i32
    return %arg0, %c0_i32 : i32, i32
  }
  func.func @transform_5(%arg0: i32) -> (i32, i32) {
    %c0_i32 = arith.constant 0 : i32
    %c0_i32_0 = arith.constant 0 : i32
    return %arg0, %c0_i32 : i32, i32
  }
}

module attributes {stable_mosaic.version = 11 : i64} {
  func.func @_enc_layer_kernel(%arg0: i32, %arg1: memref<1x12x32xf32, #tpu.memory_space<vmem>>, %arg2: memref<3x32x32xbf16, #tpu.memory_space<vmem>>, %arg3: memref<3x32x32xbf16, #tpu.memory_space<vmem>>, %arg4: memref<1x32xf32, #tpu.memory_space<vmem>>, %arg5: memref<1x32xf32, #tpu.memory_space<vmem>>, %arg6: memref<1x10x32xf32, #tpu.memory_space<vmem>>) attributes {dimension_semantics = [#tpu.dimension_semantics<parallel>], iteration_bounds = array<i64: 2>, scalar_prefetch = 0 : i64, scratch_operands = 0 : i64, tpu.core_type = #tpu.core_type<tc>, window_params = [{transform_indices = @transform_0, window_bounds = array<i64: 1, 12, 32>}, {pipeline_mode = #tpu.pipeline_mode<synchronous>, transform_indices = @transform_1, window_bounds = array<i64: 3, 32, 32>}, {pipeline_mode = #tpu.pipeline_mode<synchronous>, transform_indices = @transform_2, window_bounds = array<i64: 3, 32, 32>}, {pipeline_mode = #tpu.pipeline_mode<synchronous>, transform_indices = @transform_3, window_bounds = array<i64: 1, 32>}, {pipeline_mode = #tpu.pipeline_mode<synchronous>, transform_indices = @transform_4, window_bounds = array<i64: 1, 32>}, {transform_indices = @transform_5, window_bounds = array<i64: 1, 10, 32>}]} {
    %c0 = arith.constant 0 : index
    %c0_0 = arith.constant 0 : index
    %c0_1 = arith.constant 0 : index
    %0 = vector.load %arg1[%c0, %c0_0, %c0_1] : memref<1x12x32xf32, #tpu.memory_space<vmem>>, vector<1x12x32xf32>
    %1 = vector.shape_cast %0 : vector<1x12x32xf32> to vector<12x32xf32>
    %c0_2 = arith.constant 0 : index
    %c0_3 = arith.constant 0 : index
    %2 = vector.load %arg4[%c0_2, %c0_3] : memref<1x32xf32, #tpu.memory_space<vmem>>, vector<1x32xf32>
    %c0_4 = arith.constant 0 : index
    %c0_5 = arith.constant 0 : index
    %3 = vector.load %arg5[%c0_4, %c0_5] : memref<1x32xf32, #tpu.memory_space<vmem>>, vector<1x32xf32>
    %4 = vector.extract_strided_slice %1 {offsets = [0, 0], sizes = [10, 32], strides = [1, 1]} : vector<12x32xf32> to vector<10x32xf32>
    %5 = arith.truncf %4 : vector<10x32xf32> to vector<10x32xbf16>
    %c0_6 = arith.constant 0 : index
    %c0_7 = arith.constant 0 : index
    %c0_8 = arith.constant 0 : index
    %6 = vector.load %arg2[%c0_6, %c0_7, %c0_8] : memref<3x32x32xbf16, #tpu.memory_space<vmem>>, vector<1x32x32xbf16>
    %7 = vector.shape_cast %6 : vector<1x32x32xbf16> to vector<32x32xbf16>
    %cst = arith.constant dense<0.000000e+00> : vector<10x32xf32>
    %8 = tpu.matmul %5, %7, %cst {dimension_numbers = #tpu.dot_dimension_numbers<[1], [0], [0], [1], [0, 0, 1, 1], [], []>} : vector<10x32xbf16>, vector<32x32xbf16>, vector<10x32xf32> -> vector<10x32xf32>
    %9 = vector.broadcast %2 : vector<1x32xf32> to vector<10x32xf32>
    %10 = arith.addf %9, %8 : vector<10x32xf32>
    %c0_9 = arith.constant 0 : index
    %c0_10 = arith.constant 0 : index
    %c0_11 = arith.constant 0 : index
    %11 = vector.load %arg3[%c0_9, %c0_10, %c0_11] : memref<3x32x32xbf16, #tpu.memory_space<vmem>>, vector<1x32x32xbf16>
    %12 = vector.shape_cast %11 : vector<1x32x32xbf16> to vector<32x32xbf16>
    %cst_12 = arith.constant dense<0.000000e+00> : vector<10x32xf32>
    %13 = tpu.matmul %5, %12, %cst_12 {dimension_numbers = #tpu.dot_dimension_numbers<[1], [0], [0], [1], [0, 0, 1, 1], [], []>} : vector<10x32xbf16>, vector<32x32xbf16>, vector<10x32xf32> -> vector<10x32xf32>
    %14 = vector.broadcast %3 : vector<1x32xf32> to vector<10x32xf32>
    %15 = arith.addf %14, %13 : vector<10x32xf32>
    %16 = vector.extract_strided_slice %1 {offsets = [1, 0], sizes = [10, 32], strides = [1, 1]} : vector<12x32xf32> to vector<10x32xf32>
    %17 = arith.truncf %16 : vector<10x32xf32> to vector<10x32xbf16>
    %c1 = arith.constant 1 : index
    %c0_13 = arith.constant 0 : index
    %c0_14 = arith.constant 0 : index
    %18 = vector.load %arg2[%c1, %c0_13, %c0_14] : memref<3x32x32xbf16, #tpu.memory_space<vmem>>, vector<1x32x32xbf16>
    %19 = vector.shape_cast %18 : vector<1x32x32xbf16> to vector<32x32xbf16>
    %cst_15 = arith.constant dense<0.000000e+00> : vector<10x32xf32>
    %20 = tpu.matmul %17, %19, %cst_15 {dimension_numbers = #tpu.dot_dimension_numbers<[1], [0], [0], [1], [0, 0, 1, 1], [], []>} : vector<10x32xbf16>, vector<32x32xbf16>, vector<10x32xf32> -> vector<10x32xf32>
    %21 = arith.addf %10, %20 : vector<10x32xf32>
    %c1_16 = arith.constant 1 : index
    %c0_17 = arith.constant 0 : index
    %c0_18 = arith.constant 0 : index
    %22 = vector.load %arg3[%c1_16, %c0_17, %c0_18] : memref<3x32x32xbf16, #tpu.memory_space<vmem>>, vector<1x32x32xbf16>
    %23 = vector.shape_cast %22 : vector<1x32x32xbf16> to vector<32x32xbf16>
    %cst_19 = arith.constant dense<0.000000e+00> : vector<10x32xf32>
    %24 = tpu.matmul %17, %23, %cst_19 {dimension_numbers = #tpu.dot_dimension_numbers<[1], [0], [0], [1], [0, 0, 1, 1], [], []>} : vector<10x32xbf16>, vector<32x32xbf16>, vector<10x32xf32> -> vector<10x32xf32>
    %25 = arith.addf %15, %24 : vector<10x32xf32>
    %26 = vector.extract_strided_slice %1 {offsets = [2, 0], sizes = [10, 32], strides = [1, 1]} : vector<12x32xf32> to vector<10x32xf32>
    %27 = arith.truncf %26 : vector<10x32xf32> to vector<10x32xbf16>
    %c2 = arith.constant 2 : index
    %c0_20 = arith.constant 0 : index
    %c0_21 = arith.constant 0 : index
    %28 = vector.load %arg2[%c2, %c0_20, %c0_21] : memref<3x32x32xbf16, #tpu.memory_space<vmem>>, vector<1x32x32xbf16>
    %29 = vector.shape_cast %28 : vector<1x32x32xbf16> to vector<32x32xbf16>
    %cst_22 = arith.constant dense<0.000000e+00> : vector<10x32xf32>
    %30 = tpu.matmul %27, %29, %cst_22 {dimension_numbers = #tpu.dot_dimension_numbers<[1], [0], [0], [1], [0, 0, 1, 1], [], []>} : vector<10x32xbf16>, vector<32x32xbf16>, vector<10x32xf32> -> vector<10x32xf32>
    %31 = arith.addf %21, %30 : vector<10x32xf32>
    %c2_23 = arith.constant 2 : index
    %c0_24 = arith.constant 0 : index
    %c0_25 = arith.constant 0 : index
    %32 = vector.load %arg3[%c2_23, %c0_24, %c0_25] : memref<3x32x32xbf16, #tpu.memory_space<vmem>>, vector<1x32x32xbf16>
    %33 = vector.shape_cast %32 : vector<1x32x32xbf16> to vector<32x32xbf16>
    %cst_26 = arith.constant dense<0.000000e+00> : vector<10x32xf32>
    %34 = tpu.matmul %27, %33, %cst_26 {dimension_numbers = #tpu.dot_dimension_numbers<[1], [0], [0], [1], [0, 0, 1, 1], [], []>} : vector<10x32xbf16>, vector<32x32xbf16>, vector<10x32xf32> -> vector<10x32xf32>
    %35 = arith.addf %25, %34 : vector<10x32xf32>
    %36 = arith.negf %35 : vector<10x32xf32>
    %37 = math.exp %36 : vector<10x32xf32>
    %cst_27 = arith.constant 1.000000e+00 : f32
    %38 = vector.broadcast %cst_27 : f32 to vector<10x32xf32>
    %39 = arith.addf %38, %37 : vector<10x32xf32>
    %40 = arith.divf %38, %39 : vector<10x32xf32>
    %41 = arith.mulf %31, %40 : vector<10x32xf32>
    %42 = vector.extract_strided_slice %1 {offsets = [1, 0], sizes = [10, 32], strides = [1, 1]} : vector<12x32xf32> to vector<10x32xf32>
    %43 = arith.addf %41, %42 : vector<10x32xf32>
    %cst_28 = arith.constant 0.707106769 : f32
    %44 = vector.broadcast %cst_28 : f32 to vector<10x32xf32>
    %45 = arith.mulf %43, %44 : vector<10x32xf32>
    %c0_29 = arith.constant 0 : index
    %c0_30 = arith.constant 0 : index
    %c0_31 = arith.constant 0 : index
    %46 = vector.load %arg6[%c0_29, %c0_30, %c0_31] : memref<1x10x32xf32, #tpu.memory_space<vmem>>, vector<1x10x32xf32>
    %47 = vector.shape_cast %46 : vector<1x10x32xf32> to vector<10x32xf32>
    %48 = vector.shape_cast %45 : vector<10x32xf32> to vector<1x10x32xf32>
    tpu.vector_store %arg6[%c0_29, %c0_30, %c0_31], %48 {strides = array<i32>} : memref<1x10x32xf32, #tpu.memory_space<vmem>>, vector<1x10x32xf32>,
    return
  }
  func.func @transform_0(%arg0: i32) -> (i32, i32, i32) {
    %c0_i32 = arith.constant 0 : i32
    %c0_i32_0 = arith.constant 0 : i32
    %c0_i32_1 = arith.constant 0 : i32
    return %arg0, %c0_i32, %c0_i32_0 : i32, i32, i32
  }
  func.func @transform_1(%arg0: i32) -> (i32, i32, i32) {
    %c0_i32 = arith.constant 0 : i32
    %c0_i32_0 = arith.constant 0 : i32
    %c0_i32_1 = arith.constant 0 : i32
    %c0_i32_2 = arith.constant 0 : i32
    return %c0_i32, %c0_i32_0, %c0_i32_1 : i32, i32, i32
  }
  func.func @transform_2(%arg0: i32) -> (i32, i32, i32) {
    %c0_i32 = arith.constant 0 : i32
    %c0_i32_0 = arith.constant 0 : i32
    %c0_i32_1 = arith.constant 0 : i32
    %c0_i32_2 = arith.constant 0 : i32
    return %c0_i32, %c0_i32_0, %c0_i32_1 : i32, i32, i32
  }
  func.func @transform_3(%arg0: i32) -> (i32, i32) {
    %c0_i32 = arith.constant 0 : i32
    %c0_i32_0 = arith.constant 0 : i32
    %c0_i32_1 = arith.constant 0 : i32
    return %c0_i32, %c0_i32_0 : i32, i32
  }
  func.func @transform_4(%arg0: i32) -> (i32, i32) {
    %c0_i32 = arith.constant 0 : i32
    %c0_i32_0 = arith.constant 0 : i32
    %c0_i32_1 = arith.constant 0 : i32
    return %c0_i32, %c0_i32_0 : i32, i32
  }
  func.func @transform_5(%arg0: i32) -> (i32, i32, i32) {
    %c0_i32 = arith.constant 0 : i32
    %c0_i32_0 = arith.constant 0 : i32
    %c0_i32_1 = arith.constant 0 : i32
    return %arg0, %c0_i32, %c0_i32_0 : i32, i32, i32
  }
}

module attributes {stable_mosaic.version = 11 : i64} {
  func.func @_linear_kernel(%arg0: i32, %arg1: memref<16x32xf32, #tpu.memory_space<vmem>>, %arg2: memref<32x32xbf16, #tpu.memory_space<vmem>>, %arg3: memref<1x32xf32, #tpu.memory_space<vmem>>, %arg4: memref<16x32xf32, #tpu.memory_space<vmem>>) attributes {dimension_semantics = [#tpu.dimension_semantics<parallel>], iteration_bounds = array<i64: 1>, scalar_prefetch = 0 : i64, scratch_operands = 0 : i64, tpu.core_type = #tpu.core_type<tc>, window_params = [{transform_indices = @transform_0, window_bounds = array<i64: 16, 32>}, {pipeline_mode = #tpu.pipeline_mode<synchronous>, transform_indices = @transform_1, window_bounds = array<i64: 32, 32>}, {pipeline_mode = #tpu.pipeline_mode<synchronous>, transform_indices = @transform_2, window_bounds = array<i64: 1, 32>}, {transform_indices = @transform_3, window_bounds = array<i64: 16, 32>}]} {
    %c0 = arith.constant 0 : index
    %c0_0 = arith.constant 0 : index
    %0 = vector.load %arg1[%c0, %c0_0] : memref<16x32xf32, #tpu.memory_space<vmem>>, vector<16x32xf32>
    %1 = arith.truncf %0 : vector<16x32xf32> to vector<16x32xbf16>
    %c0_1 = arith.constant 0 : index
    %c0_2 = arith.constant 0 : index
    %2 = vector.load %arg2[%c0_1, %c0_2] : memref<32x32xbf16, #tpu.memory_space<vmem>>, vector<32x32xbf16>
    %cst = arith.constant dense<0.000000e+00> : vector<16x32xf32>
    %3 = tpu.matmul %1, %2, %cst {dimension_numbers = #tpu.dot_dimension_numbers<[1], [0], [0], [1], [0, 0, 1, 1], [], []>} : vector<16x32xbf16>, vector<32x32xbf16>, vector<16x32xf32> -> vector<16x32xf32>
    %c0_3 = arith.constant 0 : index
    %c0_4 = arith.constant 0 : index
    %4 = vector.load %arg3[%c0_3, %c0_4] : memref<1x32xf32, #tpu.memory_space<vmem>>, vector<1x32xf32>
    %5 = vector.broadcast %4 : vector<1x32xf32> to vector<16x32xf32>
    %6 = arith.addf %3, %5 : vector<16x32xf32>
    %c0_5 = arith.constant 0 : index
    %c0_6 = arith.constant 0 : index
    %7 = vector.load %arg4[%c0_5, %c0_6] : memref<16x32xf32, #tpu.memory_space<vmem>>, vector<16x32xf32>
    tpu.vector_store %arg4[%c0_5, %c0_6], %6 {strides = array<i32>} : memref<16x32xf32, #tpu.memory_space<vmem>>, vector<16x32xf32>,
    return
  }
  func.func @transform_0(%arg0: i32) -> (i32, i32) {
    %c0_i32 = arith.constant 0 : i32
    %c0_i32_0 = arith.constant 0 : i32
    return %arg0, %c0_i32 : i32, i32
  }
  func.func @transform_1(%arg0: i32) -> (i32, i32) {
    %c0_i32 = arith.constant 0 : i32
    %c0_i32_0 = arith.constant 0 : i32
    %c0_i32_1 = arith.constant 0 : i32
    return %c0_i32, %c0_i32_0 : i32, i32
  }
  func.func @transform_2(%arg0: i32) -> (i32, i32) {
    %c0_i32 = arith.constant 0 : i32
    %c0_i32_0 = arith.constant 0 : i32
    %c0_i32_1 = arith.constant 0 : i32
    return %c0_i32, %c0_i32_0 : i32, i32
  }
  func.func @transform_3(%arg0: i32) -> (i32, i32) {
    %c0_i32 = arith.constant 0 : i32
    %c0_i32_0 = arith.constant 0 : i32
    return %arg0, %c0_i32 : i32, i32
  }
}

module attributes {stable_mosaic.version = 11 : i64} {
  func.func @_dec_layer_kernel(%arg0: i32, %arg1: memref<1x10x32xf32, #tpu.memory_space<vmem>>, %arg2: memref<1x8x32xf32, #tpu.memory_space<vmem>>, %arg3: memref<1x10x32xbf16, #tpu.memory_space<vmem>>, %arg4: memref<1x10x32xbf16, #tpu.memory_space<vmem>>, %arg5: memref<3x32x32xbf16, #tpu.memory_space<vmem>>, %arg6: memref<3x32x32xbf16, #tpu.memory_space<vmem>>, %arg7: memref<1x32xf32, #tpu.memory_space<vmem>>, %arg8: memref<1x32xf32, #tpu.memory_space<vmem>>, %arg9: memref<32x32xbf16, #tpu.memory_space<vmem>>, %arg10: memref<1x32xf32, #tpu.memory_space<vmem>>, %arg11: memref<32x32xbf16, #tpu.memory_space<vmem>>, %arg12: memref<1x32xf32, #tpu.memory_space<vmem>>, %arg13: memref<1x8x32xf32, #tpu.memory_space<vmem>>, %arg14: memref<1x8x10xf32, #tpu.memory_space<vmem>>) attributes {dimension_semantics = [#tpu.dimension_semantics<parallel>], iteration_bounds = array<i64: 2>, scalar_prefetch = 0 : i64, scratch_operands = 0 : i64, tpu.core_type = #tpu.core_type<tc>, window_params = [{transform_indices = @transform_0, window_bounds = array<i64: 1, 10, 32>}, {transform_indices = @transform_1, window_bounds = array<i64: 1, 8, 32>}, {transform_indices = @transform_2, window_bounds = array<i64: 1, 10, 32>}, {transform_indices = @transform_3, window_bounds = array<i64: 1, 10, 32>}, {pipeline_mode = #tpu.pipeline_mode<synchronous>, transform_indices = @transform_4, window_bounds = array<i64: 3, 32, 32>}, {pipeline_mode = #tpu.pipeline_mode<synchronous>, transform_indices = @transform_5, window_bounds = array<i64: 3, 32, 32>}, {pipeline_mode = #tpu.pipeline_mode<synchronous>, transform_indices = @transform_6, window_bounds = array<i64: 1, 32>}, {pipeline_mode = #tpu.pipeline_mode<synchronous>, transform_indices = @transform_7, window_bounds = array<i64: 1, 32>}, {pipeline_mode = #tpu.pipeline_mode<synchronous>, transform_indices = @transform_8, window_bounds = array<i64: 32, 32>}, {pipeline_mode = #tpu.pipeline_mode<synchronous>, transform_indices = @transform_9, window_bounds = array<i64: 1, 32>}, {pipeline_mode = #tpu.pipeline_mode<synchronous>, transform_indices = @transform_10, window_bounds = array<i64: 32, 32>}, {pipeline_mode = #tpu.pipeline_mode<synchronous>, transform_indices = @transform_11, window_bounds = array<i64: 1, 32>}, {transform_indices = @transform_12, window_bounds = array<i64: 1, 8, 32>}, {transform_indices = @transform_13, window_bounds = array<i64: 1, 8, 10>}]} {
    %c0 = arith.constant 0 : index
    %c0_0 = arith.constant 0 : index
    %c0_1 = arith.constant 0 : index
    %0 = vector.load %arg1[%c0, %c0_0, %c0_1] : memref<1x10x32xf32, #tpu.memory_space<vmem>>, vector<1x10x32xf32>
    %1 = vector.shape_cast %0 : vector<1x10x32xf32> to vector<10x32xf32>
    %c0_2 = arith.constant 0 : index
    %c0_3 = arith.constant 0 : index
    %2 = vector.load %arg7[%c0_2, %c0_3] : memref<1x32xf32, #tpu.memory_space<vmem>>, vector<1x32xf32>
    %c0_4 = arith.constant 0 : index
    %c0_5 = arith.constant 0 : index
    %3 = vector.load %arg8[%c0_4, %c0_5] : memref<1x32xf32, #tpu.memory_space<vmem>>, vector<1x32xf32>
    %4 = vector.extract_strided_slice %1 {offsets = [0, 0], sizes = [8, 32], strides = [1, 1]} : vector<10x32xf32> to vector<8x32xf32>
    %5 = arith.truncf %4 : vector<8x32xf32> to vector<8x32xbf16>
    %c0_6 = arith.constant 0 : index
    %c0_7 = arith.constant 0 : index
    %c0_8 = arith.constant 0 : index
    %6 = vector.load %arg5[%c0_6, %c0_7, %c0_8] : memref<3x32x32xbf16, #tpu.memory_space<vmem>>, vector<1x32x32xbf16>
    %7 = vector.shape_cast %6 : vector<1x32x32xbf16> to vector<32x32xbf16>
    %cst = arith.constant dense<0.000000e+00> : vector<8x32xf32>
    %8 = tpu.matmul %5, %7, %cst {dimension_numbers = #tpu.dot_dimension_numbers<[1], [0], [0], [1], [0, 0, 1, 1], [], []>} : vector<8x32xbf16>, vector<32x32xbf16>, vector<8x32xf32> -> vector<8x32xf32>
    %9 = vector.broadcast %2 : vector<1x32xf32> to vector<8x32xf32>
    %10 = arith.addf %9, %8 : vector<8x32xf32>
    %c0_9 = arith.constant 0 : index
    %c0_10 = arith.constant 0 : index
    %c0_11 = arith.constant 0 : index
    %11 = vector.load %arg6[%c0_9, %c0_10, %c0_11] : memref<3x32x32xbf16, #tpu.memory_space<vmem>>, vector<1x32x32xbf16>
    %12 = vector.shape_cast %11 : vector<1x32x32xbf16> to vector<32x32xbf16>
    %cst_12 = arith.constant dense<0.000000e+00> : vector<8x32xf32>
    %13 = tpu.matmul %5, %12, %cst_12 {dimension_numbers = #tpu.dot_dimension_numbers<[1], [0], [0], [1], [0, 0, 1, 1], [], []>} : vector<8x32xbf16>, vector<32x32xbf16>, vector<8x32xf32> -> vector<8x32xf32>
    %14 = vector.broadcast %3 : vector<1x32xf32> to vector<8x32xf32>
    %15 = arith.addf %14, %13 : vector<8x32xf32>
    %16 = vector.extract_strided_slice %1 {offsets = [1, 0], sizes = [8, 32], strides = [1, 1]} : vector<10x32xf32> to vector<8x32xf32>
    %17 = arith.truncf %16 : vector<8x32xf32> to vector<8x32xbf16>
    %c1 = arith.constant 1 : index
    %c0_13 = arith.constant 0 : index
    %c0_14 = arith.constant 0 : index
    %18 = vector.load %arg5[%c1, %c0_13, %c0_14] : memref<3x32x32xbf16, #tpu.memory_space<vmem>>, vector<1x32x32xbf16>
    %19 = vector.shape_cast %18 : vector<1x32x32xbf16> to vector<32x32xbf16>
    %cst_15 = arith.constant dense<0.000000e+00> : vector<8x32xf32>
    %20 = tpu.matmul %17, %19, %cst_15 {dimension_numbers = #tpu.dot_dimension_numbers<[1], [0], [0], [1], [0, 0, 1, 1], [], []>} : vector<8x32xbf16>, vector<32x32xbf16>, vector<8x32xf32> -> vector<8x32xf32>
    %21 = arith.addf %10, %20 : vector<8x32xf32>
    %c1_16 = arith.constant 1 : index
    %c0_17 = arith.constant 0 : index
    %c0_18 = arith.constant 0 : index
    %22 = vector.load %arg6[%c1_16, %c0_17, %c0_18] : memref<3x32x32xbf16, #tpu.memory_space<vmem>>, vector<1x32x32xbf16>
    %23 = vector.shape_cast %22 : vector<1x32x32xbf16> to vector<32x32xbf16>
    %cst_19 = arith.constant dense<0.000000e+00> : vector<8x32xf32>
    %24 = tpu.matmul %17, %23, %cst_19 {dimension_numbers = #tpu.dot_dimension_numbers<[1], [0], [0], [1], [0, 0, 1, 1], [], []>} : vector<8x32xbf16>, vector<32x32xbf16>, vector<8x32xf32> -> vector<8x32xf32>
    %25 = arith.addf %15, %24 : vector<8x32xf32>
    %26 = vector.extract_strided_slice %1 {offsets = [2, 0], sizes = [8, 32], strides = [1, 1]} : vector<10x32xf32> to vector<8x32xf32>
    %27 = arith.truncf %26 : vector<8x32xf32> to vector<8x32xbf16>
    %c2 = arith.constant 2 : index
    %c0_20 = arith.constant 0 : index
    %c0_21 = arith.constant 0 : index
    %28 = vector.load %arg5[%c2, %c0_20, %c0_21] : memref<3x32x32xbf16, #tpu.memory_space<vmem>>, vector<1x32x32xbf16>
    %29 = vector.shape_cast %28 : vector<1x32x32xbf16> to vector<32x32xbf16>
    %cst_22 = arith.constant dense<0.000000e+00> : vector<8x32xf32>
    %30 = tpu.matmul %27, %29, %cst_22 {dimension_numbers = #tpu.dot_dimension_numbers<[1], [0], [0], [1], [0, 0, 1, 1], [], []>} : vector<8x32xbf16>, vector<32x32xbf16>, vector<8x32xf32> -> vector<8x32xf32>
    %31 = arith.addf %21, %30 : vector<8x32xf32>
    %c2_23 = arith.constant 2 : index
    %c0_24 = arith.constant 0 : index
    %c0_25 = arith.constant 0 : index
    %32 = vector.load %arg6[%c2_23, %c0_24, %c0_25] : memref<3x32x32xbf16, #tpu.memory_space<vmem>>, vector<1x32x32xbf16>
    %33 = vector.shape_cast %32 : vector<1x32x32xbf16> to vector<32x32xbf16>
    %cst_26 = arith.constant dense<0.000000e+00> : vector<8x32xf32>
    %34 = tpu.matmul %27, %33, %cst_26 {dimension_numbers = #tpu.dot_dimension_numbers<[1], [0], [0], [1], [0, 0, 1, 1], [], []>} : vector<8x32xbf16>, vector<32x32xbf16>, vector<8x32xf32> -> vector<8x32xf32>
    %35 = arith.addf %25, %34 : vector<8x32xf32>
    %36 = arith.negf %35 : vector<8x32xf32>
    %37 = math.exp %36 : vector<8x32xf32>
    %cst_27 = arith.constant 1.000000e+00 : f32
    %38 = vector.broadcast %cst_27 : f32 to vector<8x32xf32>
    %39 = arith.addf %38, %37 : vector<8x32xf32>
    %40 = arith.divf %38, %39 : vector<8x32xf32>
    %41 = arith.mulf %31, %40 : vector<8x32xf32>
    %42 = arith.truncf %41 : vector<8x32xf32> to vector<8x32xbf16>
    %c0_28 = arith.constant 0 : index
    %c0_29 = arith.constant 0 : index
    %43 = vector.load %arg9[%c0_28, %c0_29] : memref<32x32xbf16, #tpu.memory_space<vmem>>, vector<32x32xbf16>
    %cst_30 = arith.constant dense<0.000000e+00> : vector<8x32xf32>
    %44 = tpu.matmul %42, %43, %cst_30 {dimension_numbers = #tpu.dot_dimension_numbers<[1], [0], [0], [1], [0, 0, 1, 1], [], []>} : vector<8x32xbf16>, vector<32x32xbf16>, vector<8x32xf32> -> vector<8x32xf32>
    %c0_31 = arith.constant 0 : index
    %c0_32 = arith.constant 0 : index
    %45 = vector.load %arg10[%c0_31, %c0_32] : memref<1x32xf32, #tpu.memory_space<vmem>>, vector<1x32xf32>
    %46 = vector.broadcast %45 : vector<1x32xf32> to vector<8x32xf32>
    %47 = arith.addf %44, %46 : vector<8x32xf32>
    %c0_33 = arith.constant 0 : index
    %c0_34 = arith.constant 0 : index
    %c0_35 = arith.constant 0 : index
    %48 = vector.load %arg2[%c0_33, %c0_34, %c0_35] : memref<1x8x32xf32, #tpu.memory_space<vmem>>, vector<1x8x32xf32>
    %49 = vector.shape_cast %48 : vector<1x8x32xf32> to vector<8x32xf32>
    %50 = arith.addf %47, %49 : vector<8x32xf32>
    %cst_36 = arith.constant 0.707106769 : f32
    %51 = vector.broadcast %cst_36 : f32 to vector<8x32xf32>
    %52 = arith.mulf %50, %51 : vector<8x32xf32>
    %53 = arith.truncf %52 : vector<8x32xf32> to vector<8x32xbf16>
    %c0_37 = arith.constant 0 : index
    %c0_38 = arith.constant 0 : index
    %c0_39 = arith.constant 0 : index
    %54 = vector.load %arg3[%c0_37, %c0_38, %c0_39] : memref<1x10x32xbf16, #tpu.memory_space<vmem>>, vector<1x10x32xbf16>
    %55 = vector.shape_cast %54 : vector<1x10x32xbf16> to vector<10x32xbf16>
    %cst_40 = arith.constant dense<0.000000e+00> : vector<8x10xf32>
    %56 = tpu.matmul %53, %55, %cst_40 {dimension_numbers = #tpu.dot_dimension_numbers<[1], [1], [0], [0], [0, 0, 1, 0], [], []>} : vector<8x32xbf16>, vector<10x32xbf16>, vector<8x10xf32> -> vector<8x10xf32>
    %cst_41 = arith.constant dense<0xFF800000> : vector<8xf32>
    %57 = vector.multi_reduction <maximumf>, %56, %cst_41 [1] : vector<8x10xf32> to vector<8xf32>
    %58 = vector.shape_cast %57 : vector<8xf32> to vector<8x1xf32>
    %59 = vector.broadcast %58 : vector<8x1xf32> to vector<8x10xf32>
    %60 = arith.subf %56, %59 : vector<8x10xf32>
    %61 = math.exp %60 : vector<8x10xf32>
    %cst_42 = arith.constant dense<0.000000e+00> : vector<8xf32>
    %62 = vector.multi_reduction <add>, %61, %cst_42 [1] : vector<8x10xf32> to vector<8xf32>
    %63 = vector.shape_cast %62 : vector<8xf32> to vector<8x1xf32>
    %64 = tpu.reciprocal %63 {approx = true} : vector<8x1xf32> -> vector<8x1xf32>
    %65 = vector.broadcast %64 : vector<8x1xf32> to vector<8x10xf32>
    %66 = arith.mulf %61, %65 : vector<8x10xf32>
    %c0_43 = arith.constant 0 : index
    %c0_44 = arith.constant 0 : index
    %c0_45 = arith.constant 0 : index
    %67 = vector.load %arg14[%c0_43, %c0_44, %c0_45] : memref<1x8x10xf32, #tpu.memory_space<vmem>>, vector<1x8x10xf32>
    %68 = vector.shape_cast %67 : vector<1x8x10xf32> to vector<8x10xf32>
    %69 = vector.shape_cast %66 : vector<8x10xf32> to vector<1x8x10xf32>
    tpu.vector_store %arg14[%c0_43, %c0_44, %c0_45], %69 {strides = array<i32>} : memref<1x8x10xf32, #tpu.memory_space<vmem>>, vector<1x8x10xf32>,
    %70 = arith.truncf %66 : vector<8x10xf32> to vector<8x10xbf16>
    %c0_46 = arith.constant 0 : index
    %c0_47 = arith.constant 0 : index
    %c0_48 = arith.constant 0 : index
    %71 = vector.load %arg4[%c0_46, %c0_47, %c0_48] : memref<1x10x32xbf16, #tpu.memory_space<vmem>>, vector<1x10x32xbf16>
    %72 = vector.shape_cast %71 : vector<1x10x32xbf16> to vector<10x32xbf16>
    %cst_49 = arith.constant dense<0.000000e+00> : vector<8x32xf32>
    %73 = tpu.matmul %70, %72, %cst_49 {dimension_numbers = #tpu.dot_dimension_numbers<[1], [0], [0], [1], [0, 0, 1, 1], [], []>} : vector<8x10xbf16>, vector<10x32xbf16>, vector<8x32xf32> -> vector<8x32xf32>
    %74 = arith.truncf %73 : vector<8x32xf32> to vector<8x32xbf16>
    %c0_50 = arith.constant 0 : index
    %c0_51 = arith.constant 0 : index
    %75 = vector.load %arg11[%c0_50, %c0_51] : memref<32x32xbf16, #tpu.memory_space<vmem>>, vector<32x32xbf16>
    %cst_52 = arith.constant dense<0.000000e+00> : vector<8x32xf32>
    %76 = tpu.matmul %74, %75, %cst_52 {dimension_numbers = #tpu.dot_dimension_numbers<[1], [0], [0], [1], [0, 0, 1, 1], [], []>} : vector<8x32xbf16>, vector<32x32xbf16>, vector<8x32xf32> -> vector<8x32xf32>
    %c0_53 = arith.constant 0 : index
    %c0_54 = arith.constant 0 : index
    %77 = vector.load %arg12[%c0_53, %c0_54] : memref<1x32xf32, #tpu.memory_space<vmem>>, vector<1x32xf32>
    %78 = vector.broadcast %77 : vector<1x32xf32> to vector<8x32xf32>
    %79 = arith.addf %76, %78 : vector<8x32xf32>
    %80 = arith.addf %79, %41 : vector<8x32xf32>
    %cst_55 = arith.constant 0.707106769 : f32
    %81 = vector.broadcast %cst_55 : f32 to vector<8x32xf32>
    %82 = arith.mulf %80, %81 : vector<8x32xf32>
    %83 = vector.extract_strided_slice %1 {offsets = [2, 0], sizes = [8, 32], strides = [1, 1]} : vector<10x32xf32> to vector<8x32xf32>
    %84 = arith.addf %82, %83 : vector<8x32xf32>
    %cst_56 = arith.constant 0.707106769 : f32
    %85 = vector.broadcast %cst_56 : f32 to vector<8x32xf32>
    %86 = arith.mulf %84, %85 : vector<8x32xf32>
    %c0_57 = arith.constant 0 : index
    %c0_58 = arith.constant 0 : index
    %c0_59 = arith.constant 0 : index
    %87 = vector.load %arg13[%c0_57, %c0_58, %c0_59] : memref<1x8x32xf32, #tpu.memory_space<vmem>>, vector<1x8x32xf32>
    %88 = vector.shape_cast %87 : vector<1x8x32xf32> to vector<8x32xf32>
    %89 = vector.shape_cast %86 : vector<8x32xf32> to vector<1x8x32xf32>
    tpu.vector_store %arg13[%c0_57, %c0_58, %c0_59], %89 {strides = array<i32>} : memref<1x8x32xf32, #tpu.memory_space<vmem>>, vector<1x8x32xf32>,
    return
  }
  func.func @transform_0(%arg0: i32) -> (i32, i32, i32) {
    %c0_i32 = arith.constant 0 : i32
    %c0_i32_0 = arith.constant 0 : i32
    %c0_i32_1 = arith.constant 0 : i32
    return %arg0, %c0_i32, %c0_i32_0 : i32, i32, i32
  }
  func.func @transform_1(%arg0: i32) -> (i32, i32, i32) {
    %c0_i32 = arith.constant 0 : i32
    %c0_i32_0 = arith.constant 0 : i32
    %c0_i32_1 = arith.constant 0 : i32
    return %arg0, %c0_i32, %c0_i32_0 : i32, i32, i32
  }
  func.func @transform_2(%arg0: i32) -> (i32, i32, i32) {
    %c0_i32 = arith.constant 0 : i32
    %c0_i32_0 = arith.constant 0 : i32
    %c0_i32_1 = arith.constant 0 : i32
    return %arg0, %c0_i32, %c0_i32_0 : i32, i32, i32
  }
  func.func @transform_3(%arg0: i32) -> (i32, i32, i32) {
    %c0_i32 = arith.constant 0 : i32
    %c0_i32_0 = arith.constant 0 : i32
    %c0_i32_1 = arith.constant 0 : i32
    return %arg0, %c0_i32, %c0_i32_0 : i32, i32, i32
  }
  func.func @transform_4(%arg0: i32) -> (i32, i32, i32) {
    %c0_i32 = arith.constant 0 : i32
    %c0_i32_0 = arith.constant 0 : i32
    %c0_i32_1 = arith.constant 0 : i32
    %c0_i32_2 = arith.constant 0 : i32
    return %c0_i32, %c0_i32_0, %c0_i32_1 : i32, i32, i32
  }
  func.func @transform_5(%arg0: i32) -> (i32, i32, i32) {
    %c0_i32 = arith.constant 0 : i32
    %c0_i32_0 = arith.constant 0 : i32
    %c0_i32_1 = arith.constant 0 : i32
    %c0_i32_2 = arith.constant 0 : i32
    return %c0_i32, %c0_i32_0, %c0_i32_1 : i32, i32, i32
  }
  func.func @transform_6(%arg0: i32) -> (i32, i32) {
    %c0_i32 = arith.constant 0 : i32
    %c0_i32_0 = arith.constant 0 : i32
    %c0_i32_1 = arith.constant 0 : i32
    return %c0_i32, %c0_i32_0 : i32, i32
  }
  func.func @transform_7(%arg0: i32) -> (i32, i32) {
    %c0_i32 = arith.constant 0 : i32
    %c0_i32_0 = arith.constant 0 : i32
    %c0_i32_1 = arith.constant 0 : i32
    return %c0_i32, %c0_i32_0 : i32, i32
  }
  func.func @transform_8(%arg0: i32) -> (i32, i32) {
    %c0_i32 = arith.constant 0 : i32
    %c0_i32_0 = arith.constant 0 : i32
    %c0_i32_1 = arith.constant 0 : i32
    return %c0_i32, %c0_i32_0 : i32, i32
  }
  func.func @transform_9(%arg0: i32) -> (i32, i32) {
    %c0_i32 = arith.constant 0 : i32
    %c0_i32_0 = arith.constant 0 : i32
    %c0_i32_1 = arith.constant 0 : i32
    return %c0_i32, %c0_i32_0 : i32, i32
  }
  func.func @transform_10(%arg0: i32) -> (i32, i32) {
    %c0_i32 = arith.constant 0 : i32
    %c0_i32_0 = arith.constant 0 : i32
    %c0_i32_1 = arith.constant 0 : i32
    return %c0_i32, %c0_i32_0 : i32, i32
  }
  func.func @transform_11(%arg0: i32) -> (i32, i32) {
    %c0_i32 = arith.constant 0 : i32
    %c0_i32_0 = arith.constant 0 : i32
    %c0_i32_1 = arith.constant 0 : i32
    return %c0_i32, %c0_i32_0 : i32, i32
  }
  func.func @transform_12(%arg0: i32) -> (i32, i32, i32) {
    %c0_i32 = arith.constant 0 : i32
    %c0_i32_0 = arith.constant 0 : i32
    %c0_i32_1 = arith.constant 0 : i32
    return %arg0, %c0_i32, %c0_i32_0 : i32, i32, i32
  }
  func.func @transform_13(%arg0: i32) -> (i32, i32, i32) {
    %c0_i32 = arith.constant 0 : i32
    %c0_i32_0 = arith.constant 0 : i32
    %c0_i32_1 = arith.constant 0 : i32
    return %arg0, %c0_i32, %c0_i32_0 : i32, i32, i32
  }
}

module attributes {stable_mosaic.version = 11 : i64} {
  func.func @_dec_head_kernel(%arg0: i32, %arg1: memref<16x32xf32, #tpu.memory_space<vmem>>, %arg2: memref<32x32xbf16, #tpu.memory_space<vmem>>, %arg3: memref<1x32xf32, #tpu.memory_space<vmem>>, %arg4: memref<32x17xbf16, #tpu.memory_space<vmem>>, %arg5: memref<1x17xf32, #tpu.memory_space<vmem>>, %arg6: memref<16x17xf32, #tpu.memory_space<vmem>>) attributes {dimension_semantics = [#tpu.dimension_semantics<parallel>], iteration_bounds = array<i64: 1>, scalar_prefetch = 0 : i64, scratch_operands = 0 : i64, tpu.core_type = #tpu.core_type<tc>, window_params = [{transform_indices = @transform_0, window_bounds = array<i64: 16, 32>}, {pipeline_mode = #tpu.pipeline_mode<synchronous>, transform_indices = @transform_1, window_bounds = array<i64: 32, 32>}, {pipeline_mode = #tpu.pipeline_mode<synchronous>, transform_indices = @transform_2, window_bounds = array<i64: 1, 32>}, {pipeline_mode = #tpu.pipeline_mode<synchronous>, transform_indices = @transform_3, window_bounds = array<i64: 32, 17>}, {pipeline_mode = #tpu.pipeline_mode<synchronous>, transform_indices = @transform_4, window_bounds = array<i64: 1, 17>}, {transform_indices = @transform_5, window_bounds = array<i64: 16, 17>}]} {
    %c0 = arith.constant 0 : index
    %c0_0 = arith.constant 0 : index
    %0 = vector.load %arg1[%c0, %c0_0] : memref<16x32xf32, #tpu.memory_space<vmem>>, vector<16x32xf32>
    %1 = arith.truncf %0 : vector<16x32xf32> to vector<16x32xbf16>
    %c0_1 = arith.constant 0 : index
    %c0_2 = arith.constant 0 : index
    %2 = vector.load %arg2[%c0_1, %c0_2] : memref<32x32xbf16, #tpu.memory_space<vmem>>, vector<32x32xbf16>
    %cst = arith.constant dense<0.000000e+00> : vector<16x32xf32>
    %3 = tpu.matmul %1, %2, %cst {dimension_numbers = #tpu.dot_dimension_numbers<[1], [0], [0], [1], [0, 0, 1, 1], [], []>} : vector<16x32xbf16>, vector<32x32xbf16>, vector<16x32xf32> -> vector<16x32xf32>
    %c0_3 = arith.constant 0 : index
    %c0_4 = arith.constant 0 : index
    %4 = vector.load %arg3[%c0_3, %c0_4] : memref<1x32xf32, #tpu.memory_space<vmem>>, vector<1x32xf32>
    %5 = vector.broadcast %4 : vector<1x32xf32> to vector<16x32xf32>
    %6 = arith.addf %3, %5 : vector<16x32xf32>
    %7 = arith.truncf %6 : vector<16x32xf32> to vector<16x32xbf16>
    %c0_5 = arith.constant 0 : index
    %c0_6 = arith.constant 0 : index
    %8 = vector.load %arg4[%c0_5, %c0_6] : memref<32x17xbf16, #tpu.memory_space<vmem>>, vector<32x17xbf16>
    %cst_7 = arith.constant dense<0.000000e+00> : vector<16x17xf32>
    %9 = tpu.matmul %7, %8, %cst_7 {dimension_numbers = #tpu.dot_dimension_numbers<[1], [0], [0], [1], [0, 0, 1, 1], [], []>} : vector<16x32xbf16>, vector<32x17xbf16>, vector<16x17xf32> -> vector<16x17xf32>
    %c0_8 = arith.constant 0 : index
    %c0_9 = arith.constant 0 : index
    %10 = vector.load %arg5[%c0_8, %c0_9] : memref<1x17xf32, #tpu.memory_space<vmem>>, vector<1x17xf32>
    %11 = vector.broadcast %10 : vector<1x17xf32> to vector<16x17xf32>
    %12 = arith.addf %9, %11 : vector<16x17xf32>
    %c0_10 = arith.constant 0 : index
    %c0_11 = arith.constant 0 : index
    %13 = vector.load %arg6[%c0_10, %c0_11] : memref<16x17xf32, #tpu.memory_space<vmem>>, vector<16x17xf32>
    tpu.vector_store %arg6[%c0_10, %c0_11], %12 {strides = array<i32>} : memref<16x17xf32, #tpu.memory_space<vmem>>, vector<16x17xf32>,
    return
  }
  func.func @transform_0(%arg0: i32) -> (i32, i32) {
    %c0_i32 = arith.constant 0 : i32
    %c0_i32_0 = arith.constant 0 : i32
    return %arg0, %c0_i32 : i32, i32
  }
  func.func @transform_1(%arg0: i32) -> (i32, i32) {
    %c0_i32 = arith.constant 0 : i32
    %c0_i32_0 = arith.constant 0 : i32
    %c0_i32_1 = arith.constant 0 : i32
    return %c0_i32, %c0_i32_0 : i32, i32
  }
  func.func @transform_2(%arg0: i32) -> (i32, i32) {
    %c0_i32 = arith.constant 0 : i32
    %c0_i32_0 = arith.constant 0 : i32
    %c0_i32_1 = arith.constant 0 : i32
    return %c0_i32, %c0_i32_0 : i32, i32
  }
  func.func @transform_3(%arg0: i32) -> (i32, i32) {
    %c0_i32 = arith.constant 0 : i32
    %c0_i32_0 = arith.constant 0 : i32
    %c0_i32_1 = arith.constant 0 : i32
    return %c0_i32, %c0_i32_0 : i32, i32
  }
  func.func @transform_4(%arg0: i32) -> (i32, i32) {
    %c0_i32 = arith.constant 0 : i32
    %c0_i32_0 = arith.constant 0 : i32
    %c0_i32_1 = arith.constant 0 : i32
    return %c0_i32, %c0_i32_0 : i32, i32
  }
  func.func @transform_5(%arg0: i32) -> (i32, i32) {
    %c0_i32 = arith.constant 0 : i32
    %c0_i32_0 = arith.constant 0 : i32
    return %arg0, %c0_i32 : i32, i32
  }
}

module attributes {stable_mosaic.version = 11 : i64} {
  func.func @_linear_kernel(%arg0: i32, %arg1: memref<2x32xf32, #tpu.memory_space<vmem>>, %arg2: memref<32x5xbf16, #tpu.memory_space<vmem>>, %arg3: memref<1x5xf32, #tpu.memory_space<vmem>>, %arg4: memref<2x5xf32, #tpu.memory_space<vmem>>) attributes {dimension_semantics = [#tpu.dimension_semantics<parallel>], iteration_bounds = array<i64: 1>, scalar_prefetch = 0 : i64, scratch_operands = 0 : i64, tpu.core_type = #tpu.core_type<tc>, window_params = [{transform_indices = @transform_0, window_bounds = array<i64: 2, 32>}, {pipeline_mode = #tpu.pipeline_mode<synchronous>, transform_indices = @transform_1, window_bounds = array<i64: 32, 5>}, {pipeline_mode = #tpu.pipeline_mode<synchronous>, transform_indices = @transform_2, window_bounds = array<i64: 1, 5>}, {transform_indices = @transform_3, window_bounds = array<i64: 2, 5>}]} {
    %c0 = arith.constant 0 : index
    %c0_0 = arith.constant 0 : index
    %0 = vector.load %arg1[%c0, %c0_0] : memref<2x32xf32, #tpu.memory_space<vmem>>, vector<2x32xf32>
    %1 = arith.truncf %0 : vector<2x32xf32> to vector<2x32xbf16>
    %c0_1 = arith.constant 0 : index
    %c0_2 = arith.constant 0 : index
    %2 = vector.load %arg2[%c0_1, %c0_2] : memref<32x5xbf16, #tpu.memory_space<vmem>>, vector<32x5xbf16>
    %cst = arith.constant dense<0.000000e+00> : vector<2x5xf32>
    %3 = tpu.matmul %1, %2, %cst {dimension_numbers = #tpu.dot_dimension_numbers<[1], [0], [0], [1], [0, 0, 1, 1], [], []>} : vector<2x32xbf16>, vector<32x5xbf16>, vector<2x5xf32> -> vector<2x5xf32>
    %c0_3 = arith.constant 0 : index
    %c0_4 = arith.constant 0 : index
    %4 = vector.load %arg3[%c0_3, %c0_4] : memref<1x5xf32, #tpu.memory_space<vmem>>, vector<1x5xf32>
    %5 = vector.broadcast %4 : vector<1x5xf32> to vector<2x5xf32>
    %6 = arith.addf %3, %5 : vector<2x5xf32>
    %c0_5 = arith.constant 0 : index
    %c0_6 = arith.constant 0 : index
    %7 = vector.load %arg4[%c0_5, %c0_6] : memref<2x5xf32, #tpu.memory_space<vmem>>, vector<2x5xf32>
    tpu.vector_store %arg4[%c0_5, %c0_6], %6 {strides = array<i32>} : memref<2x5xf32, #tpu.memory_space<vmem>>, vector<2x5xf32>,
    return
  }
  func.func @transform_0(%arg0: i32) -> (i32, i32) {
    %c0_i32 = arith.constant 0 : i32
    %c0_i32_0 = arith.constant 0 : i32
    return %arg0, %c0_i32 : i32, i32
  }
  func.func @transform_1(%arg0: i32) -> (i32, i32) {
    %c0_i32 = arith.constant 0 : i32
    %c0_i32_0 = arith.constant 0 : i32
    %c0_i32_1 = arith.constant 0 : i32
    return %c0_i32, %c0_i32_0 : i32, i32
  }
  func.func @transform_2(%arg0: i32) -> (i32, i32) {
    %c0_i32 = arith.constant 0 : i32
    %c0_i32_0 = arith.constant 0 : i32
    %c0_i32_1 = arith.constant 0 : i32
    return %c0_i32, %c0_i32_0 : i32, i32
  }
  func.func @transform_3(%arg0: i32) -> (i32, i32) {
    %c0_i32 = arith.constant 0 : i32
    %c0_i32_0 = arith.constant 0 : i32
    return %arg0, %c0_i32 : i32, i32
  }
}

</mosaic_0001>

<llo_original>
// kernel: seq2seq_forward.12
$region0: #{seq2seq_forward.12}
  #allocation0 [shape = 'u32[]', space=smem, size = 0x4, offset = 0x4, fixed_abs, tag = 'smem constant byte address 0x4 - core index']
  #allocation1 [shape = 'u32[144,128]{1,0:T(1,128)}', space=vmem, size = 0x12000, scoped, tag = 'internal scratch']
  %s0 = inlined_call_operand.vmem [shape: f32[20,32], index: 0, kind: input, shape index: {}]
  %s1 = inlined_call_operand.vmem [shape: bf16[32,32], index: 1, kind: input, shape index: {}]
  %s2 = inlined_call_operand.vmem [shape: f32[1,32], index: 2, kind: input, shape index: {}]
  %s3 = inlined_call_operand.vmem [shape: f32[20,32], index: 3, kind: input, shape index: {}]
  %s4 = inlined_call_operand.vmem [shape: f32[20,32], index: 4, kind: output, shape index: {0}]
  %s5 = inlined_call_operand.vmem [shape: f32[20,32], index: 5, kind: output, shape index: {1}]
  %6 = xla_tuple %s4, %s5
  %s7 = sld [smem:[#allocation0]]
  $region34: #{seq2seq_forward.12} parent=0
    _
  %s9 = ssub.s32 1, %s7
  %s10 = scalar_select 0, %s9, %s7
  // Predicated region
  $region2: #{seq2seq_forward.12} parent=0 // pred_check
    _
  $region3: #{seq2seq_forward.12} parent=0 // pred_check_branch
    %12 = sbr.rel (0) target = $region5
  $region4: #{seq2seq_forward.12} parent=0 // pred_region
    _
  $region5: #{seq2seq_forward.12} parent=0 // pred_fallthru
    _
  // Predicated region
  $region6: #{seq2seq_forward.12} parent=0 // pred_check
    _
  $region7: #{seq2seq_forward.12} parent=0 // pred_check_branch
    %14 = sbr.rel (0) target = $region9
  $region8: #{seq2seq_forward.12} parent=0 // pred_region
    _
  $region9: #{seq2seq_forward.12} parent=0 // pred_fallthru
    _
  // Predicated region
  $region10: #{seq2seq_forward.12} parent=0 // pred_check
    _
  $region11: #{seq2seq_forward.12} parent=0 // pred_check_branch
    %16 = sbr.rel (0) target = $region13
  $region12: #{seq2seq_forward.12} parent=0 // pred_region
    _
  $region13: #{seq2seq_forward.12} parent=0 // pred_fallthru
    _
  // Predicated region
  $region14: #{seq2seq_forward.12} parent=0 // pred_check
    _
  $region15: #{seq2seq_forward.12} parent=0 // pred_check_branch
    %18 = sbr.rel (0) target = $region17
  $region16: #{seq2seq_forward.12} parent=0 // pred_region
    _
  $region17: #{seq2seq_forward.12} parent=0 // pred_fallthru
    _
  %v20 = vld [vmem:[%s0] sm:$0xff]
  %v21 = vld [vmem:[%s0 + $0x8] sm:$0xff]
  %v22 = vld [vmem:[%s0 + $0x10] sm:$0xf]
  %v23 = vpack.c.bf16 %v21, %v20
  %v24 = vpack.c.bf16 %v22, %v22
  %v25 = vld [vmem:[%s1] sm:$0xf]
  %v26 = vld [vmem:[%s1 + $0x4] sm:$0xf]
  %v27 = vld [vmem:[%s1 + $0x8] sm:$0xf]
  %v28 = vld [vmem:[%s1 + $0xc] sm:$0xf]
  %v29 = vld [vmem:[%s2] sm:$0x1]
  %v31 = vlaneseq
  %v32 = vshrl.u32 %v31, 7
  %v33 = vsub.s32 0, %v32
  %v34 = vrot.slane %v29, %v33
  %v40 = vunpack.c.l.b16 %v25
  %v41 = vunpack.c.l.b16 %v26
  %v42 = vunpack.c.l.b16 %v27
  %v43 = vunpack.c.l.b16 %v28
  %v44 = vpack.c.b16 %v41, %v40
  %v45 = vpack.c.b16 %v43, %v42
  %vm48 = vcmask 261120
  %v50 = vsel %vm48, %v23, 0
  %v53 = vsel %vm48, %v24, 0
  %55 = vmatprep.subr.bf16.mxu0 0
  %56 = vmatpush1.bf16.msra.mxu0 %v44
  %57 = vmatprep.subr.bf16.mxu0 0
  %58 = vmatpush1.bf16.msra.mxu0 %v45
  %59 = vmatprep.subr.bf16.mxu0 0
  %60 = vmatpush1.bf16.msra.mxu0 0
  %61 = vmatprep.subr.bf16.mxu0 0
  %62 = vmatpush1.bf16.msra.mxu0 0
  %63 = vmatprep.subr.bf16.mxu0 0
  %64 = vmatpush1.bf16.msra.mxu0 0
  %65 = vmatprep.subr.bf16.mxu0 0
  %66 = vmatpush1.bf16.msra.mxu0 0
  %67 = vmatprep.subr.bf16.mxu0 0
  %68 = vmatpush1.bf16.msra.mxu0 0
  %69 = vmatprep.subr.bf16.mxu0 0
  %70 = vmatpush1.bf16.msra.mxu0 0
  %71 = vmatprep.subr.bf16.mxu0 0
  %72 = vmatpush1.bf16.msra.mxu0 0
  %73 = vmatprep.subr.bf16.mxu0 0
  %74 = vmatpush1.bf16.msra.mxu0 0
  %75 = vmatprep.subr.bf16.mxu0 0
  %76 = vmatpush1.bf16.msra.mxu0 0
  %77 = vmatprep.subr.bf16.mxu0 0
  %78 = vmatpush1.bf16.msra.mxu0 0
  %79 = vmatprep.subr.bf16.mxu0 0
  %80 = vmatpush1.bf16.msra.mxu0 0
  %81 = vmatprep.subr.bf16.mxu0 0
  %82 = vmatpush1.bf16.msra.mxu0 0
  %83 = vmatprep.subr.bf16.mxu0 0
  %84 = vmatpush1.bf16.msra.mxu0 0
  %85 = vmatprep.subr.bf16.mxu0 0
  %86 = vmatpush1.bf16.msra.mxu0 0
  %87 = vmatprep.mubr.bf16.mxu0 0
  %88 = vmatmul.mubr.bf16.gmra.mrb[0].mxu0 %v50
  %v89 = vpop.f32.mrb[0].mxu0
  %v90 = vadd.f32 %v34, %v89
  %v91 = vpop.f32.mrb[0].mxu0
  %v92 = vpop.f32.mrb[0].mxu0
  %v93 = vadd.f32 %v34, %v92
  %v94 = vpop.f32.mrb[0].mxu0
  %95 = vmatprep.mubr.bf16.mxu0 0
  %96 = vmatmul.mubr.bf16.gmra.mrb[0].mxu0 %v53
  %v97 = vpop.f32.mrb[0].mxu0
  %v98 = vadd.f32 %v34, %v97
  %v99 = vpop.f32.mrb[0].mxu0
  %v100 = vpop.f32.mrb[0].mxu0
  %v101 = vpop.f32.mrb[0].mxu0
  %102 = vdwg.mxu0
  %103 = vst.msk [vmem:[%s4] sm:$0xff] %vm48, %v90
  %104 = vst.msk [vmem:[%s4 + $0x8] sm:$0xff] %vm48, %v93
  %vm105 = vcmask 257024
  %106 = vst.msk [vmem:[%s4 + $0x10] sm:$0xf] %vm105, %v98
  %v107 = vld [vmem:[%s3] sm:$0xff]
  %v108 = vld [vmem:[%s3 + $0x8] sm:$0xff]
  %v109 = vld [vmem:[%s3 + $0x10] sm:$0xf]
  %v110 = vadd.f32 %v90, %v107
  %v111 = vadd.f32 %v93, %v108
  %v112 = vadd.f32 %v98, %v109
  %v113 = vmul.f32 %v110, 0.70710677
  %v114 = vmul.f32 %v111, 0.70710677
  %v115 = vmul.f32 %v112, 0.70710677
  %116 = vst.msk [vmem:[%s5] sm:$0xff] %vm48, %v113
  %117 = vst.msk [vmem:[%s5 + $0x8] sm:$0xff] %vm48, %v114
  %118 = vst.msk [vmem:[%s5 + $0x10] sm:$0xf] %vm105, %v115
  // Predicated region
  $region18: #{seq2seq_forward.12} parent=0 // pred_check
    _
  $region19: #{seq2seq_forward.12} parent=0 // pred_check_branch
    %120 = sbr.rel (0) target = $region21
  $region20: #{seq2seq_forward.12} parent=0 // pred_region
    _
  $region21: #{seq2seq_forward.12} parent=0 // pred_fallthru
    _
  // Predicated region
  $region22: #{seq2seq_forward.12} parent=0 // pred_check
    _
  $region23: #{seq2seq_forward.12} parent=0 // pred_check_branch
    %122 = sbr.rel (0) target = $region25
  $region24: #{seq2seq_forward.12} parent=0 // pred_region
    _
  $region25: #{seq2seq_forward.12} parent=0 // pred_fallthru
    _
  // Predicated region
  $region26: #{seq2seq_forward.12} parent=0 // pred_check
    _
  $region27: #{seq2seq_forward.12} parent=0 // pred_check_branch
    %124 = sbr.rel (0) target = $region29
  $region28: #{seq2seq_forward.12} parent=0 // pred_region
    _
  $region29: #{seq2seq_forward.12} parent=0 // pred_fallthru
    _
  // Predicated region
  $region30: #{seq2seq_forward.12} parent=0 // pred_check
    _
  $region31: #{seq2seq_forward.12} parent=0 // pred_check_branch
    %126 = sbr.rel (0) target = $region33
  $region32: #{seq2seq_forward.12} parent=0 // pred_region
    _
  $region33: #{seq2seq_forward.12} parent=0 // pred_fallthru
    _

// kernel: seq2seq_forward.9
$region0: #{seq2seq_forward.9}
  #allocation0 [shape = 'u32[]', space=smem, size = 0x4, offset = 0x4, fixed_abs, tag = 'smem constant byte address 0x4 - core index']
  #allocation1 [shape = 'u32[144,128]{1,0:T(1,128)}', space=vmem, size = 0x12000, scoped, tag = 'internal scratch']
  %s0 = inlined_call_operand.vmem [shape: f32[20,32], index: 0, kind: input, shape index: {}]
  %s1 = inlined_call_operand.vmem [shape: bf16[32,32], index: 1, kind: input, shape index: {}]
  %s2 = inlined_call_operand.vmem [shape: f32[1,32], index: 2, kind: input, shape index: {}]
  %s3 = inlined_call_operand.vmem [shape: f32[20,32], index: 3, kind: output, shape index: {}]
  %s4 = sld [smem:[#allocation0]]
  $region22: #{seq2seq_forward.9} parent=0
    _
  %s6 = ssub.s32 1, %s4
  %s7 = scalar_select 0, %s6, %s4
  // Predicated region
  $region2: #{seq2seq_forward.9} parent=0 // pred_check
    _
  $region3: #{seq2seq_forward.9} parent=0 // pred_check_branch
    %9 = sbr.rel (0) target = $region5
  $region4: #{seq2seq_forward.9} parent=0 // pred_region
    _
  $region5: #{seq2seq_forward.9} parent=0 // pred_fallthru
    _
  // Predicated region
  $region6: #{seq2seq_forward.9} parent=0 // pred_check
    _
  $region7: #{seq2seq_forward.9} parent=0 // pred_check_branch
    %11 = sbr.rel (0) target = $region9
  $region8: #{seq2seq_forward.9} parent=0 // pred_region
    _
  $region9: #{seq2seq_forward.9} parent=0 // pred_fallthru
    _
  // Predicated region
  $region10: #{seq2seq_forward.9} parent=0 // pred_check
    _
  $region11: #{seq2seq_forward.9} parent=0 // pred_check_branch
    %13 = sbr.rel (0) target = $region13
  $region12: #{seq2seq_forward.9} parent=0 // pred_region
    _
  $region13: #{seq2seq_forward.9} parent=0 // pred_fallthru
    _
  %v15 = vld [vmem:[%s0] sm:$0xff]
  %v16 = vld [vmem:[%s0 + $0x8] sm:$0xff]
  %v17 = vld [vmem:[%s0 + $0x10] sm:$0xf]
  %v18 = vpack.c.bf16 %v16, %v15
  %v19 = vpack.c.bf16 %v17, %v17
  %v20 = vld [vmem:[%s1] sm:$0xf]
  %v21 = vld [vmem:[%s1 + $0x4] sm:$0xf]
  %v22 = vld [vmem:[%s1 + $0x8] sm:$0xf]
  %v23 = vld [vmem:[%s1 + $0xc] sm:$0xf]
  %v24 = vld [vmem:[%s2] sm:$0x1]
  %v26 = vlaneseq
  %v27 = vshrl.u32 %v26, 7
  %v28 = vsub.s32 0, %v27
  %v29 = vrot.slane %v24, %v28
  %v35 = vunpack.c.l.b16 %v20
  %v36 = vunpack.c.l.b16 %v21
  %v37 = vunpack.c.l.b16 %v22
  %v38 = vunpack.c.l.b16 %v23
  %v39 = vpack.c.b16 %v36, %v35
  %v40 = vpack.c.b16 %v38, %v37
  %vm43 = vcmask 261120
  %v45 = vsel %vm43, %v18, 0
  %v48 = vsel %vm43, %v19, 0
  %50 = vmatprep.subr.bf16.mxu0 0
  %51 = vmatpush1.bf16.msra.mxu0 %v39
  %52 = vmatprep.subr.bf16.mxu0 0
  %53 = vmatpush1.bf16.msra.mxu0 %v40
  %54 = vmatprep.subr.bf16.mxu0 0
  %55 = vmatpush1.bf16.msra.mxu0 0
  %56 = vmatprep.subr.bf16.mxu0 0
  %57 = vmatpush1.bf16.msra.mxu0 0
  %58 = vmatprep.subr.bf16.mxu0 0
  %59 = vmatpush1.bf16.msra.mxu0 0
  %60 = vmatprep.subr.bf16.mxu0 0
  %61 = vmatpush1.bf16.msra.mxu0 0
  %62 = vmatprep.subr.bf16.mxu0 0
  %63 = vmatpush1.bf16.msra.mxu0 0
  %64 = vmatprep.subr.bf16.mxu0 0
  %65 = vmatpush1.bf16.msra.mxu0 0
  %66 = vmatprep.subr.bf16.mxu0 0
  %67 = vmatpush1.bf16.msra.mxu0 0
  %68 = vmatprep.subr.bf16.mxu0 0
  %69 = vmatpush1.bf16.msra.mxu0 0
  %70 = vmatprep.subr.bf16.mxu0 0
  %71 = vmatpush1.bf16.msra.mxu0 0
  %72 = vmatprep.subr.bf16.mxu0 0
  %73 = vmatpush1.bf16.msra.mxu0 0
  %74 = vmatprep.subr.bf16.mxu0 0
  %75 = vmatpush1.bf16.msra.mxu0 0
  %76 = vmatprep.subr.bf16.mxu0 0
  %77 = vmatpush1.bf16.msra.mxu0 0
  %78 = vmatprep.subr.bf16.mxu0 0
  %79 = vmatpush1.bf16.msra.mxu0 0
  %80 = vmatprep.subr.bf16.mxu0 0
  %81 = vmatpush1.bf16.msra.mxu0 0
  %82 = vmatprep.mubr.bf16.mxu0 0
  %83 = vmatmul.mubr.bf16.gmra.mrb[0].mxu0 %v45
  %v84 = vpop.f32.mrb[0].mxu0
  %v85 = vadd.f32 %v29, %v84
  %v86 = vpop.f32.mrb[0].mxu0
  %v87 = vpop.f32.mrb[0].mxu0
  %v88 = vadd.f32 %v29, %v87
  %v89 = vpop.f32.mrb[0].mxu0
  %90 = vmatprep.mubr.bf16.mxu0 0
  %91 = vmatmul.mubr.bf16.gmra.mrb[0].mxu0 %v48
  %v92 = vpop.f32.mrb[0].mxu0
  %v93 = vadd.f32 %v29, %v92
  %v94 = vpop.f32.mrb[0].mxu0
  %v95 = vpop.f32.mrb[0].mxu0
  %v96 = vpop.f32.mrb[0].mxu0
  %97 = vdwg.mxu0
  %98 = vst.msk [vmem:[%s3] sm:$0xff] %vm43, %v85
  %99 = vst.msk [vmem:[%s3 + $0x8] sm:$0xff] %vm43, %v88
  %vm100 = vcmask 257024
  %101 = vst.msk [vmem:[%s3 + $0x10] sm:$0xf] %vm100, %v93
  // Predicated region
  $region14: #{seq2seq_forward.9} parent=0 // pred_check
    _
  $region15: #{seq2seq_forward.9} parent=0 // pred_check_branch
    %103 = sbr.rel (0) target = $region17
  $region16: #{seq2seq_forward.9} parent=0 // pred_region
    _
  $region17: #{seq2seq_forward.9} parent=0 // pred_fallthru
    _
  // Predicated region
  $region18: #{seq2seq_forward.9} parent=0 // pred_check
    _
  $region19: #{seq2seq_forward.9} parent=0 // pred_check_branch
    %105 = sbr.rel (0) target = $region21
  $region20: #{seq2seq_forward.9} parent=0 // pred_region
    _
  $region21: #{seq2seq_forward.9} parent=0 // pred_fallthru
    _

// kernel: seq2seq_forward.10
$region0: #{seq2seq_forward.10}
  #allocation0 [shape = 'u32[]', space=smem, size = 0x4, offset = 0x4, fixed_abs, tag = 'smem constant byte address 0x4 - core index']
  #allocation1 [shape = 'u32[144,128]{1,0:T(1,128)}', space=vmem, size = 0x12000, scoped, tag = 'internal scratch']
  %s0 = inlined_call_operand.vmem [shape: f32[2,12,32], index: 0, kind: input, shape index: {}]
  %s1 = inlined_call_operand.vmem [shape: bf16[3,32,32], index: 1, kind: input, shape index: {}]
  %s2 = inlined_call_operand.vmem [shape: bf16[3,32,32], index: 2, kind: input, shape index: {}]
  %s3 = inlined_call_operand.vmem [shape: f32[1,32], index: 3, kind: input, shape index: {}]
  %s4 = inlined_call_operand.vmem [shape: f32[1,32], index: 4, kind: input, shape index: {}]
  %s5 = inlined_call_operand.vmem [shape: f32[2,10,32], index: 5, kind: output, shape index: {}]
  %s6 = sld [smem:[#allocation0]]
  $region53: #{seq2seq_forward.10} parent=0
    _
  %s8 = ssub.s32 1, %s6
  %s9 = scalar_select 0, %s8, %s6
  loop: start=0, step=1, limit=4
  $region2: #{seq2seq_forward.10} parent=0 // loop_pre_header
    _
  $region3: #{seq2seq_forward.10} parent=0 // loop_header
    %s11 = sphi 0, %s15
    %p12 = scmp.ge.s32.totalorder %s11, 4
    %s21 = sphi 0, %s23
    %s24 = sphi 0, %s21
    %s25 = sphi 0, %s24
    %s41 = sphi 0, %s25
    %s45 = sphi 0, %s45
    %s47 = sphi 0, %s45
    %s48 = sphi 0, %s47
    %s62 = sphi 0, %s48
    %s66 = sphi 0, %s66
    %s68 = sphi 0, %s66
    %s69 = sphi 0, %s68
    %s83 = sphi 0, %s69
    %s87 = sphi 0, %s87
    %s89 = sphi 0, %s87
    %s90 = sphi 0, %s89
    %s104 = sphi 0, %s90
    %s108 = sphi 0, %s108
    %s110 = sphi 0, %s108
    %s111 = sphi 0, %s110
    %s125 = sphi 0, %s111
    %s131 = sphi 0, %s133
    %s134 = sphi 0, %s131
    %s135 = sphi 0, %s134
    %s151 = sphi 0, %s135
  $region4: #{seq2seq_forward.10} parent=0 // loop_header_branch
    %14 = sbr.rel (%p12) target = $region8
  $region5: #{seq2seq_forward.10} parent=0 // loop_body
    %s16 = ssub.s32 %s11, 1
    %s17 = ssub.s32 %s11, 2
    %s18 = sadd.s32 %s11, 1
    %s19 = ssub.s32 %s11, %s18
    %p20 = scmp.eq.s32.totalorder %s19, 0
    %s22 = sadd.s32 %s21, 1
    %s23 = scalar_select %p20, %s21, %s22
    %p26 = pneg %p20
    %p27 = scmp.eq.s32.totalorder %s11, 1
    %p28 = por %p26, %p27
    %p29 = scmp.ne.s32.totalorder %s21, %s24
    %p30 = scmp.eq.s32.totalorder %s11, 0
    %p31 = por %p29, %p30
    %p32 = scmp.ne.s32.totalorder %s21, %s24
    %p33 = scmp.eq.s32.totalorder %s16, 1
    %p34 = por %p32, %p33
    %p35 = scmp.ne.s32.totalorder %s24, %s25
    %p36 = scmp.eq.s32.totalorder %s16, 0
    %p37 = por %p35, %p36
    %p38 = scmp.ne.s32.totalorder %s24, %s25
    %p39 = scmp.eq.s32.totalorder %s17, 1
    %p40 = por %p38, %p39
    %p42 = scmp.ne.s32.totalorder %s25, %s41
    %p43 = scmp.eq.s32.totalorder %s17, 0
    %p44 = por %p42, %p43
    %s46 = sadd.s32 %s45, 1
    %p49 = scmp.eq.s32.totalorder %s11, 1
    %p50 = scmp.ne.s32.totalorder %s45, %s47
    %p51 = scmp.eq.s32.totalorder %s11, 0
    %p52 = por %p50, %p51
    %p53 = scmp.ne.s32.totalorder %s45, %s47
    %p54 = scmp.eq.s32.totalorder %s16, 1
    %p55 = por %p53, %p54
    %p56 = scmp.ne.s32.totalorder %s47, %s48
    %p57 = scmp.eq.s32.totalorder %s16, 0
    %p58 = por %p56, %p57
    %p59 = scmp.ne.s32.totalorder %s47, %s48
    %p60 = scmp.eq.s32.totalorder %s17, 1
    %p61 = por %p59, %p60
    %p63 = scmp.ne.s32.totalorder %s48, %s62
    %p64 = scmp.eq.s32.totalorder %s17, 0
    %p65 = por %p63, %p64
    %s67 = sadd.s32 %s66, 1
    %p70 = scmp.eq.s32.totalorder %s11, 1
    %p71 = scmp.ne.s32.totalorder %s66, %s68
    %p72 = scmp.eq.s32.totalorder %s11, 0
    %p73 = por %p71, %p72
    %p74 = scmp.ne.s32.totalorder %s66, %s68
    %p75 = scmp.eq.s32.totalorder %s16, 1
    %p76 = por %p74, %p75
    %p77 = scmp.ne.s32.totalorder %s68, %s69
    %p78 = scmp.eq.s32.totalorder %s16, 0
    %p79 = por %p77, %p78
    %p80 = scmp.ne.s32.totalorder %s68, %s69
    %p81 = scmp.eq.s32.totalorder %s17, 1
    %p82 = por %p80, %p81
    %p84 = scmp.ne.s32.totalorder %s69, %s83
    %p85 = scmp.eq.s32.totalorder %s17, 0
    %p86 = por %p84, %p85
    %s88 = sadd.s32 %s87, 1
    %p91 = scmp.eq.s32.totalorder %s11, 1
    %p92 = scmp.ne.s32.totalorder %s87, %s89
    %p93 = scmp.eq.s32.totalorder %s11, 0
    %p94 = por %p92, %p93
    %p95 = scmp.ne.s32.totalorder %s87, %s89
    %p96 = scmp.eq.s32.totalorder %s16, 1
    %p97 = por %p95, %p96
    %p98 = scmp.ne.s32.totalorder %s89, %s90
    %p99 = scmp.eq.s32.totalorder %s16, 0
    %p100 = por %p98, %p99
    %p101 = scmp.ne.s32.totalorder %s89, %s90
    %p102 = scmp.eq.s32.totalorder %s17, 1
    %p103 = por %p101, %p102
    %p105 = scmp.ne.s32.totalorder %s90, %s104
    %p106 = scmp.eq.s32.totalorder %s17, 0
    %p107 = por %p105, %p106
    %s109 = sadd.s32 %s108, 1
    %p112 = scmp.eq.s32.totalorder %s11, 1
    %p113 = scmp.ne.s32.totalorder %s108, %s110
    %p114 = scmp.eq.s32.totalorder %s11, 0
    %p115 = por %p113, %p114
    %p116 = scmp.ne.s32.totalorder %s108, %s110
    %p117 = scmp.eq.s32.totalorder %s16, 1
    %p118 = por %p116, %p117
    %p119 = scmp.ne.s32.totalorder %s110, %s111
    %p120 = scmp.eq.s32.totalorder %s16, 0
    %p121 = por %p119, %p120
    %p122 = scmp.ne.s32.totalorder %s110, %s111
    %p123 = scmp.eq.s32.totalorder %s17, 1
    %p124 = por %p122, %p123
    %p126 = scmp.ne.s32.totalorder %s111, %s125
    %p127 = scmp.eq.s32.totalorder %s17, 0
    %p128 = por %p126, %p127
    %s129 = ssub.s32 %s11, %s18
    %p130 = scmp.eq.s32.totalorder %s129, 0
    %s132 = sadd.s32 %s131, 1
    %s133 = scalar_select %p130, %s131, %s132
    %p136 = pneg %p130
    %p137 = scmp.eq.s32.totalorder %s11, 1
    %p138 = por %p136, %p137
    %p139 = scmp.ne.s32.totalorder %s131, %s134
    %p140 = scmp.eq.s32.totalorder %s11, 0
    %p141 = por %p139, %p140
    %p142 = scmp.ne.s32.totalorder %s131, %s134
    %p143 = scmp.eq.s32.totalorder %s16, 1
    %p144 = por %p142, %p143
    %p145 = scmp.ne.s32.totalorder %s134, %s135
    %p146 = scmp.eq.s32.totalorder %s16, 0
    %p147 = por %p145, %p146
    %p148 = scmp.ne.s32.totalorder %s134, %s135
    %p149 = scmp.eq.s32.totalorder %s17, 1
    %p150 = por %p148, %p149
    %p152 = scmp.ne.s32.totalorder %s135, %s151
    %p153 = scmp.eq.s32.totalorder %s17, 0
    %p154 = por %p152, %p153
    %p155 = scmp.le.s32.totalorder 1, %s11
    %p156 = scmp.lt.s32.totalorder %s11, 3
    %p157 = pnand %p155, %p156
    %p158 = pneg %p157
    // Predicated region
    $region9: #{seq2seq_forward.10} parent=5 // pred_check
      _
    $region10: #{seq2seq_forward.10} parent=5 // pred_check_branch
      %160 = sbr.rel (%p157) target = $region12
    $region11: #{seq2seq_forward.10} parent=5 // pred_region
      %s161 = ssub.s32 %s11, 1
      // Predicated region
      $region13: #{seq2seq_forward.10} parent=11 // pred_check
        %p162 = pneg %p58
      $region14: #{seq2seq_forward.10} parent=11 // pred_check_branch
        %164 = sbr.rel (%p162) target = $region16
      $region15: #{seq2seq_forward.10} parent=11 // pred_region
        _
      $region16: #{seq2seq_forward.10} parent=11 // pred_fallthru
        _
      // Predicated region
      $region17: #{seq2seq_forward.10} parent=11 // pred_check
        %p165 = pneg %p79
      $region18: #{seq2seq_forward.10} parent=11 // pred_check_branch
        %167 = sbr.rel (%p165) target = $region20
      $region19: #{seq2seq_forward.10} parent=11 // pred_region
        _
      $region20: #{seq2seq_forward.10} parent=11 // pred_fallthru
        _
      // Predicated region
      $region21: #{seq2seq_forward.10} parent=11 // pred_check
        %p168 = pneg %p100
      $region22: #{seq2seq_forward.10} parent=11 // pred_check_branch
        %170 = sbr.rel (%p168) target = $region24
      $region23: #{seq2seq_forward.10} parent=11 // pred_region
        _
      $region24: #{seq2seq_forward.10} parent=11 // pred_fallthru
        _
      // Predicated region
      $region25: #{seq2seq_forward.10} parent=11 // pred_check
        %p171 = pneg %p121
      $region26: #{seq2seq_forward.10} parent=11 // pred_check_branch
        %173 = sbr.rel (%p171) target = $region28
      $region27: #{seq2seq_forward.10} parent=11 // pred_region
        _
      $region28: #{seq2seq_forward.10} parent=11 // pred_fallthru
        _
    $region12: #{seq2seq_forward.10} parent=5 // pred_fallthru
      _
    %p174 = scmp.lt.s32.totalorder %s11, 2
    // Predicated region
    $region29: #{seq2seq_forward.10} parent=5 // pred_check
      %p175 = pneg %p174
    $region30: #{seq2seq_forward.10} parent=5 // pred_check_branch
      %177 = sbr.rel (%p175) target = $region32
    $region31: #{seq2seq_forward.10} parent=5 // pred_region
      // Predicated region
      $region33: #{seq2seq_forward.10} parent=31 // pred_check
        %p178 = pneg %p31
      $region34: #{seq2seq_forward.10} parent=31 // pred_check_branch
        %180 = sbr.rel (%p178) target = $region36
      $region35: #{seq2seq_forward.10} parent=31 // pred_region
        %p181 = scmp.lt.s32.totalorder %s11, 1
        %s182 = scalar_select %p181, %s11, 1
        %s183 = smul.addr %s182, 2
        %s184 = smul.addr %s183, 8
        %s185 = scalar_lea.vmem %s0, %s184
      $region36: #{seq2seq_forward.10} parent=31 // pred_fallthru
        _
    $region32: #{seq2seq_forward.10} parent=5 // pred_fallthru
      _
    %p186 = scmp.le.s32.totalorder 1, %s11
    %p187 = scmp.lt.s32.totalorder %s11, 3
    %p188 = pnand %p186, %p187
    %p189 = pneg %p188
    // Predicated region
    $region37: #{seq2seq_forward.10} parent=5 // pred_check
      _
    $region38: #{seq2seq_forward.10} parent=5 // pred_check_branch
      %191 = sbr.rel (%p188) target = $region40
    $region39: #{seq2seq_forward.10} parent=5 // pred_region
      %s192 = ssub.s32 %s11, 1
      %p193 = scmp.lt.s32.totalorder %s16, 1
      %s194 = scalar_select %p193, %s16, 1
      %s195 = smul.addr %s194, 2
      %s196 = smul.addr %s195, 8
      %s197 = scalar_lea.vmem %s0, %s196
      %p198 = pneg %p37
      %p199 = pneg %p34
      %p200 = pneg %p58
      %p201 = pneg %p55
      %p202 = pneg %p79
      %p203 = pneg %p76
      %p204 = pneg %p100
      %p205 = pneg %p97
      %p206 = pneg %p121
      %p207 = pneg %p118
      %p208 = pneg %p147
      %p209 = pneg %p144
      %p210 = scmp.lt.s32.totalorder %s16, 1
      %s211 = scalar_select %p210, %s16, 1
      %s212 = smul.addr %s211, 2
      %s213 = smul.addr %s212, 8
      %s214 = scalar_lea.vmem %s5, %s213
      %p215 = scmp.lt.s32.totalorder %s16, 1
      %s216 = scalar_select %p215, %s16, 1
      %s217 = smul.addr %s216, 2
      %s218 = smul.addr %s217, 8
      %s219 = scalar_lea.vmem %s0, %s218
      %p220 = scmp.lt.s32.totalorder %s16, 1
      %s221 = scalar_select %p220, %s16, 1
      %s222 = smul.addr %s221, 2
      %s223 = smul.addr %s222, 8
      %s224 = scalar_lea.vmem %s5, %s223
      %v226 = vld [vmem:[%s219] sm:$0xff]
      %v227 = vld [vmem:[%s219 + $0x8] sm:$0xf]
      %v228 = vld [vmem:[%s3] sm:$0x1]
      %v229 = vld [vmem:[%s4] sm:$0x1]
      %v230 = vpack.c.bf16 %v227, %v226
      %v231 = vld [vmem:[%s1] sm:$0xf]
      %v232 = vld [vmem:[%s1 + $0x4] sm:$0xf]
      %v233 = vld [vmem:[%s1 + $0x8] sm:$0xf]
      %v234 = vld [vmem:[%s1 + $0xc] sm:$0xf]
      %v239 = vunpack.c.l.b16 %v231
      %v240 = vunpack.c.l.b16 %v232
      %v241 = vunpack.c.l.b16 %v233
      %v242 = vunpack.c.l.b16 %v234
      %v243 = vpack.c.b16 %v240, %v239
      %v244 = vpack.c.b16 %v242, %v241
      %vm247 = vcmask 261120
      %v249 = vsel %vm247, %v230, 0
      %251 = vmatprep.subr.bf16.mxu0 0
      %252 = vmatpush1.bf16.msra.mxu0 %v243
      %253 = vmatprep.subr.bf16.mxu0 0
      %254 = vmatpush1.bf16.msra.mxu0 %v244
      %255 = vmatprep.subr.bf16.mxu0 0
      %256 = vmatpush1.bf16.msra.mxu0 0
      %257 = vmatprep.subr.bf16.mxu0 0
      %258 = vmatpush1.bf16.msra.mxu0 0
      %259 = vmatprep.subr.bf16.mxu0 0
      %260 = vmatpush1.bf16.msra.mxu0 0
      %261 = vmatprep.subr.bf16.mxu0 0
      %262 = vmatpush1.bf16.msra.mxu0 0
      %263 = vmatprep.subr.bf16.mxu0 0
      %264 = vmatpush1.bf16.msra.mxu0 0
      %265 = vmatprep.subr.bf16.mxu0 0
      %266 = vmatpush1.bf16.msra.mxu0 0
      %267 = vmatprep.subr.bf16.mxu0 0
      %268 = vmatpush1.bf16.msra.mxu0 0
      %269 = vmatprep.subr.bf16.mxu0 0
      %270 = vmatpush1.bf16.msra.mxu0 0
      %271 = vmatprep.subr.bf16.mxu0 0
      %272 = vmatpush1.bf16.msra.mxu0 0
      %273 = vmatprep.subr.bf16.mxu0 0
      %274 = vmatpush1.bf16.msra.mxu0 0
      %275 = vmatprep.subr.bf16.mxu0 0
      %276 = vmatpush1.bf16.msra.mxu0 0
      %277 = vmatprep.subr.bf16.mxu0 0
      %278 = vmatpush1.bf16.msra.mxu0 0
      %279 = vmatprep.subr.bf16.mxu0 0
      %280 = vmatpush1.bf16.msra.mxu0 0
      %281 = vmatprep.subr.bf16.mxu0 0
      %282 = vmatpush1.bf16.msra.mxu0 0
      %283 = vmatprep.mubr.bf16.mxu0 0
      %284 = vmatmul.mubr.bf16.gmra.mrb[0].mxu0 %v249
      %v285 = vpop.f32.mrb[0].mxu0
      %v286 = vadd.f32 0.0, %v285
      %v287 = vpop.f32.mrb[0].mxu0
      %v288 = vpop.f32.mrb[0].mxu0
      %v289 = vadd.f32 0.0, %v288
      %v290 = vpop.f32.mrb[0].mxu0
      %291 = vdwg.mxu0
      %v293 = vlaneseq
      %v294 = vshrl.u32 %v293, 7
      %v295 = vsub.s32 0, %v294
      %v296 = vrot.slane %v228, %v295
      %v298 = vadd.f32 %v296, %v286
      %v299 = vadd.f32 %v296, %v289
      %v300 = vld [vmem:[%s2] sm:$0xf]
      %v301 = vld [vmem:[%s2 + $0x4] sm:$0xf]
      %v302 = vld [vmem:[%s2 + $0x8] sm:$0xf]
      %v303 = vld [vmem:[%s2 + $0xc] sm:$0xf]
      %v308 = vunpack.c.l.b16 %v300
      %v309 = vunpack.c.l.b16 %v301
      %v310 = vunpack.c.l.b16 %v302
      %v311 = vunpack.c.l.b16 %v303
      %v312 = vpack.c.b16 %v309, %v308
      %v313 = vpack.c.b16 %v311, %v310
      %316 = vmatprep.subr.bf16.mxu0 0
      %317 = vmatpush1.bf16.msra.mxu0 %v312
      %318 = vmatprep.subr.bf16.mxu0 0
      %319 = vmatpush1.bf16.msra.mxu0 %v313
      %320 = vmatprep.subr.bf16.mxu0 0
      %321 = vmatpush1.bf16.msra.mxu0 0
      %322 = vmatprep.subr.bf16.mxu0 0
      %323 = vmatpush1.bf16.msra.mxu0 0
      %324 = vmatprep.subr.bf16.mxu0 0
      %325 = vmatpush1.bf16.msra.mxu0 0
      %326 = vmatprep.subr.bf16.mxu0 0
      %327 = vmatpush1.bf16.msra.mxu0 0
      %328 = vmatprep.subr.bf16.mxu0 0
      %329 = vmatpush1.bf16.msra.mxu0 0
      %330 = vmatprep.subr.bf16.mxu0 0
      %331 = vmatpush1.bf16.msra.mxu0 0
      %332 = vmatprep.subr.bf16.mxu0 0
      %333 = vmatpush1.bf16.msra.mxu0 0
      %334 = vmatprep.subr.bf16.mxu0 0
      %335 = vmatpush1.bf16.msra.mxu0 0
      %336 = vmatprep.subr.bf16.mxu0 0
      %337 = vmatpush1.bf16.msra.mxu0 0
      %338 = vmatprep.subr.bf16.mxu0 0
      %339 = vmatpush1.bf16.msra.mxu0 0
      %340 = vmatprep.subr.bf16.mxu0 0
      %341 = vmatpush1.bf16.msra.mxu0 0
      %342 = vmatprep.subr.bf16.mxu0 0
      %343 = vmatpush1.bf16.msra.mxu0 0
      %344 = vmatprep.subr.bf16.mxu0 0
      %345 = vmatpush1.bf16.msra.mxu0 0
      %346 = vmatprep.subr.bf16.mxu0 0
      %347 = vmatpush1.bf16.msra.mxu0 0
      %348 = vmatprep.mubr.bf16.mxu0 0
      %349 = vmatmul.mubr.bf16.gmra.mrb[0].mxu0 %v249
      %v350 = vpop.f32.mrb[0].mxu0
      %v351 = vadd.f32 0.0, %v350
      %v352 = vpop.f32.mrb[0].mxu0
      %v353 = vpop.f32.mrb[0].mxu0
      %v354 = vadd.f32 0.0, %v353
      %v355 = vpop.f32.mrb[0].mxu0
      %356 = vdwg.mxu0
      %v358 = vlaneseq
      %v359 = vshrl.u32 %v358, 7
      %v360 = vsub.s32 0, %v359
      %v361 = vrot.slane %v229, %v360
      %v363 = vadd.f32 %v361, %v351
      %v364 = vadd.f32 %v361, %v354
      %s365 = scalar_lea.vmem %s1, 16
      %v366 = vld [vmem:[%s365] sm:$0xf]
      %v367 = vld [vmem:[%s365 + $0x4] sm:$0xf]
      %v368 = vld [vmem:[%s365 + $0x8] sm:$0xf]
      %v369 = vld [vmem:[%s365 + $0xc] sm:$0xf]
      %v370 = vshrl.u32 %v230, 16
      %v372 = vshll.u32 %v230, 16
      %v374 = vrot.slane %v372, 1
      %v375 = vor.u32 %v370, %v374
      %v380 = vunpack.c.l.b16 %v366
      %v381 = vunpack.c.l.b16 %v367
      %v382 = vunpack.c.l.b16 %v368
      %v383 = vunpack.c.l.b16 %v369
      %v384 = vpack.c.b16 %v381, %v380
      %v385 = vpack.c.b16 %v383, %v382
      %v389 = vsel %vm247, %v375, 0
      %391 = vmatprep.subr.bf16.mxu0 0
      %392 = vmatpush1.bf16.msra.mxu0 %v384
      %393 = vmatprep.subr.bf16.mxu0 0
      %394 = vmatpush1.bf16.msra.mxu0 %v385
      %395 = vmatprep.subr.bf16.mxu0 0
      %396 = vmatpush1.bf16.msra.mxu0 0
      %397 = vmatprep.subr.bf16.mxu0 0
      %398 = vmatpush1.bf16.msra.mxu0 0
      %399 = vmatprep.subr.bf16.mxu0 0
      %400 = vmatpush1.bf16.msra.mxu0 0
      %401 = vmatprep.subr.bf16.mxu0 0
      %402 = vmatpush1.bf16.msra.mxu0 0
      %403 = vmatprep.subr.bf16.mxu0 0
      %404 = vmatpush1.bf16.msra.mxu0 0
      %405 = vmatprep.subr.bf16.mxu0 0
      %406 = vmatpush1.bf16.msra.mxu0 0
      %407 = vmatprep.subr.bf16.mxu0 0
      %408 = vmatpush1.bf16.msra.mxu0 0
      %409 = vmatprep.subr.bf16.mxu0 0
      %410 = vmatpush1.bf16.msra.mxu0 0
      %411 = vmatprep.subr.bf16.mxu0 0
      %412 = vmatpush1.bf16.msra.mxu0 0
      %413 = vmatprep.subr.bf16.mxu0 0
      %414 = vmatpush1.bf16.msra.mxu0 0
      %415 = vmatprep.subr.bf16.mxu0 0
      %416 = vmatpush1.bf16.msra.mxu0 0
      %417 = vmatprep.subr.bf16.mxu0 0
      %418 = vmatpush1.bf16.msra.mxu0 0
      %419 = vmatprep.subr.bf16.mxu0 0
      %420 = vmatpush1.bf16.msra.mxu0 0
      %421 = vmatprep.subr.bf16.mxu0 0
      %422 = vmatpush1.bf16.msra.mxu0 0
      %423 = vmatprep.mubr.bf16.mxu0 0
      %424 = vmatmul.mubr.bf16.gmra.mrb[0].mxu0 %v389
      %v425 = vpop.f32.mrb[0].mxu0
      %v426 = vadd.f32 0.0, %v425
      %v427 = vpop.f32.mrb[0].mxu0
      %v428 = vpop.f32.mrb[0].mxu0
      %v429 = vadd.f32 0.0, %v428
      %v430 = vpop.f32.mrb[0].mxu0
      %431 = vdwg.mxu0
      %v432 = vadd.f32 %v298, %v426
      %v433 = vadd.f32 %v299, %v429
      %s434 = scalar_lea.vmem %s2, 16
      %v435 = vld [vmem:[%s434] sm:$0xf]
      %v436 = vld [vmem:[%s434 + $0x4] sm:$0xf]
      %v437 = vld [vmem:[%s434 + $0x8] sm:$0xf]
      %v438 = vld [vmem:[%s434 + $0xc] sm:$0xf]
      %v443 = vunpack.c.l.b16 %v435
      %v444 = vunpack.c.l.b16 %v436
      %v445 = vunpack.c.l.b16 %v437
      %v446 = vunpack.c.l.b16 %v438
      %v447 = vpack.c.b16 %v444, %v443
      %v448 = vpack.c.b16 %v446, %v445
      %451 = vmatprep.subr.bf16.mxu0 0
      %452 = vmatpush1.bf16.msra.mxu0 %v447
      %453 = vmatprep.subr.bf16.mxu0 0
      %454 = vmatpush1.bf16.msra.mxu0 %v448
      %455 = vmatprep.subr.bf16.mxu0 0
      %456 = vmatpush1.bf16.msra.mxu0 0
      %457 = vmatprep.subr.bf16.mxu0 0
      %458 = vmatpush1.bf16.msra.mxu0 0
      %459 = vmatprep.subr.bf16.mxu0 0
      %460 = vmatpush1.bf16.msra.mxu0 0
      %461 = vmatprep.subr.bf16.mxu0 0
      %462 = vmatpush1.bf16.msra.mxu0 0
      %463 = vmatprep.subr.bf16.mxu0 0
      %464 = vmatpush1.bf16.msra.mxu0 0
      %465 = vmatprep.subr.bf16.mxu0 0
      %466 = vmatpush1.bf16.msra.mxu0 0
      %467 = vmatprep.subr.bf16.mxu0 0
      %468 = vmatpush1.bf16.msra.mxu0 0
      %469 = vmatprep.subr.bf16.mxu0 0
      %470 = vmatpush1.bf16.msra.mxu0 0
      %471 = vmatprep.subr.bf16.mxu0 0
      %472 = vmatpush1.bf16.msra.mxu0 0
      %473 = vmatprep.subr.bf16.mxu0 0
      %474 = vmatpush1.bf16.msra.mxu0 0
      %475 = vmatprep.subr.bf16.mxu0 0
      %476 = vmatpush1.bf16.msra.mxu0 0
      %477 = vmatprep.subr.bf16.mxu0 0
      %478 = vmatpush1.bf16.msra.mxu0 0
      %479 = vmatprep.subr.bf16.mxu0 0
      %480 = vmatpush1.bf16.msra.mxu0 0
      %481 = vmatprep.subr.bf16.mxu0 0
      %482 = vmatpush1.bf16.msra.mxu0 0
      %483 = vmatprep.mubr.bf16.mxu0 0
      %484 = vmatmul.mubr.bf16.gmra.mrb[0].mxu0 %v389
      %v485 = vpop.f32.mrb[0].mxu0
      %v486 = vadd.f32 0.0, %v485
      %v487 = vpop.f32.mrb[0].mxu0
      %v488 = vpop.f32.mrb[0].mxu0
      %v489 = vadd.f32 0.0, %v488
      %v490 = vpop.f32.mrb[0].mxu0
      %491 = vdwg.mxu0
      %v492 = vadd.f32 %v363, %v486
      %v493 = vadd.f32 %v364, %v489
      %s494 = scalar_lea.vmem %s1, 32
      %v495 = vld [vmem:[%s494] sm:$0xf]
      %v496 = vld [vmem:[%s494 + $0x4] sm:$0xf]
      %v497 = vld [vmem:[%s494 + $0x8] sm:$0xf]
      %v498 = vld [vmem:[%s494 + $0xc] sm:$0xf]
      %v500 = vrot.slane %v230, 1
      %v505 = vunpack.c.l.b16 %v495
      %v506 = vunpack.c.l.b16 %v496
      %v507 = vunpack.c.l.b16 %v497
      %v508 = vunpack.c.l.b16 %v498
      %v509 = vpack.c.b16 %v506, %v505
      %v510 = vpack.c.b16 %v508, %v507
      %v514 = vsel %vm247, %v500, 0
      %516 = vmatprep.subr.bf16.mxu0 0
      %517 = vmatpush1.bf16.msra.mxu0 %v509
      %518 = vmatprep.subr.bf16.mxu0 0
      %519 = vmatpush1.bf16.msra.mxu0 %v510
      %520 = vmatprep.subr.bf16.mxu0 0
      %521 = vmatpush1.bf16.msra.mxu0 0
      %522 = vmatprep.subr.bf16.mxu0 0
      %523 = vmatpush1.bf16.msra.mxu0 0
      %524 = vmatprep.subr.bf16.mxu0 0
      %525 = vmatpush1.bf16.msra.mxu0 0
      %526 = vmatprep.subr.bf16.mxu0 0
      %527 = vmatpush1.bf16.msra.mxu0 0
      %528 = vmatprep.subr.bf16.mxu0 0
      %529 = vmatpush1.bf16.msra.mxu0 0
      %530 = vmatprep.subr.bf16.mxu0 0
      %531 = vmatpush1.bf16.msra.mxu0 0
      %532 = vmatprep.subr.bf16.mxu0 0
      %533 = vmatpush1.bf16.msra.mxu0 0
      %534 = vmatprep.subr.bf16.mxu0 0
      %535 = vmatpush1.bf16.msra.mxu0 0
      %536 = vmatprep.subr.bf16.mxu0 0
      %537 = vmatpush1.bf16.msra.mxu0 0
      %538 = vmatprep.subr.bf16.mxu0 0
      %539 = vmatpush1.bf16.msra.mxu0 0
      %540 = vmatprep.subr.bf16.mxu0 0
      %541 = vmatpush1.bf16.msra.mxu0 0
      %542 = vmatprep.subr.bf16.mxu0 0
      %543 = vmatpush1.bf16.msra.mxu0 0
      %544 = vmatprep.subr.bf16.mxu0 0
      %545 = vmatpush1.bf16.msra.mxu0 0
      %546 = vmatprep.subr.bf16.mxu0 0
      %547 = vmatpush1.bf16.msra.mxu0 0
      %548 = vmatprep.mubr.bf16.mxu0 0
      %549 = vmatmul.mubr.bf16.gmra.mrb[0].mxu0 %v514
      %v550 = vpop.f32.mrb[0].mxu0
      %v551 = vadd.f32 0.0, %v550
      %v552 = vpop.f32.mrb[0].mxu0
      %v553 = vpop.f32.mrb[0].mxu0
      %v554 = vadd.f32 0.0, %v553
      %v555 = vpop.f32.mrb[0].mxu0
      %556 = vdwg.mxu0
      %v557 = vadd.f32 %v432, %v551
      %v558 = vadd.f32 %v433, %v554
      %s559 = scalar_lea.vmem %s2, 32
      %v560 = vld [vmem:[%s559] sm:$0xf]
      %v561 = vld [vmem:[%s559 + $0x4] sm:$0xf]
      %v562 = vld [vmem:[%s559 + $0x8] sm:$0xf]
      %v563 = vld [vmem:[%s559 + $0xc] sm:$0xf]
      %v568 = vunpack.c.l.b16 %v560
      %v569 = vunpack.c.l.b16 %v561
      %v570 = vunpack.c.l.b16 %v562
      %v571 = vunpack.c.l.b16 %v563
      %v572 = vpack.c.b16 %v569, %v568
      %v573 = vpack.c.b16 %v571, %v570
      %576 = vmatprep.subr.bf16.mxu0 0
      %577 = vmatpush1.bf16.msra.mxu0 %v572
      %578 = vmatprep.subr.bf16.mxu0 0
      %579 = vmatpush1.bf16.msra.mxu0 %v573
      %580 = vmatprep.subr.bf16.mxu0 0
      %581 = vmatpush1.bf16.msra.mxu0 0
      %582 = vmatprep.subr.bf16.mxu0 0
      %583 = vmatpush1.bf16.msra.mxu0 0
      %584 = vmatprep.subr.bf16.mxu0 0
      %585 = vmatpush1.bf16.msra.mxu0 0
      %586 = vmatprep.subr.bf16.mxu0 0
      %587 = vmatpush1.bf16.msra.mxu0 0
      %588 = vmatprep.subr.bf16.mxu0 0
      %589 = vmatpush1.bf16.msra.mxu0 0
      %590 = vmatprep.subr.bf16.mxu0 0
      %591 = vmatpush1.bf16.msra.mxu0 0
      %592 = vmatprep.subr.bf16.mxu0 0
      %593 = vmatpush1.bf16.msra.mxu0 0
      %594 = vmatprep.subr.bf16.mxu0 0
      %595 = vmatpush1.bf16.msra.mxu0 0
      %596 = vmatprep.subr.bf16.mxu0 0
      %597 = vmatpush1.bf16.msra.mxu0 0
      %598 = vmatprep.subr.bf16.mxu0 0
      %599 = vmatpush1.bf16.msra.mxu0 0
      %600 = vmatprep.subr.bf16.mxu0 0
      %601 = vmatpush1.bf16.msra.mxu0 0
      %602 = vmatprep.subr.bf16.mxu0 0
      %603 = vmatpush1.bf16.msra.mxu0 0
      %604 = vmatprep.subr.bf16.mxu0 0
      %605 = vmatpush1.bf16.msra.mxu0 0
      %606 = vmatprep.subr.bf16.mxu0 0
      %607 = vmatpush1.bf16.msra.mxu0 0
      %608 = vmatprep.mubr.bf16.mxu0 0
      %609 = vmatmul.mubr.bf16.gmra.mrb[0].mxu0 %v514
      %v610 = vpop.f32.mrb[0].mxu0
      %v611 = vadd.f32 0.0, %v610
      %v612 = vpop.f32.mrb[0].mxu0
      %v613 = vpop.f32.mrb[0].mxu0
      %v614 = vadd.f32 0.0, %v613
      %v615 = vpop.f32.mrb[0].mxu0
      %616 = vdwg.mxu0
      %v617 = vadd.f32 %v492, %v611
      %v618 = vadd.f32 %v493, %v614
      %v619 = vxor.u32 %v617, 2147483648
      %v620 = vxor.u32 %v618, 2147483648
      %v621 = vmul.f32 %v619, 1.442695
      %v622 = vpow.pop %v621
      %v623 = vmul.f32 %v620, 1.442695
      %v624 = vpow.pop %v623
      %v625 = vadd.f32 %v622, 1.0
      %v626 = vadd.f32 %v624, 1.0
      %v627 = vrcp.pop %v625
      %v628 = vmul.f32 1.0, %v627
      %v629 = vrcp.pop %v626
      %v630 = vmul.f32 1.0, %v629
      %v631 = vmul.f32 %v557, %v628
      %v632 = vmul.f32 %v558, %v630
      %vm635 = vcmask 1046528
      %v636 = vrot.slane %v226, 1
      %v637 = vrot.slane %v227, 1
      %v638 = vsel %vm635, %v636, %v637
      %v641 = vadd.f32 %v631, %v638
      %v642 = vadd.f32 %v632, %v637
      %v643 = vmul.f32 %v641, 0.70710677
      %v644 = vmul.f32 %v642, 0.70710677
      %645 = vst.msk [vmem:[%s224] sm:$0xff] %vm247, %v643
      %vm646 = vcmask 254976
      %647 = vst.msk [vmem:[%s224 + $0x8] sm:$0x3] %vm646, %v644
      %p648 = scmp.lt.s32.totalorder %s16, 1
      %s649 = scalar_select %p648, %s16, 1
      %s650 = smul.addr %s649, 2
      %s651 = smul.addr %s650, 8
      %s652 = scalar_lea.vmem %s5, %s651
      // Predicated region
      $region41: #{seq2seq_forward.10} parent=39 // pred_check
        %p653 = pneg %p144
      $region42: #{seq2seq_forward.10} parent=39 // pred_check_branch
        %655 = sbr.rel (%p653) target = $region44
      $region43: #{seq2seq_forward.10} parent=39 // pred_region
        _
      $region44: #{seq2seq_forward.10} parent=39 // pred_fallthru
        _
    $region40: #{seq2seq_forward.10} parent=5 // pred_fallthru
      _
    %p656 = scmp.le.s32.totalorder 2, %s11
    // Predicated region
    $region45: #{seq2seq_forward.10} parent=5 // pred_check
      %p657 = pneg %p656
    $region46: #{seq2seq_forward.10} parent=5 // pred_check_branch
      %659 = sbr.rel (%p657) target = $region48
    $region47: #{seq2seq_forward.10} parent=5 // pred_region
      %s660 = ssub.s32 %s11, 2
      // Predicated region
      $region49: #{seq2seq_forward.10} parent=47 // pred_check
        %p661 = pneg %p150
      $region50: #{seq2seq_forward.10} parent=47 // pred_check_branch
        %663 = sbr.rel (%p661) target = $region52
      $region51: #{seq2seq_forward.10} parent=47 // pred_region
        %p664 = scmp.lt.s32.totalorder %s17, 1
        %s665 = scalar_select %p664, %s17, 1
        %s666 = smul.addr %s665, 2
        %s667 = smul.addr %s666, 8
        %s668 = scalar_lea.vmem %s5, %s667
      $region52: #{seq2seq_forward.10} parent=47 // pred_fallthru
        _
    $region48: #{seq2seq_forward.10} parent=5 // pred_fallthru
      _
  $region6: #{seq2seq_forward.10} parent=0 // loop_footer
    %s15 = sadd.s32 1, %s11
  $region7: #{seq2seq_forward.10} parent=0 // loop_footer_branch
    %10 = sbr.rel target = $region3
  $region8: #{seq2seq_forward.10} parent=0 // loop_exit
    _

// kernel: seq2seq_forward.14
$region0: #{seq2seq_forward.14}
  #allocation0 [shape = 'u32[]', space=smem, size = 0x4, offset = 0x4, fixed_abs, tag = 'smem constant byte address 0x4 - core index']
  #allocation1 [shape = 'u32[144,128]{1,0:T(1,128)}', space=vmem, size = 0x12000, scoped, tag = 'internal scratch']
  %s0 = inlined_call_operand.vmem [shape: f32[16,32], index: 0, kind: input, shape index: {}]
  %s1 = inlined_call_operand.vmem [shape: bf16[32,32], index: 1, kind: input, shape index: {}]
  %s2 = inlined_call_operand.vmem [shape: f32[1,32], index: 2, kind: input, shape index: {}]
  %s3 = inlined_call_operand.vmem [shape: f32[16,32], index: 3, kind: output, shape index: {}]
  %s4 = sld [smem:[#allocation0]]
  $region22: #{seq2seq_forward.14} parent=0
    _
  %s6 = ssub.s32 1, %s4
  %s7 = scalar_select 0, %s6, %s4
  // Predicated region
  $region2: #{seq2seq_forward.14} parent=0 // pred_check
    _
  $region3: #{seq2seq_forward.14} parent=0 // pred_check_branch
    %9 = sbr.rel (0) target = $region5
  $region4: #{seq2seq_forward.14} parent=0 // pred_region
    _
  $region5: #{seq2seq_forward.14} parent=0 // pred_fallthru
    _
  // Predicated region
  $region6: #{seq2seq_forward.14} parent=0 // pred_check
    _
  $region7: #{seq2seq_forward.14} parent=0 // pred_check_branch
    %11 = sbr.rel (0) target = $region9
  $region8: #{seq2seq_forward.14} parent=0 // pred_region
    _
  $region9: #{seq2seq_forward.14} parent=0 // pred_fallthru
    _
  // Predicated region
  $region10: #{seq2seq_forward.14} parent=0 // pred_check
    _
  $region11: #{seq2seq_forward.14} parent=0 // pred_check_branch
    %13 = sbr.rel (0) target = $region13
  $region12: #{seq2seq_forward.14} parent=0 // pred_region
    _
  $region13: #{seq2seq_forward.14} parent=0 // pred_fallthru
    _
  %v15 = vld [vmem:[%s0] sm:$0xff]
  %v16 = vld [vmem:[%s0 + $0x8] sm:$0xff]
  %v17 = vpack.c.bf16 %v16, %v15
  %v18 = vld [vmem:[%s1] sm:$0xf]
  %v19 = vld [vmem:[%s1 + $0x4] sm:$0xf]
  %v20 = vld [vmem:[%s1 + $0x8] sm:$0xf]
  %v21 = vld [vmem:[%s1 + $0xc] sm:$0xf]
  %v22 = vld [vmem:[%s2] sm:$0x1]
  %v24 = vlaneseq
  %v25 = vshrl.u32 %v24, 7
  %v26 = vsub.s32 0, %v25
  %v27 = vrot.slane %v22, %v26
  %v33 = vunpack.c.l.b16 %v18
  %v34 = vunpack.c.l.b16 %v19
  %v35 = vunpack.c.l.b16 %v20
  %v36 = vunpack.c.l.b16 %v21
  %v37 = vpack.c.b16 %v34, %v33
  %v38 = vpack.c.b16 %v36, %v35
  %vm41 = vcmask 261120
  %v43 = vsel %vm41, %v17, 0
  %45 = vmatprep.subr.bf16.mxu0 0
  %46 = vmatpush1.bf16.msra.mxu0 %v37
  %47 = vmatprep.subr.bf16.mxu0 0
  %48 = vmatpush1.bf16.msra.mxu0 %v38
  %49 = vmatprep.subr.bf16.mxu0 0
  %50 = vmatpush1.bf16.msra.mxu0 0
  %51 = vmatprep.subr.bf16.mxu0 0
  %52 = vmatpush1.bf16.msra.mxu0 0
  %53 = vmatprep.subr.bf16.mxu0 0
  %54 = vmatpush1.bf16.msra.mxu0 0
  %55 = vmatprep.subr.bf16.mxu0 0
  %56 = vmatpush1.bf16.msra.mxu0 0
  %57 = vmatprep.subr.bf16.mxu0 0
  %58 = vmatpush1.bf16.msra.mxu0 0
  %59 = vmatprep.subr.bf16.mxu0 0
  %60 = vmatpush1.bf16.msra.mxu0 0
  %61 = vmatprep.subr.bf16.mxu0 0
  %62 = vmatpush1.bf16.msra.mxu0 0
  %63 = vmatprep.subr.bf16.mxu0 0
  %64 = vmatpush1.bf16.msra.mxu0 0
  %65 = vmatprep.subr.bf16.mxu0 0
  %66 = vmatpush1.bf16.msra.mxu0 0
  %67 = vmatprep.subr.bf16.mxu0 0
  %68 = vmatpush1.bf16.msra.mxu0 0
  %69 = vmatprep.subr.bf16.mxu0 0
  %70 = vmatpush1.bf16.msra.mxu0 0
  %71 = vmatprep.subr.bf16.mxu0 0
  %72 = vmatpush1.bf16.msra.mxu0 0
  %73 = vmatprep.subr.bf16.mxu0 0
  %74 = vmatpush1.bf16.msra.mxu0 0
  %75 = vmatprep.subr.bf16.mxu0 0
  %76 = vmatpush1.bf16.msra.mxu0 0
  %77 = vmatprep.mubr.bf16.mxu0 0
  %78 = vmatmul.mubr.bf16.gmra.mrb[0].mxu0 %v43
  %v79 = vpop.f32.mrb[0].mxu0
  %v80 = vadd.f32 %v27, %v79
  %v81 = vpop.f32.mrb[0].mxu0
  %v82 = vpop.f32.mrb[0].mxu0
  %v83 = vadd.f32 %v27, %v82
  %v84 = vpop.f32.mrb[0].mxu0
  %85 = vdwg.mxu0
  %86 = vst.msk [vmem:[%s3] sm:$0xff] %vm41, %v80
  %87 = vst.msk [vmem:[%s3 + $0x8] sm:$0xff] %vm41, %v83
  // Predicated region
  $region14: #{seq2seq_forward.14} parent=0 // pred_check
    _
  $region15: #{seq2seq_forward.14} parent=0 // pred_check_branch
    %89 = sbr.rel (0) target = $region17
  $region16: #{seq2seq_forward.14} parent=0 // pred_region
    _
  $region17: #{seq2seq_forward.14} parent=0 // pred_fallthru
    _
  // Predicated region
  $region18: #{seq2seq_forward.14} parent=0 // pred_check
    _
  $region19: #{seq2seq_forward.14} parent=0 // pred_check_branch
    %91 = sbr.rel (0) target = $region21
  $region20: #{seq2seq_forward.14} parent=0 // pred_region
    _
  $region21: #{seq2seq_forward.14} parent=0 // pred_fallthru
    _

// kernel: seq2seq_forward.13
$region0: #{seq2seq_forward.13}
  #allocation0 [shape = 'u32[]', space=smem, size = 0x4, offset = 0x4, fixed_abs, tag = 'smem constant byte address 0x4 - core index']
  #allocation1 [shape = 'u32[144,128]{1,0:T(1,128)}', space=vmem, size = 0x12000, scoped, tag = 'internal scratch']
  %s0 = inlined_call_operand.vmem [shape: f32[2,32], index: 0, kind: input, shape index: {}]
  %s1 = inlined_call_operand.vmem [shape: bf16[32,5], index: 1, kind: input, shape index: {}]
  %s2 = inlined_call_operand.vmem [shape: f32[1,5], index: 2, kind: input, shape index: {}]
  %s3 = inlined_call_operand.hbm [shape: f32[2,5], index: 3, kind: output, shape index: {}]
  %s4 = sld [smem:[#allocation0]]
  $region22: #{seq2seq_forward.13} parent=0
    _
  %s6 = ssub.s32 1, %s4
  %s7 = scalar_select 0, %s6, %s4
  $region1: #{seq2seq_forward.13} parent=0
    #allocation2 [shape = 'u8[1024]{0}', space=vmem, size = 0x400, scoped, tag = 'output window, operand 0, single buffered']
    #allocation3 [shape = 's32[1]{0}', space=sflag, size = 0x4, scoped, tag = 'scoped memory for seq2seq_forward.13']
    %8 = vsyncpa [#allocation3], 0
    // Predicated region
    $region2: #{seq2seq_forward.13} parent=1 // pred_check
      _
    $region3: #{seq2seq_forward.13} parent=1 // pred_check_branch
      %10 = sbr.rel (0) target = $region5
    $region4: #{seq2seq_forward.13} parent=1 // pred_region
      _
    $region5: #{seq2seq_forward.13} parent=1 // pred_fallthru
      _
    // Predicated region
    $region6: #{seq2seq_forward.13} parent=1 // pred_check
      _
    $region7: #{seq2seq_forward.13} parent=1 // pred_check_branch
      %12 = sbr.rel (0) target = $region9
    $region8: #{seq2seq_forward.13} parent=1 // pred_region
      _
    $region9: #{seq2seq_forward.13} parent=1 // pred_fallthru
      _
    // Predicated region
    $region10: #{seq2seq_forward.13} parent=1 // pred_check
      _
    $region11: #{seq2seq_forward.13} parent=1 // pred_check_branch
      %14 = sbr.rel (0) target = $region13
    $region12: #{seq2seq_forward.13} parent=1 // pred_region
      _
    $region13: #{seq2seq_forward.13} parent=1 // pred_fallthru
      _
    %v16 = vld [vmem:[%s0] sm:$0x3]
    %v17 = vpack.c.bf16 %v16, %v16
    %v18 = vld [vmem:[%s1] sm:$0xf]
    %v19 = vld [vmem:[%s1 + $0x4] sm:$0xf]
    %v20 = vld [vmem:[%s1 + $0x8] sm:$0xf]
    %v21 = vld [vmem:[%s1 + $0xc] sm:$0xf]
    %v22 = vld [vmem:[%s2] sm:$0x1]
    %v24 = vlaneseq
    %v25 = vshrl.u32 %v24, 7
    %v26 = vsub.s32 0, %v25
    %v27 = vrot.slane %v22, %v26
    %v33 = vunpack.c.l.b16 %v18
    %v34 = vunpack.c.l.b16 %v19
    %v35 = vunpack.c.l.b16 %v20
    %v36 = vunpack.c.l.b16 %v21
    %v37 = vpack.c.b16 %v34, %v33
    %v38 = vpack.c.b16 %v36, %v35
    %vm41 = vcmask 261120
    %v43 = vsel %vm41, %v17, 0
    %45 = vmatprep.subr.bf16.mxu0 0
    %46 = vmatpush1.bf16.msra.mxu0 %v37
    %47 = vmatprep.subr.bf16.mxu0 0
    %48 = vmatpush1.bf16.msra.mxu0 %v38
    %49 = vmatprep.subr.bf16.mxu0 0
    %50 = vmatpush1.bf16.msra.mxu0 0
    %51 = vmatprep.subr.bf16.mxu0 0
    %52 = vmatpush1.bf16.msra.mxu0 0
    %53 = vmatprep.subr.bf16.mxu0 0
    %54 = vmatpush1.bf16.msra.mxu0 0
    %55 = vmatprep.subr.bf16.mxu0 0
    %56 = vmatpush1.bf16.msra.mxu0 0
    %57 = vmatprep.subr.bf16.mxu0 0
    %58 = vmatpush1.bf16.msra.mxu0 0
    %59 = vmatprep.subr.bf16.mxu0 0
    %60 = vmatpush1.bf16.msra.mxu0 0
    %61 = vmatprep.subr.bf16.mxu0 0
    %62 = vmatpush1.bf16.msra.mxu0 0
    %63 = vmatprep.subr.bf16.mxu0 0
    %64 = vmatpush1.bf16.msra.mxu0 0
    %65 = vmatprep.subr.bf16.mxu0 0
    %66 = vmatpush1.bf16.msra.mxu0 0
    %67 = vmatprep.subr.bf16.mxu0 0
    %68 = vmatpush1.bf16.msra.mxu0 0
    %69 = vmatprep.subr.bf16.mxu0 0
    %70 = vmatpush1.bf16.msra.mxu0 0
    %71 = vmatprep.subr.bf16.mxu0 0
    %72 = vmatpush1.bf16.msra.mxu0 0
    %73 = vmatprep.subr.bf16.mxu0 0
    %74 = vmatpush1.bf16.msra.mxu0 0
    %75 = vmatprep.subr.bf16.mxu0 0
    %76 = vmatpush1.bf16.msra.mxu0 0
    %77 = vmatprep.mubr.bf16.mxu0 0
    %78 = vmatmul.mubr.bf16.gmra.mrb[0].mxu0 %v43
    %v79 = vpop.f32.mrb[0].mxu0
    %v80 = vadd.f32 %v27, %v79
    %v81 = vpop.f32.mrb[0].mxu0
    %v82 = vpop.f32.mrb[0].mxu0
    %v83 = vpop.f32.mrb[0].mxu0
    %84 = vdwg.mxu0
    %vm85 = vcmask 33792
    %86 = vst.msk [vmem:[#allocation2] sm:$0x3] %vm85, %v80
    // Predicated region
    $region14: #{seq2seq_forward.13} parent=1 // pred_check
      _
    $region15: #{seq2seq_forward.13} parent=1 // pred_check_branch
      %88 = sbr.rel (0) target = $region17
    $region16: #{seq2seq_forward.13} parent=1 // pred_region
      %s90 = ssub.s32 32, 32
      %91 = vsyncadd [#allocation3], %s90
      %s93 = sshll.u32 [#allocation2], 4
      %s94 = int_to_ptr.vmem [resolvable:$true] %s93
      %96 = dma.vmem_to_hbm [thread:$0]  %s94, 32, %s3, [#allocation3]
    $region17: #{seq2seq_forward.13} parent=1 // pred_fallthru
      _
    // Predicated region
    $region18: #{seq2seq_forward.13} parent=1 // pred_check
      _
    $region19: #{seq2seq_forward.13} parent=1 // pred_check_branch
      %98 = sbr.rel (0) target = $region21
    $region20: #{seq2seq_forward.13} parent=1 // pred_region
      %99 = dma.done [#allocation3], 32
    $region21: #{seq2seq_forward.13} parent=1 // pred_fallthru
      _
    %100 = vsyncpa [#allocation3], 1

// kernel: seq2seq_forward.17
$region0: #{seq2seq_forward.17}
  #allocation0 [shape = 'u32[]', space=smem, size = 0x4, offset = 0x4, fixed_abs, tag = 'smem constant byte address 0x4 - core index']
  #allocation1 [shape = 'u32[144,128]{1,0:T(1,128)}', space=vmem, size = 0x12000, scoped, tag = 'internal scratch']
  %s0 = inlined_call_operand.vmem [shape: f32[16,32], index: 0, kind: input, shape index: {}]
  %s1 = inlined_call_operand.vmem [shape: bf16[32,32], index: 1, kind: input, shape index: {}]
  %s2 = inlined_call_operand.vmem [shape: f32[1,32], index: 2, kind: input, shape index: {}]
  %s3 = inlined_call_operand.vmem [shape: bf16[32,17], index: 3, kind: input, shape index: {}]
  %s4 = inlined_call_operand.vmem [shape: f32[1,17], index: 4, kind: input, shape index: {}]
  %s5 = inlined_call_operand.hbm [shape: f32[16,17], index: 5, kind: output, shape index: {}]
  %s6 = sld [smem:[#allocation0]]
  $region30: #{seq2seq_forward.17} parent=0
    _
  %s8 = ssub.s32 1, %s6
  %s9 = scalar_select 0, %s8, %s6
  $region1: #{seq2seq_forward.17} parent=0
    #allocation2 [shape = 'u8[8192]{0}', space=vmem, size = 0x2000, scoped, tag = 'output window, operand 0, single buffered']
    #allocation3 [shape = 's32[1]{0}', space=sflag, size = 0x4, scoped, tag = 'scoped memory for seq2seq_forward.17']
    %10 = vsyncpa [#allocation3], 0
    // Predicated region
    $region2: #{seq2seq_forward.17} parent=1 // pred_check
      _
    $region3: #{seq2seq_forward.17} parent=1 // pred_check_branch
      %12 = sbr.rel (0) target = $region5
    $region4: #{seq2seq_forward.17} parent=1 // pred_region
      _
    $region5: #{seq2seq_forward.17} parent=1 // pred_fallthru
      _
    // Predicated region
    $region6: #{seq2seq_forward.17} parent=1 // pred_check
      _
    $region7: #{seq2seq_forward.17} parent=1 // pred_check_branch
      %14 = sbr.rel (0) target = $region9
    $region8: #{seq2seq_forward.17} parent=1 // pred_region
      _
    $region9: #{seq2seq_forward.17} parent=1 // pred_fallthru
      _
    // Predicated region
    $region10: #{seq2seq_forward.17} parent=1 // pred_check
      _
    $region11: #{seq2seq_forward.17} parent=1 // pred_check_branch
      %16 = sbr.rel (0) target = $region13
    $region12: #{seq2seq_forward.17} parent=1 // pred_region
      _
    $region13: #{seq2seq_forward.17} parent=1 // pred_fallthru
      _
    // Predicated region
    $region14: #{seq2seq_forward.17} parent=1 // pred_check
      _
    $region15: #{seq2seq_forward.17} parent=1 // pred_check_branch
      %18 = sbr.rel (0) target = $region17
    $region16: #{seq2seq_forward.17} parent=1 // pred_region
      _
    $region17: #{seq2seq_forward.17} parent=1 // pred_fallthru
      _
    // Predicated region
    $region18: #{seq2seq_forward.17} parent=1 // pred_check
      _
    $region19: #{seq2seq_forward.17} parent=1 // pred_check_branch
      %20 = sbr.rel (0) target = $region21
    $region20: #{seq2seq_forward.17} parent=1 // pred_region
      _
    $region21: #{seq2seq_forward.17} parent=1 // pred_fallthru
      _
    %v22 = vld [vmem:[%s0] sm:$0xff]
    %v23 = vld [vmem:[%s0 + $0x8] sm:$0xff]
    %v24 = vpack.c.bf16 %v23, %v22
    %v25 = vld [vmem:[%s1] sm:$0xf]
    %v26 = vld [vmem:[%s1 + $0x4] sm:$0xf]
    %v27 = vld [vmem:[%s1 + $0x8] sm:$0xf]
    %v28 = vld [vmem:[%s1 + $0xc] sm:$0xf]
    %v29 = vld [vmem:[%s2] sm:$0x1]
    %v31 = vlaneseq
    %v32 = vshrl.u32 %v31, 7
    %v33 = vsub.s32 0, %v32
    %v34 = vrot.slane %v29, %v33
    %v40 = vunpack.c.l.b16 %v25
    %v41 = vunpack.c.l.b16 %v26
    %v42 = vunpack.c.l.b16 %v27
    %v43 = vunpack.c.l.b16 %v28
    %v44 = vpack.c.b16 %v41, %v40
    %v45 = vpack.c.b16 %v43, %v42
    %vm48 = vcmask 261120
    %v50 = vsel %vm48, %v24, 0
    %52 = vmatprep.subr.bf16.mxu0 0
    %53 = vmatpush1.bf16.msra.mxu0 %v44
    %54 = vmatprep.subr.bf16.mxu0 0
    %55 = vmatpush1.bf16.msra.mxu0 %v45
    %56 = vmatprep.subr.bf16.mxu0 0
    %57 = vmatpush1.bf16.msra.mxu0 0
    %58 = vmatprep.subr.bf16.mxu0 0
    %59 = vmatpush1.bf16.msra.mxu0 0
    %60 = vmatprep.subr.bf16.mxu0 0
    %61 = vmatpush1.bf16.msra.mxu0 0
    %62 = vmatprep.subr.bf16.mxu0 0
    %63 = vmatpush1.bf16.msra.mxu0 0
    %64 = vmatprep.subr.bf16.mxu0 0
    %65 = vmatpush1.bf16.msra.mxu0 0
    %66 = vmatprep.subr.bf16.mxu0 0
    %67 = vmatpush1.bf16.msra.mxu0 0
    %68 = vmatprep.subr.bf16.mxu0 0
    %69 = vmatpush1.bf16.msra.mxu0 0
    %70 = vmatprep.subr.bf16.mxu0 0
    %71 = vmatpush1.bf16.msra.mxu0 0
    %72 = vmatprep.subr.bf16.mxu0 0
    %73 = vmatpush1.bf16.msra.mxu0 0
    %74 = vmatprep.subr.bf16.mxu0 0
    %75 = vmatpush1.bf16.msra.mxu0 0
    %76 = vmatprep.subr.bf16.mxu0 0
    %77 = vmatpush1.bf16.msra.mxu0 0
    %78 = vmatprep.subr.bf16.mxu0 0
    %79 = vmatpush1.bf16.msra.mxu0 0
    %80 = vmatprep.subr.bf16.mxu0 0
    %81 = vmatpush1.bf16.msra.mxu0 0
    %82 = vmatprep.subr.bf16.mxu0 0
    %83 = vmatpush1.bf16.msra.mxu0 0
    %84 = vmatprep.mubr.bf16.mxu0 0
    %85 = vmatmul.mubr.bf16.gmra.mrb[0].mxu0 %v50
    %v86 = vpop.f32.mrb[0].mxu0
    %v87 = vadd.f32 %v34, %v86
    %v88 = vpop.f32.mrb[0].mxu0
    %v89 = vpop.f32.mrb[0].mxu0
    %v90 = vadd.f32 %v34, %v89
    %v91 = vpop.f32.mrb[0].mxu0
    %92 = vdwg.mxu0
    %v93 = vpack.c.bf16 %v90, %v87
    %v94 = vld [vmem:[%s3] sm:$0xf]
    %v95 = vld [vmem:[%s3 + $0x4] sm:$0xf]
    %v96 = vld [vmem:[%s3 + $0x8] sm:$0xf]
    %v97 = vld [vmem:[%s3 + $0xc] sm:$0xf]
    %v98 = vld [vmem:[%s4] sm:$0x1]
    %v100 = vlaneseq
    %v101 = vshrl.u32 %v100, 7
    %v102 = vsub.s32 0, %v101
    %v103 = vrot.slane %v98, %v102
    %v109 = vunpack.c.l.b16 %v94
    %v110 = vunpack.c.l.b16 %v95
    %v111 = vunpack.c.l.b16 %v96
    %v112 = vunpack.c.l.b16 %v97
    %v113 = vpack.c.b16 %v110, %v109
    %v114 = vpack.c.b16 %v112, %v111
    %v118 = vsel %vm48, %v93, 0
    %120 = vmatprep.subr.bf16.mxu0 0
    %121 = vmatpush1.bf16.msra.mxu0 %v113
    %122 = vmatprep.subr.bf16.mxu0 0
    %123 = vmatpush1.bf16.msra.mxu0 %v114
    %124 = vmatprep.subr.bf16.mxu0 0
    %125 = vmatpush1.bf16.msra.mxu0 0
    %126 = vmatprep.subr.bf16.mxu0 0
    %127 = vmatpush1.bf16.msra.mxu0 0
    %128 = vmatprep.subr.bf16.mxu0 0
    %129 = vmatpush1.bf16.msra.mxu0 0
    %130 = vmatprep.subr.bf16.mxu0 0
    %131 = vmatpush1.bf16.msra.mxu0 0
    %132 = vmatprep.subr.bf16.mxu0 0
    %133 = vmatpush1.bf16.msra.mxu0 0
    %134 = vmatprep.subr.bf16.mxu0 0
    %135 = vmatpush1.bf16.msra.mxu0 0
    %136 = vmatprep.subr.bf16.mxu0 0
    %137 = vmatpush1.bf16.msra.mxu0 0
    %138 = vmatprep.subr.bf16.mxu0 0
    %139 = vmatpush1.bf16.msra.mxu0 0
    %140 = vmatprep.subr.bf16.mxu0 0
    %141 = vmatpush1.bf16.msra.mxu0 0
    %142 = vmatprep.subr.bf16.mxu0 0
    %143 = vmatpush1.bf16.msra.mxu0 0
    %144 = vmatprep.subr.bf16.mxu0 0
    %145 = vmatpush1.bf16.msra.mxu0 0
    %146 = vmatprep.subr.bf16.mxu0 0
    %147 = vmatpush1.bf16.msra.mxu0 0
    %148 = vmatprep.subr.bf16.mxu0 0
    %149 = vmatpush1.bf16.msra.mxu0 0
    %150 = vmatprep.subr.bf16.mxu0 0
    %151 = vmatpush1.bf16.msra.mxu0 0
    %152 = vmatprep.mubr.bf16.mxu0 0
    %153 = vmatmul.mubr.bf16.gmra.mrb[0].mxu0 %v118
    %v154 = vpop.f32.mrb[0].mxu0
    %v155 = vadd.f32 %v103, %v154
    %v156 = vpop.f32.mrb[0].mxu0
    %v157 = vpop.f32.mrb[0].mxu0
    %v158 = vadd.f32 %v103, %v157
    %v159 = vpop.f32.mrb[0].mxu0
    %160 = vdwg.mxu0
    %vm161 = vcmask 138240
    %162 = vst.msk [vmem:[#allocation2] sm:$0xff] %vm161, %v155
    %163 = vst.msk [vmem:[#allocation2 + $0x8] sm:$0xff] %vm161, %v158
    // Predicated region
    $region22: #{seq2seq_forward.17} parent=1 // pred_check
      _
    $region23: #{seq2seq_forward.17} parent=1 // pred_check_branch
      %165 = sbr.rel (0) target = $region25
    $region24: #{seq2seq_forward.17} parent=1 // pred_region
      %s167 = ssub.s32 256, 256
      %168 = vsyncadd [#allocation3], %s167
      %s169 = sshll.u32 [#allocation2], 4
      %s170 = int_to_ptr.vmem [resolvable:$true] %s169
      %175 = dma.vmem_to_hbm [thread:$0]  %s170, 256, %s5, [#allocation3], 128, 128, 8
    $region25: #{seq2seq_forward.17} parent=1 // pred_fallthru
      _
    // Predicated region
    $region26: #{seq2seq_forward.17} parent=1 // pred_check
      _
    $region27: #{seq2seq_forward.17} parent=1 // pred_check_branch
      %177 = sbr.rel (0) target = $region29
    $region28: #{seq2seq_forward.17} parent=1 // pred_region
      %178 = dma.done [#allocation3], 256
    $region29: #{seq2seq_forward.17} parent=1 // pred_fallthru
      _
    %179 = vsyncpa [#allocation3], 1

// kernel: seq2seq_forward.15
$region0: #{seq2seq_forward.15}
  #allocation0 [shape = 'u32[]', space=smem, size = 0x4, offset = 0x4, fixed_abs, tag = 'smem constant byte address 0x4 - core index']
  #allocation1 [shape = 'u32[144,128]{1,0:T(1,128)}', space=vmem, size = 0x12000, scoped, tag = 'internal scratch']
  %s0 = inlined_call_operand.vmem [shape: f32[2,10,32], index: 0, kind: input, shape index: {}]
  %s1 = inlined_call_operand.vmem [shape: f32[2,8,32], index: 1, kind: input, shape index: {}]
  %s2 = inlined_call_operand.vmem [shape: bf16[2,10,32], index: 2, kind: input, shape index: {}]
  %s3 = inlined_call_operand.vmem [shape: bf16[2,10,32], index: 3, kind: input, shape index: {}]
  %s4 = inlined_call_operand.vmem [shape: bf16[3,32,32], index: 4, kind: input, shape index: {}]
  %s5 = inlined_call_operand.vmem [shape: bf16[3,32,32], index: 5, kind: input, shape index: {}]
  %s6 = inlined_call_operand.vmem [shape: f32[1,32], index: 6, kind: input, shape index: {}]
  %s7 = inlined_call_operand.vmem [shape: f32[1,32], index: 7, kind: input, shape index: {}]
  %s8 = inlined_call_operand.vmem [shape: bf16[32,32], index: 8, kind: input, shape index: {}]
  %s9 = inlined_call_operand.vmem [shape: f32[1,32], index: 9, kind: input, shape index: {}]
  %s10 = inlined_call_operand.vmem [shape: bf16[32,32], index: 10, kind: input, shape index: {}]
  %s11 = inlined_call_operand.vmem [shape: f32[1,32], index: 11, kind: input, shape index: {}]
  %s12 = inlined_call_operand.vmem [shape: f32[2,8,32], index: 12, kind: output, shape index: {0}]
  %s13 = inlined_call_operand.hbm [shape: f32[2,8,10], index: 13, kind: output, shape index: {1}]
  %14 = xla_tuple %s12, %s13
  %s15 = sld [smem:[#allocation0]]
  $region89: #{seq2seq_forward.15} parent=0
    _
  %s17 = ssub.s32 1, %s15
  %s18 = scalar_select 0, %s17, %s15
  $region1: #{seq2seq_forward.15} parent=0
    #allocation2 [shape = 'u8[8192]{0}', space=vmem, size = 0x2000, scoped, tag = 'output window, operand 1']
    #allocation3 [shape = 's32[2]{0}', space=sflag, size = 0x8, scoped, tag = 'scoped memory for seq2seq_forward.15']
    %19 = vsyncpa [#allocation3], 0
    %s20 = scalar_lea.sflag [#allocation3], 1
    %21 = vsyncpa %s20, 0
    loop: start=0, step=1, limit=4
    $region2: #{seq2seq_forward.15} parent=1 // loop_pre_header
      _
    $region3: #{seq2seq_forward.15} parent=1 // loop_header
      %s23 = sphi 0, %s27
      %p24 = scmp.ge.s32.totalorder %s23, 4
      %s33 = sphi 0, %s35
      %s36 = sphi 0, %s33
      %s37 = sphi 0, %s36
      %s53 = sphi 0, %s37
      %s59 = sphi 0, %s61
      %s62 = sphi 0, %s59
      %s63 = sphi 0, %s62
      %s79 = sphi 0, %s63
      %s85 = sphi 0, %s87
      %s88 = sphi 0, %s85
      %s89 = sphi 0, %s88
      %s105 = sphi 0, %s89
      %s111 = sphi 0, %s113
      %s114 = sphi 0, %s111
      %s115 = sphi 0, %s114
      %s131 = sphi 0, %s115
      %s135 = sphi 0, %s135
      %s137 = sphi 0, %s135
      %s138 = sphi 0, %s137
      %s152 = sphi 0, %s138
      %s156 = sphi 0, %s156
      %s158 = sphi 0, %s156
      %s159 = sphi 0, %s158
      %s173 = sphi 0, %s159
      %s177 = sphi 0, %s177
      %s179 = sphi 0, %s177
      %s180 = sphi 0, %s179
      %s194 = sphi 0, %s180
      %s198 = sphi 0, %s198
      %s200 = sphi 0, %s198
      %s201 = sphi 0, %s200
      %s215 = sphi 0, %s201
      %s219 = sphi 0, %s219
      %s221 = sphi 0, %s219
      %s222 = sphi 0, %s221
      %s236 = sphi 0, %s222
      %s240 = sphi 0, %s240
      %s242 = sphi 0, %s240
      %s243 = sphi 0, %s242
      %s257 = sphi 0, %s243
      %s261 = sphi 0, %s261
      %s263 = sphi 0, %s261
      %s264 = sphi 0, %s263
      %s278 = sphi 0, %s264
      %s282 = sphi 0, %s282
      %s284 = sphi 0, %s282
      %s285 = sphi 0, %s284
      %s299 = sphi 0, %s285
      %s305 = sphi 0, %s307
      %s308 = sphi 0, %s305
      %s309 = sphi 0, %s308
      %s325 = sphi 0, %s309
      %s331 = sphi 0, %s333
      %s334 = sphi 0, %s331
      %s335 = sphi 0, %s334
      %s351 = sphi 0, %s335
    $region4: #{seq2seq_forward.15} parent=1 // loop_header_branch
      %26 = sbr.rel (%p24) target = $region8
    $region5: #{seq2seq_forward.15} parent=1 // loop_body
      %s28 = ssub.s32 %s23, 1
      %s29 = ssub.s32 %s23, 2
      %s30 = sadd.s32 %s23, 1
      %s31 = ssub.s32 %s23, %s30
      %p32 = scmp.eq.s32.totalorder %s31, 0
      %s34 = sadd.s32 %s33, 1
      %s35 = scalar_select %p32, %s33, %s34
      %p38 = pneg %p32
      %p39 = scmp.eq.s32.totalorder %s23, 1
      %p40 = por %p38, %p39
      %p41 = scmp.ne.s32.totalorder %s33, %s36
      %p42 = scmp.eq.s32.totalorder %s23, 0
      %p43 = por %p41, %p42
      %p44 = scmp.ne.s32.totalorder %s33, %s36
      %p45 = scmp.eq.s32.totalorder %s28, 1
      %p46 = por %p44, %p45
      %p47 = scmp.ne.s32.totalorder %s36, %s37
      %p48 = scmp.eq.s32.totalorder %s28, 0
      %p49 = por %p47, %p48
      %p50 = scmp.ne.s32.totalorder %s36, %s37
      %p51 = scmp.eq.s32.totalorder %s29, 1
      %p52 = por %p50, %p51
      %p54 = scmp.ne.s32.totalorder %s37, %s53
      %p55 = scmp.eq.s32.totalorder %s29, 0
      %p56 = por %p54, %p55
      %s57 = ssub.s32 %s23, %s30
      %p58 = scmp.eq.s32.totalorder %s57, 0
      %s60 = sadd.s32 %s59, 1
      %s61 = scalar_select %p58, %s59, %s60
      %p64 = pneg %p58
      %p65 = scmp.eq.s32.totalorder %s23, 1
      %p66 = por %p64, %p65
      %p67 = scmp.ne.s32.totalorder %s59, %s62
      %p68 = scmp.eq.s32.totalorder %s23, 0
      %p69 = por %p67, %p68
      %p70 = scmp.ne.s32.totalorder %s59, %s62
      %p71 = scmp.eq.s32.totalorder %s28, 1
      %p72 = por %p70, %p71
      %p73 = scmp.ne.s32.totalorder %s62, %s63
      %p74 = scmp.eq.s32.totalorder %s28, 0
      %p75 = por %p73, %p74
      %p76 = scmp.ne.s32.totalorder %s62, %s63
      %p77 = scmp.eq.s32.totalorder %s29, 1
      %p78 = por %p76, %p77
      %p80 = scmp.ne.s32.totalorder %s63, %s79
      %p81 = scmp.eq.s32.totalorder %s29, 0
      %p82 = por %p80, %p81
      %s83 = ssub.s32 %s23, %s30
      %p84 = scmp.eq.s32.totalorder %s83, 0
      %s86 = sadd.s32 %s85, 1
      %s87 = scalar_select %p84, %s85, %s86
      %p90 = pneg %p84
      %p91 = scmp.eq.s32.totalorder %s23, 1
      %p92 = por %p90, %p91
      %p93 = scmp.ne.s32.totalorder %s85, %s88
      %p94 = scmp.eq.s32.totalorder %s23, 0
      %p95 = por %p93, %p94
      %p96 = scmp.ne.s32.totalorder %s85, %s88
      %p97 = scmp.eq.s32.totalorder %s28, 1
      %p98 = por %p96, %p97
      %p99 = scmp.ne.s32.totalorder %s88, %s89
      %p100 = scmp.eq.s32.totalorder %s28, 0
      %p101 = por %p99, %p100
      %p102 = scmp.ne.s32.totalorder %s88, %s89
      %p103 = scmp.eq.s32.totalorder %s29, 1
      %p104 = por %p102, %p103
      %p106 = scmp.ne.s32.totalorder %s89, %s105
      %p107 = scmp.eq.s32.totalorder %s29, 0
      %p108 = por %p106, %p107
      %s109 = ssub.s32 %s23, %s30
      %p110 = scmp.eq.s32.totalorder %s109, 0
      %s112 = sadd.s32 %s111, 1
      %s113 = scalar_select %p110, %s111, %s112
      %p116 = pneg %p110
      %p117 = scmp.eq.s32.totalorder %s23, 1
      %p118 = por %p116, %p117
      %p119 = scmp.ne.s32.totalorder %s111, %s114
      %p120 = scmp.eq.s32.totalorder %s23, 0
      %p121 = por %p119, %p120
      %p122 = scmp.ne.s32.totalorder %s111, %s114
      %p123 = scmp.eq.s32.totalorder %s28, 1
      %p124 = por %p122, %p123
      %p125 = scmp.ne.s32.totalorder %s114, %s115
      %p126 = scmp.eq.s32.totalorder %s28, 0
      %p127 = por %p125, %p126
      %p128 = scmp.ne.s32.totalorder %s114, %s115
      %p129 = scmp.eq.s32.totalorder %s29, 1
      %p130 = por %p128, %p129
      %p132 = scmp.ne.s32.totalorder %s115, %s131
      %p133 = scmp.eq.s32.totalorder %s29, 0
      %p134 = por %p132, %p133
      %s136 = sadd.s32 %s135, 1
      %p139 = scmp.eq.s32.totalorder %s23, 1
      %p140 = scmp.ne.s32.totalorder %s135, %s137
      %p141 = scmp.eq.s32.totalorder %s23, 0
      %p142 = por %p140, %p141
      %p143 = scmp.ne.s32.totalorder %s135, %s137
      %p144 = scmp.eq.s32.totalorder %s28, 1
      %p145 = por %p143, %p144
      %p146 = scmp.ne.s32.totalorder %s137, %s138
      %p147 = scmp.eq.s32.totalorder %s28, 0
      %p148 = por %p146, %p147
      %p149 = scmp.ne.s32.totalorder %s137, %s138
      %p150 = scmp.eq.s32.totalorder %s29, 1
      %p151 = por %p149, %p150
      %p153 = scmp.ne.s32.totalorder %s138, %s152
      %p154 = scmp.eq.s32.totalorder %s29, 0
      %p155 = por %p153, %p154
      %s157 = sadd.s32 %s156, 1
      %p160 = scmp.eq.s32.totalorder %s23, 1
      %p161 = scmp.ne.s32.totalorder %s156, %s158
      %p162 = scmp.eq.s32.totalorder %s23, 0
      %p163 = por %p161, %p162
      %p164 = scmp.ne.s32.totalorder %s156, %s158
      %p165 = scmp.eq.s32.totalorder %s28, 1
      %p166 = por %p164, %p165
      %p167 = scmp.ne.s32.totalorder %s158, %s159
      %p168 = scmp.eq.s32.totalorder %s28, 0
      %p169 = por %p167, %p168
      %p170 = scmp.ne.s32.totalorder %s158, %s159
      %p171 = scmp.eq.s32.totalorder %s29, 1
      %p172 = por %p170, %p171
      %p174 = scmp.ne.s32.totalorder %s159, %s173
      %p175 = scmp.eq.s32.totalorder %s29, 0
      %p176 = por %p174, %p175
      %s178 = sadd.s32 %s177, 1
      %p181 = scmp.eq.s32.totalorder %s23, 1
      %p182 = scmp.ne.s32.totalorder %s177, %s179
      %p183 = scmp.eq.s32.totalorder %s23, 0
      %p184 = por %p182, %p183
      %p185 = scmp.ne.s32.totalorder %s177, %s179
      %p186 = scmp.eq.s32.totalorder %s28, 1
      %p187 = por %p185, %p186
      %p188 = scmp.ne.s32.totalorder %s179, %s180
      %p189 = scmp.eq.s32.totalorder %s28, 0
      %p190 = por %p188, %p189
      %p191 = scmp.ne.s32.totalorder %s179, %s180
      %p192 = scmp.eq.s32.totalorder %s29, 1
      %p193 = por %p191, %p192
      %p195 = scmp.ne.s32.totalorder %s180, %s194
      %p196 = scmp.eq.s32.totalorder %s29, 0
      %p197 = por %p195, %p196
      %s199 = sadd.s32 %s198, 1
      %p202 = scmp.eq.s32.totalorder %s23, 1
      %p203 = scmp.ne.s32.totalorder %s198, %s200
      %p204 = scmp.eq.s32.totalorder %s23, 0
      %p205 = por %p203, %p204
      %p206 = scmp.ne.s32.totalorder %s198, %s200
      %p207 = scmp.eq.s32.totalorder %s28, 1
      %p208 = por %p206, %p207
      %p209 = scmp.ne.s32.totalorder %s200, %s201
      %p210 = scmp.eq.s32.totalorder %s28, 0
      %p211 = por %p209, %p210
      %p212 = scmp.ne.s32.totalorder %s200, %s201
      %p213 = scmp.eq.s32.totalorder %s29, 1
      %p214 = por %p212, %p213
      %p216 = scmp.ne.s32.totalorder %s201, %s215
      %p217 = scmp.eq.s32.totalorder %s29, 0
      %p218 = por %p216, %p217
      %s220 = sadd.s32 %s219, 1
      %p223 = scmp.eq.s32.totalorder %s23, 1
      %p224 = scmp.ne.s32.totalorder %s219, %s221
      %p225 = scmp.eq.s32.totalorder %s23, 0
      %p226 = por %p224, %p225
      %p227 = scmp.ne.s32.totalorder %s219, %s221
      %p228 = scmp.eq.s32.totalorder %s28, 1
      %p229 = por %p227, %p228
      %p230 = scmp.ne.s32.totalorder %s221, %s222
      %p231 = scmp.eq.s32.totalorder %s28, 0
      %p232 = por %p230, %p231
      %p233 = scmp.ne.s32.totalorder %s221, %s222
      %p234 = scmp.eq.s32.totalorder %s29, 1
      %p235 = por %p233, %p234
      %p237 = scmp.ne.s32.totalorder %s222, %s236
      %p238 = scmp.eq.s32.totalorder %s29, 0
      %p239 = por %p237, %p238
      %s241 = sadd.s32 %s240, 1
      %p244 = scmp.eq.s32.totalorder %s23, 1
      %p245 = scmp.ne.s32.totalorder %s240, %s242
      %p246 = scmp.eq.s32.totalorder %s23, 0
      %p247 = por %p245, %p246
      %p248 = scmp.ne.s32.totalorder %s240, %s242
      %p249 = scmp.eq.s32.totalorder %s28, 1
      %p250 = por %p248, %p249
      %p251 = scmp.ne.s32.totalorder %s242, %s243
      %p252 = scmp.eq.s32.totalorder %s28, 0
      %p253 = por %p251, %p252
      %p254 = scmp.ne.s32.totalorder %s242, %s243
      %p255 = scmp.eq.s32.totalorder %s29, 1
      %p256 = por %p254, %p255
      %p258 = scmp.ne.s32.totalorder %s243, %s257
      %p259 = scmp.eq.s32.totalorder %s29, 0
      %p260 = por %p258, %p259
      %s262 = sadd.s32 %s261, 1
      %p265 = scmp.eq.s32.totalorder %s23, 1
      %p266 = scmp.ne.s32.totalorder %s261, %s263
      %p267 = scmp.eq.s32.totalorder %s23, 0
      %p268 = por %p266, %p267
      %p269 = scmp.ne.s32.totalorder %s261, %s263
      %p270 = scmp.eq.s32.totalorder %s28, 1
      %p271 = por %p269, %p270
      %p272 = scmp.ne.s32.totalorder %s263, %s264
      %p273 = scmp.eq.s32.totalorder %s28, 0
      %p274 = por %p272, %p273
      %p275 = scmp.ne.s32.totalorder %s263, %s264
      %p276 = scmp.eq.s32.totalorder %s29, 1
      %p277 = por %p275, %p276
      %p279 = scmp.ne.s32.totalorder %s264, %s278
      %p280 = scmp.eq.s32.totalorder %s29, 0
      %p281 = por %p279, %p280
      %s283 = sadd.s32 %s282, 1
      %p286 = scmp.eq.s32.totalorder %s23, 1
      %p287 = scmp.ne.s32.totalorder %s282, %s284
      %p288 = scmp.eq.s32.totalorder %s23, 0
      %p289 = por %p287, %p288
      %p290 = scmp.ne.s32.totalorder %s282, %s284
      %p291 = scmp.eq.s32.totalorder %s28, 1
      %p292 = por %p290, %p291
      %p293 = scmp.ne.s32.totalorder %s284, %s285
      %p294 = scmp.eq.s32.totalorder %s28, 0
      %p295 = por %p293, %p294
      %p296 = scmp.ne.s32.totalorder %s284, %s285
      %p297 = scmp.eq.s32.totalorder %s29, 1
      %p298 = por %p296, %p297
      %p300 = scmp.ne.s32.totalorder %s285, %s299
      %p301 = scmp.eq.s32.totalorder %s29, 0
      %p302 = por %p300, %p301
      %s303 = ssub.s32 %s23, %s30
      %p304 = scmp.eq.s32.totalorder %s303, 0
      %s306 = sadd.s32 %s305, 1
      %s307 = scalar_select %p304, %s305, %s306
      %p310 = pneg %p304
      %p311 = scmp.eq.s32.totalorder %s23, 1
      %p312 = por %p310, %p311
      %p313 = scmp.ne.s32.totalorder %s305, %s308
      %p314 = scmp.eq.s32.totalorder %s23, 0
      %p315 = por %p313, %p314
      %p316 = scmp.ne.s32.totalorder %s305, %s308
      %p317 = scmp.eq.s32.totalorder %s28, 1
      %p318 = por %p316, %p317
      %p319 = scmp.ne.s32.totalorder %s308, %s309
      %p320 = scmp.eq.s32.totalorder %s28, 0
      %p321 = por %p319, %p320
      %p322 = scmp.ne.s32.totalorder %s308, %s309
      %p323 = scmp.eq.s32.totalorder %s29, 1
      %p324 = por %p322, %p323
      %p326 = scmp.ne.s32.totalorder %s309, %s325
      %p327 = scmp.eq.s32.totalorder %s29, 0
      %p328 = por %p326, %p327
      %s329 = ssub.s32 %s23, %s30
      %p330 = scmp.eq.s32.totalorder %s329, 0
      %s332 = sadd.s32 %s331, 1
      %s333 = scalar_select %p330, %s331, %s332
      %p336 = pneg %p330
      %p337 = scmp.eq.s32.totalorder %s23, 1
      %p338 = por %p336, %p337
      %p339 = scmp.ne.s32.totalorder %s331, %s334
      %p340 = scmp.eq.s32.totalorder %s23, 0
      %p341 = por %p339, %p340
      %p342 = scmp.ne.s32.totalorder %s331, %s334
      %p343 = scmp.eq.s32.totalorder %s28, 1
      %p344 = por %p342, %p343
      %p345 = scmp.ne.s32.totalorder %s334, %s335
      %p346 = scmp.eq.s32.totalorder %s28, 0
      %p347 = por %p345, %p346
      %p348 = scmp.ne.s32.totalorder %s334, %s335
      %p349 = scmp.eq.s32.totalorder %s29, 1
      %p350 = por %p348, %p349
      %p352 = scmp.ne.s32.totalorder %s335, %s351
      %p353 = scmp.eq.s32.totalorder %s29, 0
      %p354 = por %p352, %p353
      %p355 = scmp.le.s32.totalorder 1, %s23
      %p356 = scmp.lt.s32.totalorder %s23, 3
      %p357 = pnand %p355, %p356
      %p358 = pneg %p357
      // Predicated region
      $region9: #{seq2seq_forward.15} parent=5 // pred_check
        _
      $region10: #{seq2seq_forward.15} parent=5 // pred_check_branch
        %360 = sbr.rel (%p357) target = $region12
      $region11: #{seq2seq_forward.15} parent=5 // pred_region
        %s361 = ssub.s32 %s23, 1
        // Predicated region
        $region13: #{seq2seq_forward.15} parent=11 // pred_check
          %p362 = pneg %p148
        $region14: #{seq2seq_forward.15} parent=11 // pred_check_branch
          %364 = sbr.rel (%p362) target = $region16
        $region15: #{seq2seq_forward.15} parent=11 // pred_region
          _
        $region16: #{seq2seq_forward.15} parent=11 // pred_fallthru
          _
        // Predicated region
        $region17: #{seq2seq_forward.15} parent=11 // pred_check
          %p365 = pneg %p169
        $region18: #{seq2seq_forward.15} parent=11 // pred_check_branch
          %367 = sbr.rel (%p365) target = $region20
        $region19: #{seq2seq_forward.15} parent=11 // pred_region
          _
        $region20: #{seq2seq_forward.15} parent=11 // pred_fallthru
          _
        // Predicated region
        $region21: #{seq2seq_forward.15} parent=11 // pred_check
          %p368 = pneg %p190
        $region22: #{seq2seq_forward.15} parent=11 // pred_check_branch
          %370 = sbr.rel (%p368) target = $region24
        $region23: #{seq2seq_forward.15} parent=11 // pred_region
          _
        $region24: #{seq2seq_forward.15} parent=11 // pred_fallthru
          _
        // Predicated region
        $region25: #{seq2seq_forward.15} parent=11 // pred_check
          %p371 = pneg %p211
        $region26: #{seq2seq_forward.15} parent=11 // pred_check_branch
          %373 = sbr.rel (%p371) target = $region28
        $region27: #{seq2seq_forward.15} parent=11 // pred_region
          _
        $region28: #{seq2seq_forward.15} parent=11 // pred_fallthru
          _
        // Predicated region
        $region29: #{seq2seq_forward.15} parent=11 // pred_check
          %p374 = pneg %p232
        $region30: #{seq2seq_forward.15} parent=11 // pred_check_branch
          %376 = sbr.rel (%p374) target = $region32
        $region31: #{seq2seq_forward.15} parent=11 // pred_region
          _
        $region32: #{seq2seq_forward.15} parent=11 // pred_fallthru
          _
        // Predicated region
        $region33: #{seq2seq_forward.15} parent=11 // pred_check
          %p377 = pneg %p253
        $region34: #{seq2seq_forward.15} parent=11 // pred_check_branch
          %379 = sbr.rel (%p377) target = $region36
        $region35: #{seq2seq_forward.15} parent=11 // pred_region
          _
        $region36: #{seq2seq_forward.15} parent=11 // pred_fallthru
          _
        // Predicated region
        $region37: #{seq2seq_forward.15} parent=11 // pred_check
          %p380 = pneg %p274
        $region38: #{seq2seq_forward.15} parent=11 // pred_check_branch
          %382 = sbr.rel (%p380) target = $region40
        $region39: #{seq2seq_forward.15} parent=11 // pred_region
          _
        $region40: #{seq2seq_forward.15} parent=11 // pred_fallthru
          _
        // Predicated region
        $region41: #{seq2seq_forward.15} parent=11 // pred_check
          %p383 = pneg %p295
        $region42: #{seq2seq_forward.15} parent=11 // pred_check_branch
          %385 = sbr.rel (%p383) target = $region44
        $region43: #{seq2seq_forward.15} parent=11 // pred_region
          _
        $region44: #{seq2seq_forward.15} parent=11 // pred_fallthru
          _
      $region12: #{seq2seq_forward.15} parent=5 // pred_fallthru
        _
      %p386 = scmp.lt.s32.totalorder %s23, 2
      // Predicated region
      $region45: #{seq2seq_forward.15} parent=5 // pred_check
        %p387 = pneg %p386
      $region46: #{seq2seq_forward.15} parent=5 // pred_check_branch
        %389 = sbr.rel (%p387) target = $region48
      $region47: #{seq2seq_forward.15} parent=5 // pred_region
        // Predicated region
        $region49: #{seq2seq_forward.15} parent=47 // pred_check
          %p390 = pneg %p43
        $region50: #{seq2seq_forward.15} parent=47 // pred_check_branch
          %392 = sbr.rel (%p390) target = $region52
        $region51: #{seq2seq_forward.15} parent=47 // pred_region
          %p393 = scmp.lt.s32.totalorder %s23, 1
          %s394 = scalar_select %p393, %s23, 1
          %s395 = smul.addr %s394, 2
          %s396 = smul.addr %s395, 8
          %s397 = scalar_lea.vmem %s0, %s396
        $region52: #{seq2seq_forward.15} parent=47 // pred_fallthru
          _
        // Predicated region
        $region53: #{seq2seq_forward.15} parent=47 // pred_check
          %p398 = pneg %p69
        $region54: #{seq2seq_forward.15} parent=47 // pred_check_branch
          %400 = sbr.rel (%p398) target = $region56
        $region55: #{seq2seq_forward.15} parent=47 // pred_region
          %p401 = scmp.lt.s32.totalorder %s23, 1
          %s402 = scalar_select %p401, %s23, 1
          %s403 = smul.addr %s402, 8
          %s404 = scalar_lea.vmem %s1, %s403
        $region56: #{seq2seq_forward.15} parent=47 // pred_fallthru
          _
        // Predicated region
        $region57: #{seq2seq_forward.15} parent=47 // pred_check
          %p405 = pneg %p95
        $region58: #{seq2seq_forward.15} parent=47 // pred_check_branch
          %407 = sbr.rel (%p405) target = $region60
        $region59: #{seq2seq_forward.15} parent=47 // pred_region
          %p408 = scmp.lt.s32.totalorder %s23, 1
          %s409 = scalar_select %p408, %s23, 1
          %s410 = smul.addr %s409, 2
          %s411 = smul.addr %s410, 4
          %s412 = scalar_lea.vmem %s2, %s411
        $region60: #{seq2seq_forward.15} parent=47 // pred_fallthru
          _
        // Predicated region
        $region61: #{seq2seq_forward.15} parent=47 // pred_check
          %p413 = pneg %p121
        $region62: #{seq2seq_forward.15} parent=47 // pred_check_branch
          %415 = sbr.rel (%p413) target = $region64
        $region63: #{seq2seq_forward.15} parent=47 // pred_region
          %p416 = scmp.lt.s32.totalorder %s23, 1
          %s417 = scalar_select %p416, %s23, 1
          %s418 = smul.addr %s417, 2
          %s419 = smul.addr %s418, 4
          %s420 = scalar_lea.vmem %s3, %s419
        $region64: #{seq2seq_forward.15} parent=47 // pred_fallthru
          _
      $region48: #{seq2seq_forward.15} parent=5 // pred_fallthru
        _
      %p421 = scmp.le.s32.totalorder 1, %s23
      %p422 = scmp.lt.s32.totalorder %s23, 3
      %p423 = pnand %p421, %p422
      %p424 = pneg %p423
      // Predicated region
      $region65: #{seq2seq_forward.15} parent=5 // pred_check
        _
      $region66: #{seq2seq_forward.15} parent=5 // pred_check_branch
        %426 = sbr.rel (%p423) target = $region68
      $region67: #{seq2seq_forward.15} parent=5 // pred_region
        %s427 = ssub.s32 %s23, 1
        %p428 = scmp.lt.s32.totalorder %s28, 1
        %s429 = scalar_select %p428, %s28, 1
        %s430 = smul.addr %s429, 2
        %s431 = smul.addr %s430, 8
        %s432 = scalar_lea.vmem %s0, %s431
        %p433 = pneg %p49
        %p434 = pneg %p46
        %p435 = scmp.lt.s32.totalorder %s28, 1
        %s436 = scalar_select %p435, %s28, 1
        %s437 = smul.addr %s436, 8
        %s438 = scalar_lea.vmem %s1, %s437
        %p439 = pneg %p75
        %p440 = pneg %p72
        %p441 = scmp.lt.s32.totalorder %s28, 1
        %s442 = scalar_select %p441, %s28, 1
        %s443 = smul.addr %s442, 2
        %s444 = smul.addr %s443, 4
        %s445 = scalar_lea.vmem %s2, %s444
        %p446 = pneg %p101
        %p447 = pneg %p98
        %p448 = scmp.lt.s32.totalorder %s28, 1
        %s449 = scalar_select %p448, %s28, 1
        %s450 = smul.addr %s449, 2
        %s451 = smul.addr %s450, 4
        %s452 = scalar_lea.vmem %s3, %s451
        %p453 = pneg %p127
        %p454 = pneg %p124
        %p455 = pneg %p148
        %p456 = pneg %p145
        %p457 = pneg %p169
        %p458 = pneg %p166
        %p459 = pneg %p190
        %p460 = pneg %p187
        %p461 = pneg %p211
        %p462 = pneg %p208
        %p463 = pneg %p232
        %p464 = pneg %p229
        %p465 = pneg %p253
        %p466 = pneg %p250
        %p467 = pneg %p274
        %p468 = pneg %p271
        %p469 = pneg %p295
        %p470 = pneg %p292
        %p471 = pneg %p321
        %p472 = pneg %p318
        %p473 = scmp.lt.s32.totalorder %s28, 1
        %s474 = scalar_select %p473, %s28, 1
        %s475 = smul.addr %s474, 8
        %s476 = scalar_lea.vmem %s12, %s475
        %p477 = pneg %p347
        %p478 = pneg %p344
        %s479 = sand.u32 %s334, 1
        %s480 = scalar_lea.sflag [#allocation3], %s479
        %s481 = sand.u32 %s334, 1
        %s482 = smul.addr %s481, 8
        %s483 = scalar_lea.vmem [#allocation2], %s482
        %p484 = scmp.lt.s32.totalorder %s28, 1
        %s485 = scalar_select %p484, %s28, 1
        %s486 = smul.addr %s485, 2
        %s487 = smul.addr %s486, 8
        %s488 = scalar_lea.vmem %s0, %s487
        %p489 = scmp.lt.s32.totalorder %s28, 1
        %s490 = scalar_select %p489, %s28, 1
        %s491 = smul.addr %s490, 8
        %s492 = scalar_lea.vmem %s1, %s491
        %p493 = scmp.lt.s32.totalorder %s28, 1
        %s494 = scalar_select %p493, %s28, 1
        %s495 = smul.addr %s494, 2
        %s496 = smul.addr %s495, 4
        %s497 = scalar_lea.vmem %s2, %s496
        %p498 = scmp.lt.s32.totalorder %s28, 1
        %s499 = scalar_select %p498, %s28, 1
        %s500 = smul.addr %s499, 2
        %s501 = smul.addr %s500, 4
        %s502 = scalar_lea.vmem %s3, %s501
        %p503 = scmp.lt.s32.totalorder %s28, 1
        %s504 = scalar_select %p503, %s28, 1
        %s505 = smul.addr %s504, 8
        %s506 = scalar_lea.vmem %s12, %s505
        %v508 = vld [vmem:[%s488] sm:$0xff]
        %v509 = vld [vmem:[%s488 + $0x8] sm:$0x3]
        %v510 = vld [vmem:[%s6] sm:$0x1]
        %v511 = vld [vmem:[%s7] sm:$0x1]
        %v512 = vpack.c.bf16 %v508, %v508
        %v513 = vld [vmem:[%s4] sm:$0xf]
        %v514 = vld [vmem:[%s4 + $0x4] sm:$0xf]
        %v515 = vld [vmem:[%s4 + $0x8] sm:$0xf]
        %v516 = vld [vmem:[%s4 + $0xc] sm:$0xf]
        %v521 = vunpack.c.l.b16 %v513
        %v522 = vunpack.c.l.b16 %v514
        %v523 = vunpack.c.l.b16 %v515
        %v524 = vunpack.c.l.b16 %v516
        %v525 = vpack.c.b16 %v522, %v521
        %v526 = vpack.c.b16 %v524, %v523
        %vm529 = vcmask 261120
        %v531 = vsel %vm529, %v512, 0
        %533 = vmatprep.subr.bf16.mxu0 0
        %534 = vmatpush1.bf16.msra.mxu0 %v525
        %535 = vmatprep.subr.bf16.mxu0 0
        %536 = vmatpush1.bf16.msra.mxu0 %v526
        %537 = vmatprep.subr.bf16.mxu0 0
        %538 = vmatpush1.bf16.msra.mxu0 0
        %539 = vmatprep.subr.bf16.mxu0 0
        %540 = vmatpush1.bf16.msra.mxu0 0
        %541 = vmatprep.subr.bf16.mxu0 0
        %542 = vmatpush1.bf16.msra.mxu0 0
        %543 = vmatprep.subr.bf16.mxu0 0
        %544 = vmatpush1.bf16.msra.mxu0 0
        %545 = vmatprep.subr.bf16.mxu0 0
        %546 = vmatpush1.bf16.msra.mxu0 0
        %547 = vmatprep.subr.bf16.mxu0 0
        %548 = vmatpush1.bf16.msra.mxu0 0
        %549 = vmatprep.subr.bf16.mxu0 0
        %550 = vmatpush1.bf16.msra.mxu0 0
        %551 = vmatprep.subr.bf16.mxu0 0
        %552 = vmatpush1.bf16.msra.mxu0 0
        %553 = vmatprep.subr.bf16.mxu0 0
        %554 = vmatpush1.bf16.msra.mxu0 0
        %555 = vmatprep.subr.bf16.mxu0 0
        %556 = vmatpush1.bf16.msra.mxu0 0
        %557 = vmatprep.subr.bf16.mxu0 0
        %558 = vmatpush1.bf16.msra.mxu0 0
        %559 = vmatprep.subr.bf16.mxu0 0
        %560 = vmatpush1.bf16.msra.mxu0 0
        %561 = vmatprep.subr.bf16.mxu0 0
        %562 = vmatpush1.bf16.msra.mxu0 0
        %563 = vmatprep.subr.bf16.mxu0 0
        %564 = vmatpush1.bf16.msra.mxu0 0
        %565 = vmatprep.mubr.bf16.mxu0 0
        %566 = vmatmul.mubr.bf16.gmra.mrb[0].mxu0 %v531
        %v567 = vpop.f32.mrb[0].mxu0
        %v568 = vadd.f32 0.0, %v567
        %v569 = vpop.f32.mrb[0].mxu0
        %v570 = vpop.f32.mrb[0].mxu0
        %v571 = vpop.f32.mrb[0].mxu0
        %572 = vdwg.mxu0
        %v574 = vlaneseq
        %v575 = vshrl.u32 %v574, 7
        %v576 = vsub.s32 0, %v575
        %v577 = vrot.slane %v510, %v576
        %v579 = vadd.f32 %v577, %v568
        %v580 = vld [vmem:[%s5] sm:$0xf]
        %v581 = vld [vmem:[%s5 + $0x4] sm:$0xf]
        %v582 = vld [vmem:[%s5 + $0x8] sm:$0xf]
        %v583 = vld [vmem:[%s5 + $0xc] sm:$0xf]
        %v588 = vunpack.c.l.b16 %v580
        %v589 = vunpack.c.l.b16 %v581
        %v590 = vunpack.c.l.b16 %v582
        %v591 = vunpack.c.l.b16 %v583
        %v592 = vpack.c.b16 %v589, %v588
        %v593 = vpack.c.b16 %v591, %v590
        %596 = vmatprep.subr.bf16.mxu0 0
        %597 = vmatpush1.bf16.msra.mxu0 %v592
        %598 = vmatprep.subr.bf16.mxu0 0
        %599 = vmatpush1.bf16.msra.mxu0 %v593
        %600 = vmatprep.subr.bf16.mxu0 0
        %601 = vmatpush1.bf16.msra.mxu0 0
        %602 = vmatprep.subr.bf16.mxu0 0
        %603 = vmatpush1.bf16.msra.mxu0 0
        %604 = vmatprep.subr.bf16.mxu0 0
        %605 = vmatpush1.bf16.msra.mxu0 0
        %606 = vmatprep.subr.bf16.mxu0 0
        %607 = vmatpush1.bf16.msra.mxu0 0
        %608 = vmatprep.subr.bf16.mxu0 0
        %609 = vmatpush1.bf16.msra.mxu0 0
        %610 = vmatprep.subr.bf16.mxu0 0
        %611 = vmatpush1.bf16.msra.mxu0 0
        %612 = vmatprep.subr.bf16.mxu0 0
        %613 = vmatpush1.bf16.msra.mxu0 0
        %614 = vmatprep.subr.bf16.mxu0 0
        %615 = vmatpush1.bf16.msra.mxu0 0
        %616 = vmatprep.subr.bf16.mxu0 0
        %617 = vmatpush1.bf16.msra.mxu0 0
        %618 = vmatprep.subr.bf16.mxu0 0
        %619 = vmatpush1.bf16.msra.mxu0 0
        %620 = vmatprep.subr.bf16.mxu0 0
        %621 = vmatpush1.bf16.msra.mxu0 0
        %622 = vmatprep.subr.bf16.mxu0 0
        %623 = vmatpush1.bf16.msra.mxu0 0
        %624 = vmatprep.subr.bf16.mxu0 0
        %625 = vmatpush1.bf16.msra.mxu0 0
        %626 = vmatprep.subr.bf16.mxu0 0
        %627 = vmatpush1.bf16.msra.mxu0 0
        %628 = vmatprep.mubr.bf16.mxu0 0
        %629 = vmatmul.mubr.bf16.gmra.mrb[0].mxu0 %v531
        %v630 = vpop.f32.mrb[0].mxu0
        %v631 = vadd.f32 0.0, %v630
        %v632 = vpop.f32.mrb[0].mxu0
        %v633 = vpop.f32.mrb[0].mxu0
        %v634 = vpop.f32.mrb[0].mxu0
        %635 = vdwg.mxu0
        %v637 = vlaneseq
        %v638 = vshrl.u32 %v637, 7
        %v639 = vsub.s32 0, %v638
        %v640 = vrot.slane %v511, %v639
        %v642 = vadd.f32 %v640, %v631
        %v643 = vpack.c.bf16 %v509, %v508
        %s644 = scalar_lea.vmem %s4, 16
        %v645 = vld [vmem:[%s644] sm:$0xf]
        %v646 = vld [vmem:[%s644 + $0x4] sm:$0xf]
        %v647 = vld [vmem:[%s644 + $0x8] sm:$0xf]
        %v648 = vld [vmem:[%s644 + $0xc] sm:$0xf]
        %v650 = vshrl.u32 %v643, 16
        %v652 = vshll.u32 %v643, 16
        %v654 = vrot.slane %v652, 1
        %v655 = vor.u32 %v650, %v654
        %v660 = vunpack.c.l.b16 %v645
        %v661 = vunpack.c.l.b16 %v646
        %v662 = vunpack.c.l.b16 %v647
        %v663 = vunpack.c.l.b16 %v648
        %v664 = vpack.c.b16 %v661, %v660
        %v665 = vpack.c.b16 %v663, %v662
        %v669 = vsel %vm529, %v655, 0
        %671 = vmatprep.subr.bf16.mxu0 0
        %672 = vmatpush1.bf16.msra.mxu0 %v664
        %673 = vmatprep.subr.bf16.mxu0 0
        %674 = vmatpush1.bf16.msra.mxu0 %v665
        %675 = vmatprep.subr.bf16.mxu0 0
        %676 = vmatpush1.bf16.msra.mxu0 0
        %677 = vmatprep.subr.bf16.mxu0 0
        %678 = vmatpush1.bf16.msra.mxu0 0
        %679 = vmatprep.subr.bf16.mxu0 0
        %680 = vmatpush1.bf16.msra.mxu0 0
        %681 = vmatprep.subr.bf16.mxu0 0
        %682 = vmatpush1.bf16.msra.mxu0 0
        %683 = vmatprep.subr.bf16.mxu0 0
        %684 = vmatpush1.bf16.msra.mxu0 0
        %685 = vmatprep.subr.bf16.mxu0 0
        %686 = vmatpush1.bf16.msra.mxu0 0
        %687 = vmatprep.subr.bf16.mxu0 0
        %688 = vmatpush1.bf16.msra.mxu0 0
        %689 = vmatprep.subr.bf16.mxu0 0
        %690 = vmatpush1.bf16.msra.mxu0 0
        %691 = vmatprep.subr.bf16.mxu0 0
        %692 = vmatpush1.bf16.msra.mxu0 0
        %693 = vmatprep.subr.bf16.mxu0 0
        %694 = vmatpush1.bf16.msra.mxu0 0
        %695 = vmatprep.subr.bf16.mxu0 0
        %696 = vmatpush1.bf16.msra.mxu0 0
        %697 = vmatprep.subr.bf16.mxu0 0
        %698 = vmatpush1.bf16.msra.mxu0 0
        %699 = vmatprep.subr.bf16.mxu0 0
        %700 = vmatpush1.bf16.msra.mxu0 0
        %701 = vmatprep.subr.bf16.mxu0 0
        %702 = vmatpush1.bf16.msra.mxu0 0
        %703 = vmatprep.mubr.bf16.mxu0 0
        %704 = vmatmul.mubr.bf16.gmra.mrb[0].mxu0 %v669
        %v705 = vpop.f32.mrb[0].mxu0
        %v706 = vadd.f32 0.0, %v705
        %v707 = vpop.f32.mrb[0].mxu0
        %v708 = vpop.f32.mrb[0].mxu0
        %v709 = vpop.f32.mrb[0].mxu0
        %710 = vdwg.mxu0
        %v711 = vadd.f32 %v579, %v706
        %s712 = scalar_lea.vmem %s5, 16
        %v713 = vld [vmem:[%s712] sm:$0xf]
        %v714 = vld [vmem:[%s712 + $0x4] sm:$0xf]
        %v715 = vld [vmem:[%s712 + $0x8] sm:$0xf]
        %v716 = vld [vmem:[%s712 + $0xc] sm:$0xf]
        %v721 = vunpack.c.l.b16 %v713
        %v722 = vunpack.c.l.b16 %v714
        %v723 = vunpack.c.l.b16 %v715
        %v724 = vunpack.c.l.b16 %v716
        %v725 = vpack.c.b16 %v722, %v721
        %v726 = vpack.c.b16 %v724, %v723
        %729 = vmatprep.subr.bf16.mxu0 0
        %730 = vmatpush1.bf16.msra.mxu0 %v725
        %731 = vmatprep.subr.bf16.mxu0 0
        %732 = vmatpush1.bf16.msra.mxu0 %v726
        %733 = vmatprep.subr.bf16.mxu0 0
        %734 = vmatpush1.bf16.msra.mxu0 0
        %735 = vmatprep.subr.bf16.mxu0 0
        %736 = vmatpush1.bf16.msra.mxu0 0
        %737 = vmatprep.subr.bf16.mxu0 0
        %738 = vmatpush1.bf16.msra.mxu0 0
        %739 = vmatprep.subr.bf16.mxu0 0
        %740 = vmatpush1.bf16.msra.mxu0 0
        %741 = vmatprep.subr.bf16.mxu0 0
        %742 = vmatpush1.bf16.msra.mxu0 0
        %743 = vmatprep.subr.bf16.mxu0 0
        %744 = vmatpush1.bf16.msra.mxu0 0
        %745 = vmatprep.subr.bf16.mxu0 0
        %746 = vmatpush1.bf16.msra.mxu0 0
        %747 = vmatprep.subr.bf16.mxu0 0
        %748 = vmatpush1.bf16.msra.mxu0 0
        %749 = vmatprep.subr.bf16.mxu0 0
        %750 = vmatpush1.bf16.msra.mxu0 0
        %751 = vmatprep.subr.bf16.mxu0 0
        %752 = vmatpush1.bf16.msra.mxu0 0
        %753 = vmatprep.subr.bf16.mxu0 0
        %754 = vmatpush1.bf16.msra.mxu0 0
        %755 = vmatprep.subr.bf16.mxu0 0
        %756 = vmatpush1.bf16.msra.mxu0 0
        %757 = vmatprep.subr.bf16.mxu0 0
        %758 = vmatpush1.bf16.msra.mxu0 0
        %759 = vmatprep.subr.bf16.mxu0 0
        %760 = vmatpush1.bf16.msra.mxu0 0
        %761 = vmatprep.mubr.bf16.mxu0 0
        %762 = vmatmul.mubr.bf16.gmra.mrb[0].mxu0 %v669
        %v763 = vpop.f32.mrb[0].mxu0
        %v764 = vadd.f32 0.0, %v763
        %v765 = vpop.f32.mrb[0].mxu0
        %v766 = vpop.f32.mrb[0].mxu0
        %v767 = vpop.f32.mrb[0].mxu0
        %768 = vdwg.mxu0
        %v769 = vadd.f32 %v642, %v764
        %s770 = scalar_lea.vmem %s4, 32
        %v771 = vld [vmem:[%s770] sm:$0xf]
        %v772 = vld [vmem:[%s770 + $0x4] sm:$0xf]
        %v773 = vld [vmem:[%s770 + $0x8] sm:$0xf]
        %v774 = vld [vmem:[%s770 + $0xc] sm:$0xf]
        %v776 = vrot.slane %v643, 1
        %v781 = vunpack.c.l.b16 %v771
        %v782 = vunpack.c.l.b16 %v772
        %v783 = vunpack.c.l.b16 %v773
        %v784 = vunpack.c.l.b16 %v774
        %v785 = vpack.c.b16 %v782, %v781
        %v786 = vpack.c.b16 %v784, %v783
        %v790 = vsel %vm529, %v776, 0
        %792 = vmatprep.subr.bf16.mxu0 0
        %793 = vmatpush1.bf16.msra.mxu0 %v785
        %794 = vmatprep.subr.bf16.mxu0 0
        %795 = vmatpush1.bf16.msra.mxu0 %v786
        %796 = vmatprep.subr.bf16.mxu0 0
        %797 = vmatpush1.bf16.msra.mxu0 0
        %798 = vmatprep.subr.bf16.mxu0 0
        %799 = vmatpush1.bf16.msra.mxu0 0
        %800 = vmatprep.subr.bf16.mxu0 0
        %801 = vmatpush1.bf16.msra.mxu0 0
        %802 = vmatprep.subr.bf16.mxu0 0
        %803 = vmatpush1.bf16.msra.mxu0 0
        %804 = vmatprep.subr.bf16.mxu0 0
        %805 = vmatpush1.bf16.msra.mxu0 0
        %806 = vmatprep.subr.bf16.mxu0 0
        %807 = vmatpush1.bf16.msra.mxu0 0
        %808 = vmatprep.subr.bf16.mxu0 0
        %809 = vmatpush1.bf16.msra.mxu0 0
        %810 = vmatprep.subr.bf16.mxu0 0
        %811 = vmatpush1.bf16.msra.mxu0 0
        %812 = vmatprep.subr.bf16.mxu0 0
        %813 = vmatpush1.bf16.msra.mxu0 0
        %814 = vmatprep.subr.bf16.mxu0 0
        %815 = vmatpush1.bf16.msra.mxu0 0
        %816 = vmatprep.subr.bf16.mxu0 0
        %817 = vmatpush1.bf16.msra.mxu0 0
        %818 = vmatprep.subr.bf16.mxu0 0
        %819 = vmatpush1.bf16.msra.mxu0 0
        %820 = vmatprep.subr.bf16.mxu0 0
        %821 = vmatpush1.bf16.msra.mxu0 0
        %822 = vmatprep.subr.bf16.mxu0 0
        %823 = vmatpush1.bf16.msra.mxu0 0
        %824 = vmatprep.mubr.bf16.mxu0 0
        %825 = vmatmul.mubr.bf16.gmra.mrb[0].mxu0 %v790
        %v826 = vpop.f32.mrb[0].mxu0
        %v827 = vadd.f32 0.0, %v826
        %v828 = vpop.f32.mrb[0].mxu0
        %v829 = vpop.f32.mrb[0].mxu0
        %v830 = vpop.f32.mrb[0].mxu0
        %831 = vdwg.mxu0
        %v832 = vadd.f32 %v711, %v827
        %s833 = scalar_lea.vmem %s5, 32
        %v834 = vld [vmem:[%s833] sm:$0xf]
        %v835 = vld [vmem:[%s833 + $0x4] sm:$0xf]
        %v836 = vld [vmem:[%s833 + $0x8] sm:$0xf]
        %v837 = vld [vmem:[%s833 + $0xc] sm:$0xf]
        %v842 = vunpack.c.l.b16 %v834
        %v843 = vunpack.c.l.b16 %v835
        %v844 = vunpack.c.l.b16 %v836
        %v845 = vunpack.c.l.b16 %v837
        %v846 = vpack.c.b16 %v843, %v842
        %v847 = vpack.c.b16 %v845, %v844
        %850 = vmatprep.subr.bf16.mxu0 0
        %851 = vmatpush1.bf16.msra.mxu0 %v846
        %852 = vmatprep.subr.bf16.mxu0 0
        %853 = vmatpush1.bf16.msra.mxu0 %v847
        %854 = vmatprep.subr.bf16.mxu0 0
        %855 = vmatpush1.bf16.msra.mxu0 0
        %856 = vmatprep.subr.bf16.mxu0 0
        %857 = vmatpush1.bf16.msra.mxu0 0
        %858 = vmatprep.subr.bf16.mxu0 0
        %859 = vmatpush1.bf16.msra.mxu0 0
        %860 = vmatprep.subr.bf16.mxu0 0
        %861 = vmatpush1.bf16.msra.mxu0 0
        %862 = vmatprep.subr.bf16.mxu0 0
        %863 = vmatpush1.bf16.msra.mxu0 0
        %864 = vmatprep.subr.bf16.mxu0 0
        %865 = vmatpush1.bf16.msra.mxu0 0
        %866 = vmatprep.subr.bf16.mxu0 0
        %867 = vmatpush1.bf16.msra.mxu0 0
        %868 = vmatprep.subr.bf16.mxu0 0
        %869 = vmatpush1.bf16.msra.mxu0 0
        %870 = vmatprep.subr.bf16.mxu0 0
        %871 = vmatpush1.bf16.msra.mxu0 0
        %872 = vmatprep.subr.bf16.mxu0 0
        %873 = vmatpush1.bf16.msra.mxu0 0
        %874 = vmatprep.subr.bf16.mxu0 0
        %875 = vmatpush1.bf16.msra.mxu0 0
        %876 = vmatprep.subr.bf16.mxu0 0
        %877 = vmatpush1.bf16.msra.mxu0 0
        %878 = vmatprep.subr.bf16.mxu0 0
        %879 = vmatpush1.bf16.msra.mxu0 0
        %880 = vmatprep.subr.bf16.mxu0 0
        %881 = vmatpush1.bf16.msra.mxu0 0
        %882 = vmatprep.mubr.bf16.mxu0 0
        %883 = vmatmul.mubr.bf16.gmra.mrb[0].mxu0 %v790
        %v884 = vpop.f32.mrb[0].mxu0
        %v885 = vadd.f32 0.0, %v884
        %v886 = vpop.f32.mrb[0].mxu0
        %v887 = vpop.f32.mrb[0].mxu0
        %v888 = vpop.f32.mrb[0].mxu0
        %889 = vdwg.mxu0
        %v890 = vadd.f32 %v769, %v885
        %v891 = vxor.u32 %v890, 2147483648
        %v892 = vmul.f32 %v891, 1.442695
        %v893 = vpow.pop %v892
        %v894 = vadd.f32 %v893, 1.0
        %v895 = vrcp.pop %v894
        %v896 = vmul.f32 1.0, %v895
        %v897 = vmul.f32 %v832, %v896
        %v898 = vpack.c.bf16 %v897, %v897
        %v899 = vld [vmem:[%s8] sm:$0xf]
        %v900 = vld [vmem:[%s8 + $0x4] sm:$0xf]
        %v901 = vld [vmem:[%s8 + $0x8] sm:$0xf]
        %v902 = vld [vmem:[%s8 + $0xc] sm:$0xf]
        %v903 = vld [vmem:[%s9] sm:$0x1]
        %v905 = vlaneseq
        %v906 = vshrl.u32 %v905, 7
        %v907 = vsub.s32 0, %v906
        %v908 = vrot.slane %v903, %v907
        %v914 = vunpack.c.l.b16 %v899
        %v915 = vunpack.c.l.b16 %v900
        %v916 = vunpack.c.l.b16 %v901
        %v917 = vunpack.c.l.b16 %v902
        %v918 = vpack.c.b16 %v915, %v914
        %v919 = vpack.c.b16 %v917, %v916
        %v923 = vsel %vm529, %v898, 0
        %925 = vmatprep.subr.bf16.mxu0 0
        %926 = vmatpush1.bf16.msra.mxu0 %v918
        %927 = vmatprep.subr.bf16.mxu0 0
        %928 = vmatpush1.bf16.msra.mxu0 %v919
        %929 = vmatprep.subr.bf16.mxu0 0
        %930 = vmatpush1.bf16.msra.mxu0 0
        %931 = vmatprep.subr.bf16.mxu0 0
        %932 = vmatpush1.bf16.msra.mxu0 0
        %933 = vmatprep.subr.bf16.mxu0 0
        %934 = vmatpush1.bf16.msra.mxu0 0
        %935 = vmatprep.subr.bf16.mxu0 0
        %936 = vmatpush1.bf16.msra.mxu0 0
        %937 = vmatprep.subr.bf16.mxu0 0
        %938 = vmatpush1.bf16.msra.mxu0 0
        %939 = vmatprep.subr.bf16.mxu0 0
        %940 = vmatpush1.bf16.msra.mxu0 0
        %941 = vmatprep.subr.bf16.mxu0 0
        %942 = vmatpush1.bf16.msra.mxu0 0
        %943 = vmatprep.subr.bf16.mxu0 0
        %944 = vmatpush1.bf16.msra.mxu0 0
        %945 = vmatprep.subr.bf16.mxu0 0
        %946 = vmatpush1.bf16.msra.mxu0 0
        %947 = vmatprep.subr.bf16.mxu0 0
        %948 = vmatpush1.bf16.msra.mxu0 0
        %949 = vmatprep.subr.bf16.mxu0 0
        %950 = vmatpush1.bf16.msra.mxu0 0
        %951 = vmatprep.subr.bf16.mxu0 0
        %952 = vmatpush1.bf16.msra.mxu0 0
        %953 = vmatprep.subr.bf16.mxu0 0
        %954 = vmatpush1.bf16.msra.mxu0 0
        %955 = vmatprep.subr.bf16.mxu0 0
        %956 = vmatpush1.bf16.msra.mxu0 0
        %957 = vmatprep.mubr.bf16.mxu0 0
        %958 = vmatmul.mubr.bf16.gmra.mrb[0].mxu0 %v923
        %v959 = vpop.f32.mrb[0].mxu0
        %v960 = vadd.f32 %v908, %v959
        %v961 = vpop.f32.mrb[0].mxu0
        %v962 = vpop.f32.mrb[0].mxu0
        %v963 = vpop.f32.mrb[0].mxu0
        %964 = vdwg.mxu0
        %v965 = vld [vmem:[%s492] sm:$0xff]
        %v966 = vadd.f32 %v960, %v965
        %v967 = vmul.f32 %v966, 0.70710677
        %v968 = vpack.c.bf16 %v967, %v967
        %v969 = vld [vmem:[%s497] sm:$0xf]
        %v970 = vld [vmem:[%s497 + $0x4] sm:$0x1]
        %v973 = vunpack.c.l.b16 %v969
        %v974 = vunpack.c.l.b16 %v970
        %v975 = vpack.c.b16 %v974, %v973
        %v977 = vsel %vm529, %v968, 0
        %v980 = vsel %vm529, %v975, 0
        %982 = vmatprep.subr.bf16.mxu0 0
        %983 = vmatpush1.bf16.xpose.msra.mxu0 %v980
        %984 = vmatprep.subr.bf16.mxu0 0
        %985 = vmatpush1.bf16.xpose.msra.mxu0 0
        %986 = vmatprep.subr.bf16.mxu0 0
        %987 = vmatpush1.bf16.xpose.msra.mxu0 0
        %988 = vmatprep.subr.bf16.mxu0 0
        %989 = vmatpush1.bf16.xpose.msra.mxu0 0
        %990 = vmatprep.subr.bf16.mxu0 0
        %991 = vmatpush1.bf16.xpose.msra.mxu0 0
        %992 = vmatprep.subr.bf16.mxu0 0
        %993 = vmatpush1.bf16.xpose.msra.mxu0 0
        %994 = vmatprep.subr.bf16.mxu0 0
        %995 = vmatpush1.bf16.xpose.msra.mxu0 0
        %996 = vmatprep.subr.bf16.mxu0 0
        %997 = vmatpush1.bf16.xpose.msra.mxu0 0
        %998 = vmatprep.subr.bf16.mxu0 0
        %999 = vmatpush1.bf16.xpose.msra.mxu0 0
        %1000 = vmatprep.subr.bf16.mxu0 0
        %1001 = vmatpush1.bf16.xpose.msra.mxu0 0
        %1002 = vmatprep.subr.bf16.mxu0 0
        %1003 = vmatpush1.bf16.xpose.msra.mxu0 0
        %1004 = vmatprep.subr.bf16.mxu0 0
        %1005 = vmatpush1.bf16.xpose.msra.mxu0 0
        %1006 = vmatprep.subr.bf16.mxu0 0
        %1007 = vmatpush1.bf16.xpose.msra.mxu0 0
        %1008 = vmatprep.subr.bf16.mxu0 0
        %1009 = vmatpush1.bf16.xpose.msra.mxu0 0
        %1010 = vmatprep.subr.bf16.mxu0 0
        %1011 = vmatpush1.bf16.xpose.msra.mxu0 0
        %1012 = vmatprep.subr.bf16.mxu0 0
        %1013 = vmatpush1.bf16.xpose.msra.mxu0 0
        %1014 = vmatprep.mubr.bf16.mxu0 0
        %1015 = vmatmul.mubr.bf16.gmra.mrb[0].mxu0 %v977
        %v1016 = vpop.f32.mrb[0].mxu0
        %v1017 = vadd.f32 0.0, %v1016
        %v1018 = vpop.f32.mrb[0].mxu0
        %v1019 = vpop.f32.mrb[0].mxu0
        %v1020 = vpop.f32.mrb[0].mxu0
        %1021 = vdwg.mxu0
        %vm1022 = vcmask 80896
        %v1023 = vsel %vm1022, %v1017, -inf
        %1024 = vmax.xlane.f32.xlu0 %v1023
        %v1025 = vpop.xlane.xlu0 %1024
        %v1026 = vsub.f32 %v1017, %v1025
        %v1027 = vmul.f32 %v1026, 1.442695
        %v1028 = vpow.pop %v1027
        %v1029 = vsel %vm1022, %v1028, 0.0
        %1030 = vadd.xlane.f32.xlu0 %v1029
        %v1031 = vpop.xlane.xlu0 %1030
        %v1032 = vrcp.pop %v1031
        %v1033 = vmul.f32 %v1028, %v1032
        %1034 = vst.msk [vmem:[%s483] sm:$0xff] %vm1022, %v1033
        %v1035 = vpack.c.bf16 %v1033, %v1033
        %v1036 = vld [vmem:[%s502] sm:$0xf]
        %v1037 = vld [vmem:[%s502 + $0x4] sm:$0x1]
        %v1040 = vunpack.c.l.b16 %v1036
        %v1041 = vunpack.c.l.b16 %v1037
        %v1042 = vpack.c.b16 %v1041, %v1040
        %v1044 = vsel %vm1022, %v1035, 0
        %vm1046 = vcmask 1044480
        %v1048 = vsel %vm1046, %v1042, 0
        %1050 = vmatprep.subr.bf16.mxu0 0
        %1051 = vmatpush1.bf16.msra.mxu0 %v1048
        %1052 = vmatprep.subr.bf16.mxu0 0
        %1053 = vmatpush1.bf16.msra.mxu0 0
        %1054 = vmatprep.subr.bf16.mxu0 0
        %1055 = vmatpush1.bf16.msra.mxu0 0
        %1056 = vmatprep.subr.bf16.mxu0 0
        %1057 = vmatpush1.bf16.msra.mxu0 0
        %1058 = vmatprep.subr.bf16.mxu0 0
        %1059 = vmatpush1.bf16.msra.mxu0 0
        %1060 = vmatprep.subr.bf16.mxu0 0
        %1061 = vmatpush1.bf16.msra.mxu0 0
        %1062 = vmatprep.subr.bf16.mxu0 0
        %1063 = vmatpush1.bf16.msra.mxu0 0
        %1064 = vmatprep.subr.bf16.mxu0 0
        %1065 = vmatpush1.bf16.msra.mxu0 0
        %1066 = vmatprep.subr.bf16.mxu0 0
        %1067 = vmatpush1.bf16.msra.mxu0 0
        %1068 = vmatprep.subr.bf16.mxu0 0
        %1069 = vmatpush1.bf16.msra.mxu0 0
        %1070 = vmatprep.subr.bf16.mxu0 0
        %1071 = vmatpush1.bf16.msra.mxu0 0
        %1072 = vmatprep.subr.bf16.mxu0 0
        %1073 = vmatpush1.bf16.msra.mxu0 0
        %1074 = vmatprep.subr.bf16.mxu0 0
        %1075 = vmatpush1.bf16.msra.mxu0 0
        %1076 = vmatprep.subr.bf16.mxu0 0
        %1077 = vmatpush1.bf16.msra.mxu0 0
        %1078 = vmatprep.subr.bf16.mxu0 0
        %1079 = vmatpush1.bf16.msra.mxu0 0
        %1080 = vmatprep.subr.bf16.mxu0 0
        %1081 = vmatpush1.bf16.msra.mxu0 0
        %1082 = vmatprep.mubr.bf16.mxu0 0
        %1083 = vmatmul.mubr.bf16.gmra.mrb[0].mxu0 %v1044
        %v1084 = vpop.f32.mrb[0].mxu0
        %v1085 = vadd.f32 0.0, %v1084
        %v1086 = vpop.f32.mrb[0].mxu0
        %v1087 = vpop.f32.mrb[0].mxu0
        %v1088 = vpop.f32.mrb[0].mxu0
        %1089 = vdwg.mxu0
        %v1090 = vpack.c.bf16 %v1085, %v1085
        %v1091 = vld [vmem:[%s10] sm:$0xf]
        %v1092 = vld [vmem:[%s10 + $0x4] sm:$0xf]
        %v1093 = vld [vmem:[%s10 + $0x8] sm:$0xf]
        %v1094 = vld [vmem:[%s10 + $0xc] sm:$0xf]
        %v1095 = vld [vmem:[%s11] sm:$0x1]
        %v1097 = vlaneseq
        %v1098 = vshrl.u32 %v1097, 7
        %v1099 = vsub.s32 0, %v1098
        %v1100 = vrot.slane %v1095, %v1099
        %v1106 = vunpack.c.l.b16 %v1091
        %v1107 = vunpack.c.l.b16 %v1092
        %v1108 = vunpack.c.l.b16 %v1093
        %v1109 = vunpack.c.l.b16 %v1094
        %v1110 = vpack.c.b16 %v1107, %v1106
        %v1111 = vpack.c.b16 %v1109, %v1108
        %v1115 = vsel %vm529, %v1090, 0
        %1117 = vmatprep.subr.bf16.mxu0 0
        %1118 = vmatpush1.bf16.msra.mxu0 %v1110
        %1119 = vmatprep.subr.bf16.mxu0 0
        %1120 = vmatpush1.bf16.msra.mxu0 %v1111
        %1121 = vmatprep.subr.bf16.mxu0 0
        %1122 = vmatpush1.bf16.msra.mxu0 0
        %1123 = vmatprep.subr.bf16.mxu0 0
        %1124 = vmatpush1.bf16.msra.mxu0 0
        %1125 = vmatprep.subr.bf16.mxu0 0
        %1126 = vmatpush1.bf16.msra.mxu0 0
        %1127 = vmatprep.subr.bf16.mxu0 0
        %1128 = vmatpush1.bf16.msra.mxu0 0
        %1129 = vmatprep.subr.bf16.mxu0 0
        %1130 = vmatpush1.bf16.msra.mxu0 0
        %1131 = vmatprep.subr.bf16.mxu0 0
        %1132 = vmatpush1.bf16.msra.mxu0 0
        %1133 = vmatprep.subr.bf16.mxu0 0
        %1134 = vmatpush1.bf16.msra.mxu0 0
        %1135 = vmatprep.subr.bf16.mxu0 0
        %1136 = vmatpush1.bf16.msra.mxu0 0
        %1137 = vmatprep.subr.bf16.mxu0 0
        %1138 = vmatpush1.bf16.msra.mxu0 0
        %1139 = vmatprep.subr.bf16.mxu0 0
        %1140 = vmatpush1.bf16.msra.mxu0 0
        %1141 = vmatprep.subr.bf16.mxu0 0
        %1142 = vmatpush1.bf16.msra.mxu0 0
        %1143 = vmatprep.subr.bf16.mxu0 0
        %1144 = vmatpush1.bf16.msra.mxu0 0
        %1145 = vmatprep.subr.bf16.mxu0 0
        %1146 = vmatpush1.bf16.msra.mxu0 0
        %1147 = vmatprep.subr.bf16.mxu0 0
        %1148 = vmatpush1.bf16.msra.mxu0 0
        %1149 = vmatprep.mubr.bf16.mxu0 0
        %1150 = vmatmul.mubr.bf16.gmra.mrb[0].mxu0 %v1115
        %v1151 = vpop.f32.mrb[0].mxu0
        %v1152 = vadd.f32 %v1100, %v1151
        %v1153 = vpop.f32.mrb[0].mxu0
        %v1154 = vpop.f32.mrb[0].mxu0
        %v1155 = vpop.f32.mrb[0].mxu0
        %1156 = vdwg.mxu0
        %v1157 = vadd.f32 %v1152, %v897
        %v1158 = vmul.f32 %v1157, 0.70710677
        %vm1161 = vcmask 1045504
        %v1162 = vrot.slane %v508, 2
        %v1163 = vrot.slane %v509, 2
        %v1164 = vsel %vm1161, %v1162, %v1163
        %v1166 = vadd.f32 %v1158, %v1164
        %v1167 = vmul.f32 %v1166, 0.70710677
        %1168 = vst.msk [vmem:[%s506] sm:$0xff] %vm529, %v1167
        %p1169 = scmp.lt.s32.totalorder %s28, 1
        %s1170 = scalar_select %p1169, %s28, 1
        %s1171 = smul.addr %s1170, 8
        %s1172 = scalar_lea.vmem %s12, %s1171
        %s1173 = sand.u32 %s334, 1
        %s1174 = scalar_lea.sflag [#allocation3], %s1173
        %s1175 = sand.u32 %s334, 1
        %s1176 = smul.addr %s1175, 8
        %s1177 = scalar_lea.vmem [#allocation2], %s1176
        // Predicated region
        $region69: #{seq2seq_forward.15} parent=67 // pred_check
          %p1178 = pneg %p318
        $region70: #{seq2seq_forward.15} parent=67 // pred_check_branch
          %1180 = sbr.rel (%p1178) target = $region72
        $region71: #{seq2seq_forward.15} parent=67 // pred_region
          _
        $region72: #{seq2seq_forward.15} parent=67 // pred_fallthru
          _
        // Predicated region
        $region73: #{seq2seq_forward.15} parent=67 // pred_check
          %p1181 = pneg %p344
        $region74: #{seq2seq_forward.15} parent=67 // pred_check_branch
          %1183 = sbr.rel (%p1181) target = $region76
        $region75: #{seq2seq_forward.15} parent=67 // pred_region
          %s1185 = ssub.s32 128, 128
          %1186 = vsyncadd %s1174, %s1185
          %s1187 = smul.addr %s28, 128
          %s1188 = scalar_lea.hbm %s13, %s1187
          %s1190 = sshll.u32 %s1177, 4
          %s1191 = int_to_ptr.vmem [resolvable:$true] %s1190
          %1193 = dma.vmem_to_hbm [thread:$0]  %s1191, 128, %s1188, %s1174
        $region76: #{seq2seq_forward.15} parent=67 // pred_fallthru
          _
      $region68: #{seq2seq_forward.15} parent=5 // pred_fallthru
        _
      %p1194 = scmp.le.s32.totalorder 2, %s23
      // Predicated region
      $region77: #{seq2seq_forward.15} parent=5 // pred_check
        %p1195 = pneg %p1194
      $region78: #{seq2seq_forward.15} parent=5 // pred_check_branch
        %1197 = sbr.rel (%p1195) target = $region80
      $region79: #{seq2seq_forward.15} parent=5 // pred_region
        %s1198 = ssub.s32 %s23, 2
        // Predicated region
        $region81: #{seq2seq_forward.15} parent=79 // pred_check
          %p1199 = pneg %p324
        $region82: #{seq2seq_forward.15} parent=79 // pred_check_branch
          %1201 = sbr.rel (%p1199) target = $region84
        $region83: #{seq2seq_forward.15} parent=79 // pred_region
          %p1202 = scmp.lt.s32.totalorder %s29, 1
          %s1203 = scalar_select %p1202, %s29, 1
          %s1204 = smul.addr %s1203, 8
          %s1205 = scalar_lea.vmem %s12, %s1204
        $region84: #{seq2seq_forward.15} parent=79 // pred_fallthru
          _
        // Predicated region
        $region85: #{seq2seq_forward.15} parent=79 // pred_check
          %p1206 = pneg %p350
        $region86: #{seq2seq_forward.15} parent=79 // pred_check_branch
          %1208 = sbr.rel (%p1206) target = $region88
        $region87: #{seq2seq_forward.15} parent=79 // pred_region
          %s1209 = sand.u32 %s335, 1
          %s1210 = scalar_lea.sflag [#allocation3], %s1209
          %s1211 = sand.u32 %s335, 1
          %s1212 = smul.addr %s1211, 8
          %s1213 = scalar_lea.vmem [#allocation2], %s1212
          %1214 = dma.done %s1210, 128
        $region88: #{seq2seq_forward.15} parent=79 // pred_fallthru
          _
      $region80: #{seq2seq_forward.15} parent=5 // pred_fallthru
        _
    $region6: #{seq2seq_forward.15} parent=1 // loop_footer
      %s27 = sadd.s32 1, %s23
    $region7: #{seq2seq_forward.15} parent=1 // loop_footer_branch
      %22 = sbr.rel target = $region3
    $region8: #{seq2seq_forward.15} parent=1 // loop_exit
      _
    %1215 = vsyncpa [#allocation3], 1
    %s1216 = scalar_lea.sflag [#allocation3], 1
    %1217 = vsyncpa %s1216, 1

</llo_original>
